<compile_context>
chip_gen: v6e
topology: v6e:2x2x1
jax: 0.10.0
libtpu: 0.0.40
codegen_flags: <defaults>
</compile_context>

<pallas_src>
import jax
import jax.numpy as jnp
from jax import lax
from jax.experimental import pallas as pl
from jax.experimental.pallas import tpu as pltpu

INPUT_SIZE = 28
SEQ_LENGTH = 28
NUM_CLASSES = 10
HIDDEN_SIZE = 32
NUM_LAYERS = 2
BATCH = 4
BATCH_PAD = 8          # pad batch to the native 8-sublane tile
D_PAD = 32             # pad input feature dim 28 -> 32


# ---------------------------------------------------------------------------
# Fused Pallas kernel: skewed 2-layer tanh RNN + Linear head, one invocation
# ---------------------------------------------------------------------------
def fused_rnn_kernel(x_ref, w_a_ref, w_blk_ref, w_fc_ref, b_fc_ref,
                     out_ref, a_scr, hist_scr):
    """
    x_ref:    (T*BP, Dp)   time-major input, batch padded to BP=8, D padded to 32
    w_a:      (Dp, 2H)     layer-0 input->hidden, columns H:2H are zero
    w_blk:    (2H, 2H)     fused recurrent block [[W_hh1, W_ih2], [0, W_hh2]]
    w_fc:     (T*H, C)     final linear (pre-transposed), row block t <-> step t
    b_fc:     (1, C)
    out_ref:  (BP, C)      logits (padded batch)
    a_scr:    (T*BP, 2H)   scratch: hoisted layer-0 projection (right half zero)
    hist_scr: (BP, T*H)    scratch: h2_t history for the FC head
    """
    BP = out_ref.shape[0]
    H2 = w_blk_ref.shape[0]            # 2H = 64
    H = H2 // 2
    T = x_ref.shape[0] // BP

    # Hoisted layer-0 projection: one MXU pass (M=T*BP=224, K=32, N=64) off the
    # serial chain.  Right half of every row is structurally zero.
    a_scr[...] = jnp.dot(x_ref[...], w_a_ref[...],
                         preferred_element_type=jnp.float32)

    # Fused recurrent weight block stays resident in vregs for the whole loop.
    w_blk = w_blk_ref[...]

    # Skewed state s = [h1_{t-1} | h2_{t-2}]; both start at zero.
    s = jnp.zeros((BP, H2), jnp.float32)

    # Fully-unrolled time loop (static T): one (8,64)@(64,64) matmul, one add
    # and one tanh per step on the critical path.  The h2 history store is
    # dependency-free w.r.t. the recurrence and hides in slack.
    for t in range(T):
        s = jnp.tanh(a_scr[t * BP:(t + 1) * BP, :] +
                     jnp.dot(s, w_blk, preferred_element_type=jnp.float32))
        # right half of the new state is h2_{t-1}
        if t >= 1:
            hist_scr[:, (t - 1) * H:t * H] = s[:, H:]

    # Epilogue: one more fused step with a = 0 produces h2_{T-1} in the right
    # half (left half unused).
    s = jnp.tanh(jnp.dot(s, w_blk, preferred_element_type=jnp.float32))
    hist_scr[:, (SEQ_LENGTH - 1) * H:SEQ_LENGTH * H] = s[:, H:]

    # FC head: one (BP, T*H) @ (T*H, C) matmul + bias, completely off the chain.
    out_ref[...] = (jnp.dot(hist_scr[...], w_fc_ref[...],
                            preferred_element_type=jnp.float32)
                    + b_fc_ref[...]).astype(out_ref.dtype)


# ---------------------------------------------------------------------------
# Wrapper
# ---------------------------------------------------------------------------
_vmem = pl.BlockSpec(memory_space=pltpu.MemorySpace.VMEM)


def rnn_model_forward(x_bsd, params):
    """x_bsd: (B, seq, input_size) -> logits (B, num_classes)."""
    B, T, D = x_bsd.shape
    (w_ih1, w_hh1), (w_ih2, w_hh2) = params["rnn_layers"]
    H = w_hh1.shape[0]
    C = params["w_fc"].shape[1]

    # Pad batch (sublane) 4->8 and feature 28->32, lay out time-major flattened
    # to (T*BP, Dp): the hoisted projection is one clean matmul and every
    # per-step slice is an aligned 8-row tile.  (Tiny one-time layout ops.)
    xp = jnp.zeros((BATCH_PAD, T, D_PAD), x_bsd.dtype).at[:B, :, :D].set(x_bsd)
    x_tm = jnp.transpose(xp, (1, 0, 2)).reshape(T * BATCH_PAD, D_PAD)

    # Layer-0 projection weight padded to (Dp, 2H) with a zero right half, so
    # the hoisted matmul directly yields the per-step additive term [a1_t | 0].
    w_a = jnp.zeros((D_PAD, 2 * H), jnp.float32).at[:D, :H].set(w_ih1)

    # Fused recurrent weight block [[W_hh1, W_ih2], [0, W_hh2]]  (2H, 2H).
    w_blk = jnp.concatenate(
        [jnp.concatenate([w_hh1, w_ih2], axis=1),
         jnp.concatenate([jnp.zeros((H, H), jnp.float32), w_hh2], axis=1)],
        axis=0)

    out = pl.pallas_call(
        fused_rnn_kernel,
        out_shape=jax.ShapeDtypeStruct((BATCH_PAD, C), jnp.float32),
        in_specs=[_vmem] * 5,
        out_specs=_vmem,
        scratch_shapes=[pltpu.VMEM((T * BATCH_PAD, 2 * H), jnp.float32),
                        pltpu.VMEM((BATCH_PAD, T * H), jnp.float32)],
    )(x_tm, w_a, w_blk, params["w_fc"], params["b_fc"])

    return out[:B]                                                # (B, C)


# ---------------------------------------------------------------------------
# Deterministic parameter init (shapes follow nn.RNN(bias=False) / nn.Linear)
# ---------------------------------------------------------------------------
def init_params(key):
    keys = jax.random.split(key, 2 * NUM_LAYERS + 2)
    bound = 1.0 / jnp.sqrt(HIDDEN_SIZE)
    layers = []
    for layer in range(NUM_LAYERS):
        d_in = INPUT_SIZE if layer == 0 else HIDDEN_SIZE
        # stored pre-transposed: (d_in, H) and (H, H)
        w_ih = jax.random.uniform(keys[2 * layer], (d_in, HIDDEN_SIZE),
                                  jnp.float32, -bound, bound)
        w_hh = jax.random.uniform(keys[2 * layer + 1],
                                  (HIDDEN_SIZE, HIDDEN_SIZE),
                                  jnp.float32, -bound, bound)
        layers.append((w_ih, w_hh))
    fc_in = HIDDEN_SIZE * SEQ_LENGTH
    fc_bound = 1.0 / jnp.sqrt(fc_in)
    w_fc = jax.random.uniform(keys[-2], (fc_in, NUM_CLASSES),
                              jnp.float32, -fc_bound, fc_bound)
    b_fc = jax.random.uniform(keys[-1], (1, NUM_CLASSES),
                              jnp.float32, -fc_bound, fc_bound)
    return {"rnn_layers": layers, "w_fc": w_fc, "b_fc": b_fc}


# ---------------------------------------------------------------------------
# Pure-JAX reference for sanity checking
# ---------------------------------------------------------------------------
def reference_forward(x_bsd, params):
    h_seq = jnp.transpose(x_bsd, (1, 0, 2))                       # (T, B, D)
    for w_ih, w_hh in params["rnn_layers"]:
        def step(h, x_t):
            h_new = jnp.tanh(x_t @ w_ih + h @ w_hh)
            return h_new, h_new
        h0 = jnp.zeros((x_bsd.shape[0], HIDDEN_SIZE), jnp.float32)
        _, h_seq = lax.scan(step, h0, h_seq)                      # (T, B, H)
    h_bth = jnp.transpose(h_seq, (1, 0, 2))                       # (B, T, H)
    flat = h_bth.reshape(h_bth.shape[0], -1)                      # (B, T*H)
    return flat @ params["w_fc"] + params["b_fc"]


if __name__ == "__main__":
    key = jax.random.PRNGKey(0)
    k_x, k_p = jax.random.split(key)
    x = jax.random.normal(k_x, (BATCH, SEQ_LENGTH, INPUT_SIZE), jnp.float32)
    params = init_params(k_p)

    out = rnn_model_forward(x, params)
    out = jax.block_until_ready(out)

    ref = reference_forward(x, params)
    assert out.shape == (BATCH, NUM_CLASSES)
    assert jnp.allclose(out, ref, atol=1e-4, rtol=1e-4), "mismatch vs reference"

    print("KERNEL_OK")
</pallas_src>

<mosaic_0001>
module attributes {stable_mosaic.version = 11 : i64} {
  func.func @fused_rnn_kernel(%arg0: memref<224x32xf32, #tpu.memory_space<vmem>>, %arg1: memref<32x64xf32, #tpu.memory_space<vmem>>, %arg2: memref<64x64xf32, #tpu.memory_space<vmem>>, %arg3: memref<896x10xf32, #tpu.memory_space<vmem>>, %arg4: memref<1x10xf32, #tpu.memory_space<vmem>>, %arg5: memref<8x10xf32, #tpu.memory_space<vmem>>, %arg6: memref<224x64xf32, #tpu.memory_space<vmem>>, %arg7: memref<8x896xf32, #tpu.memory_space<vmem>>) attributes {dimension_semantics = [], scalar_prefetch = 0 : i64, scratch_operands = 2 : i64, tpu.core_type = #tpu.core_type<tc>} {
    %c0 = arith.constant 0 : index
    %c0_0 = arith.constant 0 : index
    %0 = vector.load %arg0[%c0, %c0_0] : memref<224x32xf32, #tpu.memory_space<vmem>>, vector<224x32xf32>
    %c0_1 = arith.constant 0 : index
    %c0_2 = arith.constant 0 : index
    %1 = vector.load %arg1[%c0_1, %c0_2] : memref<32x64xf32, #tpu.memory_space<vmem>>, vector<32x64xf32>
    %cst = arith.constant dense<0.000000e+00> : vector<224x64xf32>
    %2 = tpu.matmul %0, %1, %cst {dimension_numbers = #tpu.dot_dimension_numbers<[1], [0], [0], [1], [0, 0, 1, 1], [], []>} : vector<224x32xf32>, vector<32x64xf32>, vector<224x64xf32> -> vector<224x64xf32>
    %c0_3 = arith.constant 0 : index
    %c0_4 = arith.constant 0 : index
    %3 = vector.load %arg6[%c0_3, %c0_4] : memref<224x64xf32, #tpu.memory_space<vmem>>, vector<224x64xf32>
    tpu.vector_store %arg6[%c0_3, %c0_4], %2 {strides = array<i32>} : memref<224x64xf32, #tpu.memory_space<vmem>>, vector<224x64xf32>,
    %c0_5 = arith.constant 0 : index
    %c0_6 = arith.constant 0 : index
    %4 = vector.load %arg2[%c0_5, %c0_6] : memref<64x64xf32, #tpu.memory_space<vmem>>, vector<64x64xf32>
    %cst_7 = arith.constant 0.000000e+00 : f32
    %5 = vector.broadcast %cst_7 : f32 to vector<8x64xf32>
    %c0_8 = arith.constant 0 : index
    %c0_9 = arith.constant 0 : index
    %6 = vector.load %arg6[%c0_8, %c0_9] : memref<224x64xf32, #tpu.memory_space<vmem>>, vector<8x64xf32>
    %cst_10 = arith.constant dense<0.000000e+00> : vector<8x64xf32>
    %7 = tpu.matmul %5, %4, %cst_10 {dimension_numbers = #tpu.dot_dimension_numbers<[1], [0], [0], [1], [0, 0, 1, 1], [], []>} : vector<8x64xf32>, vector<64x64xf32>, vector<8x64xf32> -> vector<8x64xf32>
    %8 = arith.addf %6, %7 : vector<8x64xf32>
    %9 = math.tanh %8 : vector<8x64xf32>
    %c8 = arith.constant 8 : index
    %c0_11 = arith.constant 0 : index
    %10 = vector.load %arg6[%c8, %c0_11] : memref<224x64xf32, #tpu.memory_space<vmem>>, vector<8x64xf32>
    %cst_12 = arith.constant dense<0.000000e+00> : vector<8x64xf32>
    %11 = tpu.matmul %9, %4, %cst_12 {dimension_numbers = #tpu.dot_dimension_numbers<[1], [0], [0], [1], [0, 0, 1, 1], [], []>} : vector<8x64xf32>, vector<64x64xf32>, vector<8x64xf32> -> vector<8x64xf32>
    %12 = arith.addf %10, %11 : vector<8x64xf32>
    %13 = math.tanh %12 : vector<8x64xf32>
    %14 = vector.extract_strided_slice %13 {offsets = [0, 32], sizes = [8, 32], strides = [1, 1]} : vector<8x64xf32> to vector<8x32xf32>
    %c0_13 = arith.constant 0 : index
    %c0_14 = arith.constant 0 : index
    %15 = vector.load %arg7[%c0_13, %c0_14] : memref<8x896xf32, #tpu.memory_space<vmem>>, vector<8x32xf32>
    tpu.vector_store %arg7[%c0_13, %c0_14], %14 {strides = array<i32>} : memref<8x896xf32, #tpu.memory_space<vmem>>, vector<8x32xf32>,
    %c16 = arith.constant 16 : index
    %c0_15 = arith.constant 0 : index
    %16 = vector.load %arg6[%c16, %c0_15] : memref<224x64xf32, #tpu.memory_space<vmem>>, vector<8x64xf32>
    %cst_16 = arith.constant dense<0.000000e+00> : vector<8x64xf32>
    %17 = tpu.matmul %13, %4, %cst_16 {dimension_numbers = #tpu.dot_dimension_numbers<[1], [0], [0], [1], [0, 0, 1, 1], [], []>} : vector<8x64xf32>, vector<64x64xf32>, vector<8x64xf32> -> vector<8x64xf32>
    %18 = arith.addf %16, %17 : vector<8x64xf32>
    %19 = math.tanh %18 : vector<8x64xf32>
    %20 = vector.extract_strided_slice %19 {offsets = [0, 32], sizes = [8, 32], strides = [1, 1]} : vector<8x64xf32> to vector<8x32xf32>
    %c0_17 = arith.constant 0 : index
    %c32 = arith.constant 32 : index
    %21 = vector.load %arg7[%c0_17, %c32] : memref<8x896xf32, #tpu.memory_space<vmem>>, vector<8x32xf32>
    tpu.vector_store %arg7[%c0_17, %c32], %20 {strides = array<i32>} : memref<8x896xf32, #tpu.memory_space<vmem>>, vector<8x32xf32>,
    %c24 = arith.constant 24 : index
    %c0_18 = arith.constant 0 : index
    %22 = vector.load %arg6[%c24, %c0_18] : memref<224x64xf32, #tpu.memory_space<vmem>>, vector<8x64xf32>
    %cst_19 = arith.constant dense<0.000000e+00> : vector<8x64xf32>
    %23 = tpu.matmul %19, %4, %cst_19 {dimension_numbers = #tpu.dot_dimension_numbers<[1], [0], [0], [1], [0, 0, 1, 1], [], []>} : vector<8x64xf32>, vector<64x64xf32>, vector<8x64xf32> -> vector<8x64xf32>
    %24 = arith.addf %22, %23 : vector<8x64xf32>
    %25 = math.tanh %24 : vector<8x64xf32>
    %26 = vector.extract_strided_slice %25 {offsets = [0, 32], sizes = [8, 32], strides = [1, 1]} : vector<8x64xf32> to vector<8x32xf32>
    %c0_20 = arith.constant 0 : index
    %c64 = arith.constant 64 : index
    %27 = vector.load %arg7[%c0_20, %c64] : memref<8x896xf32, #tpu.memory_space<vmem>>, vector<8x32xf32>
    tpu.vector_store %arg7[%c0_20, %c64], %26 {strides = array<i32>} : memref<8x896xf32, #tpu.memory_space<vmem>>, vector<8x32xf32>,
    %c32_21 = arith.constant 32 : index
    %c0_22 = arith.constant 0 : index
    %28 = vector.load %arg6[%c32_21, %c0_22] : memref<224x64xf32, #tpu.memory_space<vmem>>, vector<8x64xf32>
    %cst_23 = arith.constant dense<0.000000e+00> : vector<8x64xf32>
    %29 = tpu.matmul %25, %4, %cst_23 {dimension_numbers = #tpu.dot_dimension_numbers<[1], [0], [0], [1], [0, 0, 1, 1], [], []>} : vector<8x64xf32>, vector<64x64xf32>, vector<8x64xf32> -> vector<8x64xf32>
    %30 = arith.addf %28, %29 : vector<8x64xf32>
    %31 = math.tanh %30 : vector<8x64xf32>
    %32 = vector.extract_strided_slice %31 {offsets = [0, 32], sizes = [8, 32], strides = [1, 1]} : vector<8x64xf32> to vector<8x32xf32>
    %c0_24 = arith.constant 0 : index
    %c96 = arith.constant 96 : index
    %33 = vector.load %arg7[%c0_24, %c96] : memref<8x896xf32, #tpu.memory_space<vmem>>, vector<8x32xf32>
    tpu.vector_store %arg7[%c0_24, %c96], %32 {strides = array<i32>} : memref<8x896xf32, #tpu.memory_space<vmem>>, vector<8x32xf32>,
    %c40 = arith.constant 40 : index
    %c0_25 = arith.constant 0 : index
    %34 = vector.load %arg6[%c40, %c0_25] : memref<224x64xf32, #tpu.memory_space<vmem>>, vector<8x64xf32>
    %cst_26 = arith.constant dense<0.000000e+00> : vector<8x64xf32>
    %35 = tpu.matmul %31, %4, %cst_26 {dimension_numbers = #tpu.dot_dimension_numbers<[1], [0], [0], [1], [0, 0, 1, 1], [], []>} : vector<8x64xf32>, vector<64x64xf32>, vector<8x64xf32> -> vector<8x64xf32>
    %36 = arith.addf %34, %35 : vector<8x64xf32>
    %37 = math.tanh %36 : vector<8x64xf32>
    %38 = vector.extract_strided_slice %37 {offsets = [0, 32], sizes = [8, 32], strides = [1, 1]} : vector<8x64xf32> to vector<8x32xf32>
    %c0_27 = arith.constant 0 : index
    %c128 = arith.constant 128 : index
    %39 = vector.load %arg7[%c0_27, %c128] : memref<8x896xf32, #tpu.memory_space<vmem>>, vector<8x32xf32>
    tpu.vector_store %arg7[%c0_27, %c128], %38 {strides = array<i32>} : memref<8x896xf32, #tpu.memory_space<vmem>>, vector<8x32xf32>,
    %c48 = arith.constant 48 : index
    %c0_28 = arith.constant 0 : index
    %40 = vector.load %arg6[%c48, %c0_28] : memref<224x64xf32, #tpu.memory_space<vmem>>, vector<8x64xf32>
    %cst_29 = arith.constant dense<0.000000e+00> : vector<8x64xf32>
    %41 = tpu.matmul %37, %4, %cst_29 {dimension_numbers = #tpu.dot_dimension_numbers<[1], [0], [0], [1], [0, 0, 1, 1], [], []>} : vector<8x64xf32>, vector<64x64xf32>, vector<8x64xf32> -> vector<8x64xf32>
    %42 = arith.addf %40, %41 : vector<8x64xf32>
    %43 = math.tanh %42 : vector<8x64xf32>
    %44 = vector.extract_strided_slice %43 {offsets = [0, 32], sizes = [8, 32], strides = [1, 1]} : vector<8x64xf32> to vector<8x32xf32>
    %c0_30 = arith.constant 0 : index
    %c160 = arith.constant 160 : index
    %45 = vector.load %arg7[%c0_30, %c160] : memref<8x896xf32, #tpu.memory_space<vmem>>, vector<8x32xf32>
    tpu.vector_store %arg7[%c0_30, %c160], %44 {strides = array<i32>} : memref<8x896xf32, #tpu.memory_space<vmem>>, vector<8x32xf32>,
    %c56 = arith.constant 56 : index
    %c0_31 = arith.constant 0 : index
    %46 = vector.load %arg6[%c56, %c0_31] : memref<224x64xf32, #tpu.memory_space<vmem>>, vector<8x64xf32>
    %cst_32 = arith.constant dense<0.000000e+00> : vector<8x64xf32>
    %47 = tpu.matmul %43, %4, %cst_32 {dimension_numbers = #tpu.dot_dimension_numbers<[1], [0], [0], [1], [0, 0, 1, 1], [], []>} : vector<8x64xf32>, vector<64x64xf32>, vector<8x64xf32> -> vector<8x64xf32>
    %48 = arith.addf %46, %47 : vector<8x64xf32>
    %49 = math.tanh %48 : vector<8x64xf32>
    %50 = vector.extract_strided_slice %49 {offsets = [0, 32], sizes = [8, 32], strides = [1, 1]} : vector<8x64xf32> to vector<8x32xf32>
    %c0_33 = arith.constant 0 : index
    %c192 = arith.constant 192 : index
    %51 = vector.load %arg7[%c0_33, %c192] : memref<8x896xf32, #tpu.memory_space<vmem>>, vector<8x32xf32>
    tpu.vector_store %arg7[%c0_33, %c192], %50 {strides = array<i32>} : memref<8x896xf32, #tpu.memory_space<vmem>>, vector<8x32xf32>,
    %c64_34 = arith.constant 64 : index
    %c0_35 = arith.constant 0 : index
    %52 = vector.load %arg6[%c64_34, %c0_35] : memref<224x64xf32, #tpu.memory_space<vmem>>, vector<8x64xf32>
    %cst_36 = arith.constant dense<0.000000e+00> : vector<8x64xf32>
    %53 = tpu.matmul %49, %4, %cst_36 {dimension_numbers = #tpu.dot_dimension_numbers<[1], [0], [0], [1], [0, 0, 1, 1], [], []>} : vector<8x64xf32>, vector<64x64xf32>, vector<8x64xf32> -> vector<8x64xf32>
    %54 = arith.addf %52, %53 : vector<8x64xf32>
    %55 = math.tanh %54 : vector<8x64xf32>
    %56 = vector.extract_strided_slice %55 {offsets = [0, 32], sizes = [8, 32], strides = [1, 1]} : vector<8x64xf32> to vector<8x32xf32>
    %c0_37 = arith.constant 0 : index
    %c224 = arith.constant 224 : index
    %57 = vector.load %arg7[%c0_37, %c224] : memref<8x896xf32, #tpu.memory_space<vmem>>, vector<8x32xf32>
    tpu.vector_store %arg7[%c0_37, %c224], %56 {strides = array<i32>} : memref<8x896xf32, #tpu.memory_space<vmem>>, vector<8x32xf32>,
    %c72 = arith.constant 72 : index
    %c0_38 = arith.constant 0 : index
    %58 = vector.load %arg6[%c72, %c0_38] : memref<224x64xf32, #tpu.memory_space<vmem>>, vector<8x64xf32>
    %cst_39 = arith.constant dense<0.000000e+00> : vector<8x64xf32>
    %59 = tpu.matmul %55, %4, %cst_39 {dimension_numbers = #tpu.dot_dimension_numbers<[1], [0], [0], [1], [0, 0, 1, 1], [], []>} : vector<8x64xf32>, vector<64x64xf32>, vector<8x64xf32> -> vector<8x64xf32>
    %60 = arith.addf %58, %59 : vector<8x64xf32>
    %61 = math.tanh %60 : vector<8x64xf32>
    %62 = vector.extract_strided_slice %61 {offsets = [0, 32], sizes = [8, 32], strides = [1, 1]} : vector<8x64xf32> to vector<8x32xf32>
    %c0_40 = arith.constant 0 : index
    %c256 = arith.constant 256 : index
    %63 = vector.load %arg7[%c0_40, %c256] : memref<8x896xf32, #tpu.memory_space<vmem>>, vector<8x32xf32>
    tpu.vector_store %arg7[%c0_40, %c256], %62 {strides = array<i32>} : memref<8x896xf32, #tpu.memory_space<vmem>>, vector<8x32xf32>,
    %c80 = arith.constant 80 : index
    %c0_41 = arith.constant 0 : index
    %64 = vector.load %arg6[%c80, %c0_41] : memref<224x64xf32, #tpu.memory_space<vmem>>, vector<8x64xf32>
    %cst_42 = arith.constant dense<0.000000e+00> : vector<8x64xf32>
    %65 = tpu.matmul %61, %4, %cst_42 {dimension_numbers = #tpu.dot_dimension_numbers<[1], [0], [0], [1], [0, 0, 1, 1], [], []>} : vector<8x64xf32>, vector<64x64xf32>, vector<8x64xf32> -> vector<8x64xf32>
    %66 = arith.addf %64, %65 : vector<8x64xf32>
    %67 = math.tanh %66 : vector<8x64xf32>
    %68 = vector.extract_strided_slice %67 {offsets = [0, 32], sizes = [8, 32], strides = [1, 1]} : vector<8x64xf32> to vector<8x32xf32>
    %c0_43 = arith.constant 0 : index
    %c288 = arith.constant 288 : index
    %69 = vector.load %arg7[%c0_43, %c288] : memref<8x896xf32, #tpu.memory_space<vmem>>, vector<8x32xf32>
    tpu.vector_store %arg7[%c0_43, %c288], %68 {strides = array<i32>} : memref<8x896xf32, #tpu.memory_space<vmem>>, vector<8x32xf32>,
    %c88 = arith.constant 88 : index
    %c0_44 = arith.constant 0 : index
    %70 = vector.load %arg6[%c88, %c0_44] : memref<224x64xf32, #tpu.memory_space<vmem>>, vector<8x64xf32>
    %cst_45 = arith.constant dense<0.000000e+00> : vector<8x64xf32>
    %71 = tpu.matmul %67, %4, %cst_45 {dimension_numbers = #tpu.dot_dimension_numbers<[1], [0], [0], [1], [0, 0, 1, 1], [], []>} : vector<8x64xf32>, vector<64x64xf32>, vector<8x64xf32> -> vector<8x64xf32>
    %72 = arith.addf %70, %71 : vector<8x64xf32>
    %73 = math.tanh %72 : vector<8x64xf32>
    %74 = vector.extract_strided_slice %73 {offsets = [0, 32], sizes = [8, 32], strides = [1, 1]} : vector<8x64xf32> to vector<8x32xf32>
    %c0_46 = arith.constant 0 : index
    %c320 = arith.constant 320 : index
    %75 = vector.load %arg7[%c0_46, %c320] : memref<8x896xf32, #tpu.memory_space<vmem>>, vector<8x32xf32>
    tpu.vector_store %arg7[%c0_46, %c320], %74 {strides = array<i32>} : memref<8x896xf32, #tpu.memory_space<vmem>>, vector<8x32xf32>,
    %c96_47 = arith.constant 96 : index
    %c0_48 = arith.constant 0 : index
    %76 = vector.load %arg6[%c96_47, %c0_48] : memref<224x64xf32, #tpu.memory_space<vmem>>, vector<8x64xf32>
    %cst_49 = arith.constant dense<0.000000e+00> : vector<8x64xf32>
    %77 = tpu.matmul %73, %4, %cst_49 {dimension_numbers = #tpu.dot_dimension_numbers<[1], [0], [0], [1], [0, 0, 1, 1], [], []>} : vector<8x64xf32>, vector<64x64xf32>, vector<8x64xf32> -> vector<8x64xf32>
    %78 = arith.addf %76, %77 : vector<8x64xf32>
    %79 = math.tanh %78 : vector<8x64xf32>
    %80 = vector.extract_strided_slice %79 {offsets = [0, 32], sizes = [8, 32], strides = [1, 1]} : vector<8x64xf32> to vector<8x32xf32>
    %c0_50 = arith.constant 0 : index
    %c352 = arith.constant 352 : index
    %81 = vector.load %arg7[%c0_50, %c352] : memref<8x896xf32, #tpu.memory_space<vmem>>, vector<8x32xf32>
    tpu.vector_store %arg7[%c0_50, %c352], %80 {strides = array<i32>} : memref<8x896xf32, #tpu.memory_space<vmem>>, vector<8x32xf32>,
    %c104 = arith.constant 104 : index
    %c0_51 = arith.constant 0 : index
    %82 = vector.load %arg6[%c104, %c0_51] : memref<224x64xf32, #tpu.memory_space<vmem>>, vector<8x64xf32>
    %cst_52 = arith.constant dense<0.000000e+00> : vector<8x64xf32>
    %83 = tpu.matmul %79, %4, %cst_52 {dimension_numbers = #tpu.dot_dimension_numbers<[1], [0], [0], [1], [0, 0, 1, 1], [], []>} : vector<8x64xf32>, vector<64x64xf32>, vector<8x64xf32> -> vector<8x64xf32>
    %84 = arith.addf %82, %83 : vector<8x64xf32>
    %85 = math.tanh %84 : vector<8x64xf32>
    %86 = vector.extract_strided_slice %85 {offsets = [0, 32], sizes = [8, 32], strides = [1, 1]} : vector<8x64xf32> to vector<8x32xf32>
    %c0_53 = arith.constant 0 : index
    %c384 = arith.constant 384 : index
    %87 = vector.load %arg7[%c0_53, %c384] : memref<8x896xf32, #tpu.memory_space<vmem>>, vector<8x32xf32>
    tpu.vector_store %arg7[%c0_53, %c384], %86 {strides = array<i32>} : memref<8x896xf32, #tpu.memory_space<vmem>>, vector<8x32xf32>,
    %c112 = arith.constant 112 : index
    %c0_54 = arith.constant 0 : index
    %88 = vector.load %arg6[%c112, %c0_54] : memref<224x64xf32, #tpu.memory_space<vmem>>, vector<8x64xf32>
    %cst_55 = arith.constant dense<0.000000e+00> : vector<8x64xf32>
    %89 = tpu.matmul %85, %4, %cst_55 {dimension_numbers = #tpu.dot_dimension_numbers<[1], [0], [0], [1], [0, 0, 1, 1], [], []>} : vector<8x64xf32>, vector<64x64xf32>, vector<8x64xf32> -> vector<8x64xf32>
    %90 = arith.addf %88, %89 : vector<8x64xf32>
    %91 = math.tanh %90 : vector<8x64xf32>
    %92 = vector.extract_strided_slice %91 {offsets = [0, 32], sizes = [8, 32], strides = [1, 1]} : vector<8x64xf32> to vector<8x32xf32>
    %c0_56 = arith.constant 0 : index
    %c416 = arith.constant 416 : index
    %93 = vector.load %arg7[%c0_56, %c416] : memref<8x896xf32, #tpu.memory_space<vmem>>, vector<8x32xf32>
    tpu.vector_store %arg7[%c0_56, %c416], %92 {strides = array<i32>} : memref<8x896xf32, #tpu.memory_space<vmem>>, vector<8x32xf32>,
    %c120 = arith.constant 120 : index
    %c0_57 = arith.constant 0 : index
    %94 = vector.load %arg6[%c120, %c0_57] : memref<224x64xf32, #tpu.memory_space<vmem>>, vector<8x64xf32>
    %cst_58 = arith.constant dense<0.000000e+00> : vector<8x64xf32>
    %95 = tpu.matmul %91, %4, %cst_58 {dimension_numbers = #tpu.dot_dimension_numbers<[1], [0], [0], [1], [0, 0, 1, 1], [], []>} : vector<8x64xf32>, vector<64x64xf32>, vector<8x64xf32> -> vector<8x64xf32>
    %96 = arith.addf %94, %95 : vector<8x64xf32>
    %97 = math.tanh %96 : vector<8x64xf32>
    %98 = vector.extract_strided_slice %97 {offsets = [0, 32], sizes = [8, 32], strides = [1, 1]} : vector<8x64xf32> to vector<8x32xf32>
    %c0_59 = arith.constant 0 : index
    %c448 = arith.constant 448 : index
    %99 = vector.load %arg7[%c0_59, %c448] : memref<8x896xf32, #tpu.memory_space<vmem>>, vector<8x32xf32>
    tpu.vector_store %arg7[%c0_59, %c448], %98 {strides = array<i32>} : memref<8x896xf32, #tpu.memory_space<vmem>>, vector<8x32xf32>,
    %c128_60 = arith.constant 128 : index
    %c0_61 = arith.constant 0 : index
    %100 = vector.load %arg6[%c128_60, %c0_61] : memref<224x64xf32, #tpu.memory_space<vmem>>, vector<8x64xf32>
    %cst_62 = arith.constant dense<0.000000e+00> : vector<8x64xf32>
    %101 = tpu.matmul %97, %4, %cst_62 {dimension_numbers = #tpu.dot_dimension_numbers<[1], [0], [0], [1], [0, 0, 1, 1], [], []>} : vector<8x64xf32>, vector<64x64xf32>, vector<8x64xf32> -> vector<8x64xf32>
    %102 = arith.addf %100, %101 : vector<8x64xf32>
    %103 = math.tanh %102 : vector<8x64xf32>
    %104 = vector.extract_strided_slice %103 {offsets = [0, 32], sizes = [8, 32], strides = [1, 1]} : vector<8x64xf32> to vector<8x32xf32>
    %c0_63 = arith.constant 0 : index
    %c480 = arith.constant 480 : index
    %105 = vector.load %arg7[%c0_63, %c480] : memref<8x896xf32, #tpu.memory_space<vmem>>, vector<8x32xf32>
    tpu.vector_store %arg7[%c0_63, %c480], %104 {strides = array<i32>} : memref<8x896xf32, #tpu.memory_space<vmem>>, vector<8x32xf32>,
    %c136 = arith.constant 136 : index
    %c0_64 = arith.constant 0 : index
    %106 = vector.load %arg6[%c136, %c0_64] : memref<224x64xf32, #tpu.memory_space<vmem>>, vector<8x64xf32>
    %cst_65 = arith.constant dense<0.000000e+00> : vector<8x64xf32>
    %107 = tpu.matmul %103, %4, %cst_65 {dimension_numbers = #tpu.dot_dimension_numbers<[1], [0], [0], [1], [0, 0, 1, 1], [], []>} : vector<8x64xf32>, vector<64x64xf32>, vector<8x64xf32> -> vector<8x64xf32>
    %108 = arith.addf %106, %107 : vector<8x64xf32>
    %109 = math.tanh %108 : vector<8x64xf32>
    %110 = vector.extract_strided_slice %109 {offsets = [0, 32], sizes = [8, 32], strides = [1, 1]} : vector<8x64xf32> to vector<8x32xf32>
    %c0_66 = arith.constant 0 : index
    %c512 = arith.constant 512 : index
    %111 = vector.load %arg7[%c0_66, %c512] : memref<8x896xf32, #tpu.memory_space<vmem>>, vector<8x32xf32>
    tpu.vector_store %arg7[%c0_66, %c512], %110 {strides = array<i32>} : memref<8x896xf32, #tpu.memory_space<vmem>>, vector<8x32xf32>,
    %c144 = arith.constant 144 : index
    %c0_67 = arith.constant 0 : index
    %112 = vector.load %arg6[%c144, %c0_67] : memref<224x64xf32, #tpu.memory_space<vmem>>, vector<8x64xf32>
    %cst_68 = arith.constant dense<0.000000e+00> : vector<8x64xf32>
    %113 = tpu.matmul %109, %4, %cst_68 {dimension_numbers = #tpu.dot_dimension_numbers<[1], [0], [0], [1], [0, 0, 1, 1], [], []>} : vector<8x64xf32>, vector<64x64xf32>, vector<8x64xf32> -> vector<8x64xf32>
    %114 = arith.addf %112, %113 : vector<8x64xf32>
    %115 = math.tanh %114 : vector<8x64xf32>
    %116 = vector.extract_strided_slice %115 {offsets = [0, 32], sizes = [8, 32], strides = [1, 1]} : vector<8x64xf32> to vector<8x32xf32>
    %c0_69 = arith.constant 0 : index
    %c544 = arith.constant 544 : index
    %117 = vector.load %arg7[%c0_69, %c544] : memref<8x896xf32, #tpu.memory_space<vmem>>, vector<8x32xf32>
    tpu.vector_store %arg7[%c0_69, %c544], %116 {strides = array<i32>} : memref<8x896xf32, #tpu.memory_space<vmem>>, vector<8x32xf32>,
    %c152 = arith.constant 152 : index
    %c0_70 = arith.constant 0 : index
    %118 = vector.load %arg6[%c152, %c0_70] : memref<224x64xf32, #tpu.memory_space<vmem>>, vector<8x64xf32>
    %cst_71 = arith.constant dense<0.000000e+00> : vector<8x64xf32>
    %119 = tpu.matmul %115, %4, %cst_71 {dimension_numbers = #tpu.dot_dimension_numbers<[1], [0], [0], [1], [0, 0, 1, 1], [], []>} : vector<8x64xf32>, vector<64x64xf32>, vector<8x64xf32> -> vector<8x64xf32>
    %120 = arith.addf %118, %119 : vector<8x64xf32>
    %121 = math.tanh %120 : vector<8x64xf32>
    %122 = vector.extract_strided_slice %121 {offsets = [0, 32], sizes = [8, 32], strides = [1, 1]} : vector<8x64xf32> to vector<8x32xf32>
    %c0_72 = arith.constant 0 : index
    %c576 = arith.constant 576 : index
    %123 = vector.load %arg7[%c0_72, %c576] : memref<8x896xf32, #tpu.memory_space<vmem>>, vector<8x32xf32>
    tpu.vector_store %arg7[%c0_72, %c576], %122 {strides = array<i32>} : memref<8x896xf32, #tpu.memory_space<vmem>>, vector<8x32xf32>,
    %c160_73 = arith.constant 160 : index
    %c0_74 = arith.constant 0 : index
    %124 = vector.load %arg6[%c160_73, %c0_74] : memref<224x64xf32, #tpu.memory_space<vmem>>, vector<8x64xf32>
    %cst_75 = arith.constant dense<0.000000e+00> : vector<8x64xf32>
    %125 = tpu.matmul %121, %4, %cst_75 {dimension_numbers = #tpu.dot_dimension_numbers<[1], [0], [0], [1], [0, 0, 1, 1], [], []>} : vector<8x64xf32>, vector<64x64xf32>, vector<8x64xf32> -> vector<8x64xf32>
    %126 = arith.addf %124, %125 : vector<8x64xf32>
    %127 = math.tanh %126 : vector<8x64xf32>
    %128 = vector.extract_strided_slice %127 {offsets = [0, 32], sizes = [8, 32], strides = [1, 1]} : vector<8x64xf32> to vector<8x32xf32>
    %c0_76 = arith.constant 0 : index
    %c608 = arith.constant 608 : index
    %129 = vector.load %arg7[%c0_76, %c608] : memref<8x896xf32, #tpu.memory_space<vmem>>, vector<8x32xf32>
    tpu.vector_store %arg7[%c0_76, %c608], %128 {strides = array<i32>} : memref<8x896xf32, #tpu.memory_space<vmem>>, vector<8x32xf32>,
    %c168 = arith.constant 168 : index
    %c0_77 = arith.constant 0 : index
    %130 = vector.load %arg6[%c168, %c0_77] : memref<224x64xf32, #tpu.memory_space<vmem>>, vector<8x64xf32>
    %cst_78 = arith.constant dense<0.000000e+00> : vector<8x64xf32>
    %131 = tpu.matmul %127, %4, %cst_78 {dimension_numbers = #tpu.dot_dimension_numbers<[1], [0], [0], [1], [0, 0, 1, 1], [], []>} : vector<8x64xf32>, vector<64x64xf32>, vector<8x64xf32> -> vector<8x64xf32>
    %132 = arith.addf %130, %131 : vector<8x64xf32>
    %133 = math.tanh %132 : vector<8x64xf32>
    %134 = vector.extract_strided_slice %133 {offsets = [0, 32], sizes = [8, 32], strides = [1, 1]} : vector<8x64xf32> to vector<8x32xf32>
    %c0_79 = arith.constant 0 : index
    %c640 = arith.constant 640 : index
    %135 = vector.load %arg7[%c0_79, %c640] : memref<8x896xf32, #tpu.memory_space<vmem>>, vector<8x32xf32>
    tpu.vector_store %arg7[%c0_79, %c640], %134 {strides = array<i32>} : memref<8x896xf32, #tpu.memory_space<vmem>>, vector<8x32xf32>,
    %c176 = arith.constant 176 : index
    %c0_80 = arith.constant 0 : index
    %136 = vector.load %arg6[%c176, %c0_80] : memref<224x64xf32, #tpu.memory_space<vmem>>, vector<8x64xf32>
    %cst_81 = arith.constant dense<0.000000e+00> : vector<8x64xf32>
    %137 = tpu.matmul %133, %4, %cst_81 {dimension_numbers = #tpu.dot_dimension_numbers<[1], [0], [0], [1], [0, 0, 1, 1], [], []>} : vector<8x64xf32>, vector<64x64xf32>, vector<8x64xf32> -> vector<8x64xf32>
    %138 = arith.addf %136, %137 : vector<8x64xf32>
    %139 = math.tanh %138 : vector<8x64xf32>
    %140 = vector.extract_strided_slice %139 {offsets = [0, 32], sizes = [8, 32], strides = [1, 1]} : vector<8x64xf32> to vector<8x32xf32>
    %c0_82 = arith.constant 0 : index
    %c672 = arith.constant 672 : index
    %141 = vector.load %arg7[%c0_82, %c672] : memref<8x896xf32, #tpu.memory_space<vmem>>, vector<8x32xf32>
    tpu.vector_store %arg7[%c0_82, %c672], %140 {strides = array<i32>} : memref<8x896xf32, #tpu.memory_space<vmem>>, vector<8x32xf32>,
    %c184 = arith.constant 184 : index
    %c0_83 = arith.constant 0 : index
    %142 = vector.load %arg6[%c184, %c0_83] : memref<224x64xf32, #tpu.memory_space<vmem>>, vector<8x64xf32>
    %cst_84 = arith.constant dense<0.000000e+00> : vector<8x64xf32>
    %143 = tpu.matmul %139, %4, %cst_84 {dimension_numbers = #tpu.dot_dimension_numbers<[1], [0], [0], [1], [0, 0, 1, 1], [], []>} : vector<8x64xf32>, vector<64x64xf32>, vector<8x64xf32> -> vector<8x64xf32>
    %144 = arith.addf %142, %143 : vector<8x64xf32>
    %145 = math.tanh %144 : vector<8x64xf32>
    %146 = vector.extract_strided_slice %145 {offsets = [0, 32], sizes = [8, 32], strides = [1, 1]} : vector<8x64xf32> to vector<8x32xf32>
    %c0_85 = arith.constant 0 : index
    %c704 = arith.constant 704 : index
    %147 = vector.load %arg7[%c0_85, %c704] : memref<8x896xf32, #tpu.memory_space<vmem>>, vector<8x32xf32>
    tpu.vector_store %arg7[%c0_85, %c704], %146 {strides = array<i32>} : memref<8x896xf32, #tpu.memory_space<vmem>>, vector<8x32xf32>,
    %c192_86 = arith.constant 192 : index
    %c0_87 = arith.constant 0 : index
    %148 = vector.load %arg6[%c192_86, %c0_87] : memref<224x64xf32, #tpu.memory_space<vmem>>, vector<8x64xf32>
    %cst_88 = arith.constant dense<0.000000e+00> : vector<8x64xf32>
    %149 = tpu.matmul %145, %4, %cst_88 {dimension_numbers = #tpu.dot_dimension_numbers<[1], [0], [0], [1], [0, 0, 1, 1], [], []>} : vector<8x64xf32>, vector<64x64xf32>, vector<8x64xf32> -> vector<8x64xf32>
    %150 = arith.addf %148, %149 : vector<8x64xf32>
    %151 = math.tanh %150 : vector<8x64xf32>
    %152 = vector.extract_strided_slice %151 {offsets = [0, 32], sizes = [8, 32], strides = [1, 1]} : vector<8x64xf32> to vector<8x32xf32>
    %c0_89 = arith.constant 0 : index
    %c736 = arith.constant 736 : index
    %153 = vector.load %arg7[%c0_89, %c736] : memref<8x896xf32, #tpu.memory_space<vmem>>, vector<8x32xf32>
    tpu.vector_store %arg7[%c0_89, %c736], %152 {strides = array<i32>} : memref<8x896xf32, #tpu.memory_space<vmem>>, vector<8x32xf32>,
    %c200 = arith.constant 200 : index
    %c0_90 = arith.constant 0 : index
    %154 = vector.load %arg6[%c200, %c0_90] : memref<224x64xf32, #tpu.memory_space<vmem>>, vector<8x64xf32>
    %cst_91 = arith.constant dense<0.000000e+00> : vector<8x64xf32>
    %155 = tpu.matmul %151, %4, %cst_91 {dimension_numbers = #tpu.dot_dimension_numbers<[1], [0], [0], [1], [0, 0, 1, 1], [], []>} : vector<8x64xf32>, vector<64x64xf32>, vector<8x64xf32> -> vector<8x64xf32>
    %156 = arith.addf %154, %155 : vector<8x64xf32>
    %157 = math.tanh %156 : vector<8x64xf32>
    %158 = vector.extract_strided_slice %157 {offsets = [0, 32], sizes = [8, 32], strides = [1, 1]} : vector<8x64xf32> to vector<8x32xf32>
    %c0_92 = arith.constant 0 : index
    %c768 = arith.constant 768 : index
    %159 = vector.load %arg7[%c0_92, %c768] : memref<8x896xf32, #tpu.memory_space<vmem>>, vector<8x32xf32>
    tpu.vector_store %arg7[%c0_92, %c768], %158 {strides = array<i32>} : memref<8x896xf32, #tpu.memory_space<vmem>>, vector<8x32xf32>,
    %c208 = arith.constant 208 : index
    %c0_93 = arith.constant 0 : index
    %160 = vector.load %arg6[%c208, %c0_93] : memref<224x64xf32, #tpu.memory_space<vmem>>, vector<8x64xf32>
    %cst_94 = arith.constant dense<0.000000e+00> : vector<8x64xf32>
    %161 = tpu.matmul %157, %4, %cst_94 {dimension_numbers = #tpu.dot_dimension_numbers<[1], [0], [0], [1], [0, 0, 1, 1], [], []>} : vector<8x64xf32>, vector<64x64xf32>, vector<8x64xf32> -> vector<8x64xf32>
    %162 = arith.addf %160, %161 : vector<8x64xf32>
    %163 = math.tanh %162 : vector<8x64xf32>
    %164 = vector.extract_strided_slice %163 {offsets = [0, 32], sizes = [8, 32], strides = [1, 1]} : vector<8x64xf32> to vector<8x32xf32>
    %c0_95 = arith.constant 0 : index
    %c800 = arith.constant 800 : index
    %165 = vector.load %arg7[%c0_95, %c800] : memref<8x896xf32, #tpu.memory_space<vmem>>, vector<8x32xf32>
    tpu.vector_store %arg7[%c0_95, %c800], %164 {strides = array<i32>} : memref<8x896xf32, #tpu.memory_space<vmem>>, vector<8x32xf32>,
    %c216 = arith.constant 216 : index
    %c0_96 = arith.constant 0 : index
    %166 = vector.load %arg6[%c216, %c0_96] : memref<224x64xf32, #tpu.memory_space<vmem>>, vector<8x64xf32>
    %cst_97 = arith.constant dense<0.000000e+00> : vector<8x64xf32>
    %167 = tpu.matmul %163, %4, %cst_97 {dimension_numbers = #tpu.dot_dimension_numbers<[1], [0], [0], [1], [0, 0, 1, 1], [], []>} : vector<8x64xf32>, vector<64x64xf32>, vector<8x64xf32> -> vector<8x64xf32>
    %168 = arith.addf %166, %167 : vector<8x64xf32>
    %169 = math.tanh %168 : vector<8x64xf32>
    %170 = vector.extract_strided_slice %169 {offsets = [0, 32], sizes = [8, 32], strides = [1, 1]} : vector<8x64xf32> to vector<8x32xf32>
    %c0_98 = arith.constant 0 : index
    %c832 = arith.constant 832 : index
    %171 = vector.load %arg7[%c0_98, %c832] : memref<8x896xf32, #tpu.memory_space<vmem>>, vector<8x32xf32>
    tpu.vector_store %arg7[%c0_98, %c832], %170 {strides = array<i32>} : memref<8x896xf32, #tpu.memory_space<vmem>>, vector<8x32xf32>,
    %cst_99 = arith.constant dense<0.000000e+00> : vector<8x64xf32>
    %172 = tpu.matmul %169, %4, %cst_99 {dimension_numbers = #tpu.dot_dimension_numbers<[1], [0], [0], [1], [0, 0, 1, 1], [], []>} : vector<8x64xf32>, vector<64x64xf32>, vector<8x64xf32> -> vector<8x64xf32>
    %173 = math.tanh %172 : vector<8x64xf32>
    %174 = vector.extract_strided_slice %173 {offsets = [0, 32], sizes = [8, 32], strides = [1, 1]} : vector<8x64xf32> to vector<8x32xf32>
    %c0_100 = arith.constant 0 : index
    %c864 = arith.constant 864 : index
    %175 = vector.load %arg7[%c0_100, %c864] : memref<8x896xf32, #tpu.memory_space<vmem>>, vector<8x32xf32>
    tpu.vector_store %arg7[%c0_100, %c864], %174 {strides = array<i32>} : memref<8x896xf32, #tpu.memory_space<vmem>>, vector<8x32xf32>,
    %c0_101 = arith.constant 0 : index
    %c0_102 = arith.constant 0 : index
    %176 = vector.load %arg7[%c0_101, %c0_102] : memref<8x896xf32, #tpu.memory_space<vmem>>, vector<8x896xf32>
    %c0_103 = arith.constant 0 : index
    %c0_104 = arith.constant 0 : index
    %177 = vector.load %arg3[%c0_103, %c0_104] : memref<896x10xf32, #tpu.memory_space<vmem>>, vector<896x10xf32>
    %cst_105 = arith.constant dense<0.000000e+00> : vector<8x10xf32>
    %178 = tpu.matmul %176, %177, %cst_105 {dimension_numbers = #tpu.dot_dimension_numbers<[1], [0], [0], [1], [0, 0, 1, 1], [], []>} : vector<8x896xf32>, vector<896x10xf32>, vector<8x10xf32> -> vector<8x10xf32>
    %c0_106 = arith.constant 0 : index
    %c0_107 = arith.constant 0 : index
    %179 = vector.load %arg4[%c0_106, %c0_107] : memref<1x10xf32, #tpu.memory_space<vmem>>, vector<1x10xf32>
    %180 = vector.broadcast %179 : vector<1x10xf32> to vector<8x10xf32>
    %181 = arith.addf %178, %180 : vector<8x10xf32>
    %c0_108 = arith.constant 0 : index
    %c0_109 = arith.constant 0 : index
    %182 = vector.load %arg5[%c0_108, %c0_109] : memref<8x10xf32, #tpu.memory_space<vmem>>, vector<8x10xf32>
    tpu.vector_store %arg5[%c0_108, %c0_109], %181 {strides = array<i32>} : memref<8x10xf32, #tpu.memory_space<vmem>>, vector<8x10xf32>,
    return
  }
}

</mosaic_0001>

<llo_original>
// kernel: tpu_custom_call.1
$region0: #{tpu_custom_call.1}
  #allocation0 [shape = 'u32[]', space=smem, size = 0x4, offset = 0x4, fixed_abs, tag = 'smem constant byte address 0x4 - core index']
  #allocation1 [shape = 'u32[144,128]{1,0:T(1,128)}', space=vmem, size = 0x12000, scoped, tag = 'internal scratch']
  #allocation2 [shape = 'f32[224,64]{1,0:T(8,128)}', space=vmem, size = 0x1c000, scoped, tag = 'scratch operand']
  #allocation3 [shape = 'f32[8,896]{1,0:T(8,128)}', space=vmem, size = 0x7000, scoped, tag = 'scratch operand']
  %s0 = inlined_call_operand.vmem [shape: f32[224,32], index: 0, kind: input, shape index: {}]
  %s1 = inlined_call_operand.vmem [shape: f32[32,64], index: 1, kind: input, shape index: {}]
  %s2 = inlined_call_operand.vmem [shape: f32[64,64], index: 2, kind: input, shape index: {}]
  %s3 = inlined_call_operand.vmem [shape: f32[896,10], index: 3, kind: input, shape index: {}]
  %s4 = inlined_call_operand.vmem [shape: f32[1,10], index: 4, kind: input, shape index: {}]
  %s5 = inlined_call_operand.hbm [shape: f32[8,10], index: 5, kind: output, shape index: {}]
  %s6 = sld [smem:[#allocation0]]
  $region30: #{tpu_custom_call.1} parent=0
    _
  %s8 = ssub.s32 1, %s6
  %s9 = scalar_select 0, %s8, %s6
  $region1: #{tpu_custom_call.1} parent=0
    #allocation4 [shape = 'u8[4096]{0}', space=vmem, size = 0x1000, scoped, tag = 'output window, operand 0, single buffered']
    #allocation5 [shape = 's32[1]{0}', space=sflag, size = 0x4, scoped, tag = 'scoped memory for tpu_custom_call.1']
    %10 = vsyncpa [#allocation5], 0
    // Predicated region
    $region2: #{tpu_custom_call.1} parent=1 // pred_check
      _
    $region3: #{tpu_custom_call.1} parent=1 // pred_check_branch
      %12 = sbr.rel (0) target = $region5
    $region4: #{tpu_custom_call.1} parent=1 // pred_region
      _
    $region5: #{tpu_custom_call.1} parent=1 // pred_fallthru
      _
    // Predicated region
    $region6: #{tpu_custom_call.1} parent=1 // pred_check
      _
    $region7: #{tpu_custom_call.1} parent=1 // pred_check_branch
      %14 = sbr.rel (0) target = $region9
    $region8: #{tpu_custom_call.1} parent=1 // pred_region
      _
    $region9: #{tpu_custom_call.1} parent=1 // pred_fallthru
      _
    // Predicated region
    $region10: #{tpu_custom_call.1} parent=1 // pred_check
      _
    $region11: #{tpu_custom_call.1} parent=1 // pred_check_branch
      %16 = sbr.rel (0) target = $region13
    $region12: #{tpu_custom_call.1} parent=1 // pred_region
      _
    $region13: #{tpu_custom_call.1} parent=1 // pred_fallthru
      _
    // Predicated region
    $region14: #{tpu_custom_call.1} parent=1 // pred_check
      _
    $region15: #{tpu_custom_call.1} parent=1 // pred_check_branch
      %18 = sbr.rel (0) target = $region17
    $region16: #{tpu_custom_call.1} parent=1 // pred_region
      _
    $region17: #{tpu_custom_call.1} parent=1 // pred_fallthru
      _
    // Predicated region
    $region18: #{tpu_custom_call.1} parent=1 // pred_check
      _
    $region19: #{tpu_custom_call.1} parent=1 // pred_check_branch
      %20 = sbr.rel (0) target = $region21
    $region20: #{tpu_custom_call.1} parent=1 // pred_region
      _
    $region21: #{tpu_custom_call.1} parent=1 // pred_fallthru
      _
    %v21 = vld [vmem:[%s0] sm:$0xff]
    %v22 = vld [vmem:[%s0 + $0x8] sm:$0xff]
    %v23 = vld [vmem:[%s0 + $0x10] sm:$0xff]
    %v24 = vld [vmem:[%s0 + $0x18] sm:$0xff]
    %v25 = vld [vmem:[%s0 + $0x20] sm:$0xff]
    %v26 = vld [vmem:[%s0 + $0x28] sm:$0xff]
    %v27 = vld [vmem:[%s0 + $0x30] sm:$0xff]
    %v28 = vld [vmem:[%s0 + $0x38] sm:$0xff]
    %v29 = vld [vmem:[%s0 + $0x40] sm:$0xff]
    %v30 = vld [vmem:[%s0 + $0x48] sm:$0xff]
    %v31 = vld [vmem:[%s0 + $0x50] sm:$0xff]
    %v32 = vld [vmem:[%s0 + $0x58] sm:$0xff]
    %v33 = vld [vmem:[%s0 + $0x60] sm:$0xff]
    %v34 = vld [vmem:[%s0 + $0x68] sm:$0xff]
    %v35 = vld [vmem:[%s0 + $0x70] sm:$0xff]
    %v36 = vld [vmem:[%s0 + $0x78] sm:$0xff]
    %v37 = vld [vmem:[%s0 + $0x80] sm:$0xff]
    %v38 = vld [vmem:[%s0 + $0x88] sm:$0xff]
    %v39 = vld [vmem:[%s0 + $0x90] sm:$0xff]
    %v40 = vld [vmem:[%s0 + $0x98] sm:$0xff]
    %v41 = vld [vmem:[%s0 + $0xa0] sm:$0xff]
    %v42 = vld [vmem:[%s0 + $0xa8] sm:$0xff]
    %v43 = vld [vmem:[%s0 + $0xb0] sm:$0xff]
    %v44 = vld [vmem:[%s0 + $0xb8] sm:$0xff]
    %v45 = vld [vmem:[%s0 + $0xc0] sm:$0xff]
    %v46 = vld [vmem:[%s0 + $0xc8] sm:$0xff]
    %v47 = vld [vmem:[%s0 + $0xd0] sm:$0xff]
    %v48 = vld [vmem:[%s0 + $0xd8] sm:$0xff]
    %v49 = vld [vmem:[%s1] sm:$0xff]
    %v50 = vld [vmem:[%s1 + $0x8] sm:$0xff]
    %v51 = vld [vmem:[%s1 + $0x10] sm:$0xff]
    %v52 = vld [vmem:[%s1 + $0x18] sm:$0xff]
    %vm53 = vcmask 261120
    %v55 = vsel %vm53, %v21, 0
    %v58 = vsel %vm53, %v22, 0
    %v61 = vsel %vm53, %v23, 0
    %v64 = vsel %vm53, %v24, 0
    %v67 = vsel %vm53, %v25, 0
    %v70 = vsel %vm53, %v26, 0
    %v73 = vsel %vm53, %v27, 0
    %v76 = vsel %vm53, %v28, 0
    %v79 = vsel %vm53, %v29, 0
    %v82 = vsel %vm53, %v30, 0
    %v85 = vsel %vm53, %v31, 0
    %v88 = vsel %vm53, %v32, 0
    %v91 = vsel %vm53, %v33, 0
    %v94 = vsel %vm53, %v34, 0
    %v97 = vsel %vm53, %v35, 0
    %v100 = vsel %vm53, %v36, 0
    %v103 = vsel %vm53, %v37, 0
    %v106 = vsel %vm53, %v38, 0
    %v109 = vsel %vm53, %v39, 0
    %v112 = vsel %vm53, %v40, 0
    %v115 = vsel %vm53, %v41, 0
    %v118 = vsel %vm53, %v42, 0
    %v121 = vsel %vm53, %v43, 0
    %v124 = vsel %vm53, %v44, 0
    %v127 = vsel %vm53, %v45, 0
    %v130 = vsel %vm53, %v46, 0
    %v133 = vsel %vm53, %v47, 0
    %v136 = vsel %vm53, %v48, 0
    %138 = vmatprep.subr.mxu0 0.0
    %139 = vmatpush1.msra.mxu0 0.0
    %140 = vmatprep.subr.mxu0 0.0
    %141 = vmatpush1.msra.mxu0 0.0
    %142 = vmatprep.subr.mxu0 0.0
    %143 = vmatpush1.msra.mxu0 0.0
    %144 = vmatprep.subr.mxu0 0.0
    %145 = vmatpush1.msra.mxu0 0.0
    %146 = vmatprep.subr.mxu0 0.0
    %147 = vmatpush1.msra.mxu0 0.0
    %148 = vmatprep.subr.mxu0 0.0
    %149 = vmatpush1.msra.mxu0 0.0
    %150 = vmatprep.subr.mxu0 0.0
    %151 = vmatpush1.msra.mxu0 0.0
    %152 = vmatprep.subr.mxu0 0.0
    %153 = vmatpush1.msra.mxu0 0.0
    %154 = vmatprep.subr.mxu0 0.0
    %155 = vmatpush1.msra.mxu0 0.0
    %156 = vmatprep.subr.mxu0 0.0
    %157 = vmatpush1.msra.mxu0 0.0
    %158 = vmatprep.subr.mxu0 0.0
    %159 = vmatpush1.msra.mxu0 0.0
    %160 = vmatprep.subr.mxu0 0.0
    %161 = vmatpush1.msra.mxu0 0.0
    %162 = vmatprep.subr.mxu0 0.0
    %163 = vmatpush1.msra.mxu0 %v52
    %164 = vmatprep.subr.mxu0 0.0
    %165 = vmatpush1.msra.mxu0 %v51
    %166 = vmatprep.subr.mxu0 0.0
    %167 = vmatpush1.msra.mxu0 %v50
    %168 = vmatprep.subr.mxu0 0.0
    %169 = vmatpush1.msra.mxu0 %v49
    %170 = vmatprep.subr.mxu0 0.0
    %171 = vmatpush2.msra.mxu0 0.0
    %172 = vmatprep.subr.mxu0 0.0
    %173 = vmatpush2.msra.mxu0 0.0
    %174 = vmatprep.subr.mxu0 0.0
    %175 = vmatpush2.msra.mxu0 0.0
    %176 = vmatprep.subr.mxu0 0.0
    %177 = vmatpush2.msra.mxu0 0.0
    %178 = vmatprep.subr.mxu0 0.0
    %179 = vmatpush2.msra.mxu0 0.0
    %180 = vmatprep.subr.mxu0 0.0
    %181 = vmatpush2.msra.mxu0 0.0
    %182 = vmatprep.subr.mxu0 0.0
    %183 = vmatpush2.msra.mxu0 0.0
    %184 = vmatprep.subr.mxu0 0.0
    %185 = vmatpush2.msra.mxu0 0.0
    %186 = vmatprep.subr.mxu0 0.0
    %187 = vmatpush2.msra.mxu0 0.0
    %188 = vmatprep.subr.mxu0 0.0
    %189 = vmatpush2.msra.mxu0 0.0
    %190 = vmatprep.subr.mxu0 0.0
    %191 = vmatpush2.msra.mxu0 0.0
    %192 = vmatprep.subr.mxu0 0.0
    %193 = vmatpush2.msra.mxu0 0.0
    %194 = vmatprep.subr.mxu0 0.0
    %195 = vmatpush2.msra.mxu0 0.0
    %196 = vmatprep.subr.mxu0 0.0
    %197 = vmatpush2.msra.mxu0 0.0
    %198 = vmatprep.subr.mxu0 0.0
    %199 = vmatpush2.msra.mxu0 0.0
    %200 = vmatprep.subr.mxu0 0.0
    %201 = vmatpush2.msra.mxu0 0.0
    %202 = vmatprep.mubr.f32.mxu0 0.0
    %203 = vmatmul.mubr.f32.gmra.mxu0 %v55
    %v204 = vpop.f32.mrf.mxu0
    %v205 = vadd.f32 0.0, %v204
    %v206 = vpop.f32.mrf.mxu0
    %207 = vmatprep.mubr.f32.mxu0 0.0
    %208 = vmatmul.mubr.f32.gmra.mxu0 %v58
    %v209 = vpop.f32.mrf.mxu0
    %v210 = vadd.f32 0.0, %v209
    %v211 = vpop.f32.mrf.mxu0
    %212 = vmatprep.mubr.f32.mxu0 0.0
    %213 = vmatmul.mubr.f32.gmra.mxu0 %v61
    %v214 = vpop.f32.mrf.mxu0
    %v215 = vadd.f32 0.0, %v214
    %v216 = vpop.f32.mrf.mxu0
    %217 = vmatprep.mubr.f32.mxu0 0.0
    %218 = vmatmul.mubr.f32.gmra.mxu0 %v64
    %v219 = vpop.f32.mrf.mxu0
    %v220 = vadd.f32 0.0, %v219
    %v221 = vpop.f32.mrf.mxu0
    %222 = vmatprep.mubr.f32.mxu0 0.0
    %223 = vmatmul.mubr.f32.gmra.mxu0 %v67
    %v224 = vpop.f32.mrf.mxu0
    %v225 = vadd.f32 0.0, %v224
    %v226 = vpop.f32.mrf.mxu0
    %227 = vmatprep.mubr.f32.mxu0 0.0
    %228 = vmatmul.mubr.f32.gmra.mxu0 %v70
    %v229 = vpop.f32.mrf.mxu0
    %v230 = vadd.f32 0.0, %v229
    %v231 = vpop.f32.mrf.mxu0
    %232 = vmatprep.mubr.f32.mxu0 0.0
    %233 = vmatmul.mubr.f32.gmra.mxu0 %v73
    %v234 = vpop.f32.mrf.mxu0
    %v235 = vadd.f32 0.0, %v234
    %v236 = vpop.f32.mrf.mxu0
    %237 = vmatprep.mubr.f32.mxu0 0.0
    %238 = vmatmul.mubr.f32.gmra.mxu0 %v76
    %v239 = vpop.f32.mrf.mxu0
    %v240 = vadd.f32 0.0, %v239
    %v241 = vpop.f32.mrf.mxu0
    %242 = vmatprep.mubr.f32.mxu0 0.0
    %243 = vmatmul.mubr.f32.gmra.mxu0 %v79
    %v244 = vpop.f32.mrf.mxu0
    %v245 = vadd.f32 0.0, %v244
    %v246 = vpop.f32.mrf.mxu0
    %247 = vmatprep.mubr.f32.mxu0 0.0
    %248 = vmatmul.mubr.f32.gmra.mxu0 %v82
    %v249 = vpop.f32.mrf.mxu0
    %v250 = vadd.f32 0.0, %v249
    %v251 = vpop.f32.mrf.mxu0
    %252 = vmatprep.mubr.f32.mxu0 0.0
    %253 = vmatmul.mubr.f32.gmra.mxu0 %v85
    %v254 = vpop.f32.mrf.mxu0
    %v255 = vadd.f32 0.0, %v254
    %v256 = vpop.f32.mrf.mxu0
    %257 = vmatprep.mubr.f32.mxu0 0.0
    %258 = vmatmul.mubr.f32.gmra.mxu0 %v88
    %v259 = vpop.f32.mrf.mxu0
    %v260 = vadd.f32 0.0, %v259
    %v261 = vpop.f32.mrf.mxu0
    %262 = vmatprep.mubr.f32.mxu0 0.0
    %263 = vmatmul.mubr.f32.gmra.mxu0 %v91
    %v264 = vpop.f32.mrf.mxu0
    %v265 = vadd.f32 0.0, %v264
    %v266 = vpop.f32.mrf.mxu0
    %267 = vmatprep.mubr.f32.mxu0 0.0
    %268 = vmatmul.mubr.f32.gmra.mxu0 %v94
    %v269 = vpop.f32.mrf.mxu0
    %v270 = vadd.f32 0.0, %v269
    %v271 = vpop.f32.mrf.mxu0
    %272 = vmatprep.mubr.f32.mxu0 0.0
    %273 = vmatmul.mubr.f32.gmra.mxu0 %v97
    %v274 = vpop.f32.mrf.mxu0
    %v275 = vadd.f32 0.0, %v274
    %v276 = vpop.f32.mrf.mxu0
    %277 = vmatprep.mubr.f32.mxu0 0.0
    %278 = vmatmul.mubr.f32.gmra.mxu0 %v100
    %v279 = vpop.f32.mrf.mxu0
    %v280 = vadd.f32 0.0, %v279
    %v281 = vpop.f32.mrf.mxu0
    %282 = vmatprep.mubr.f32.mxu0 0.0
    %283 = vmatmul.mubr.f32.gmra.mxu0 %v103
    %v284 = vpop.f32.mrf.mxu0
    %v285 = vadd.f32 0.0, %v284
    %v286 = vpop.f32.mrf.mxu0
    %287 = vmatprep.mubr.f32.mxu0 0.0
    %288 = vmatmul.mubr.f32.gmra.mxu0 %v106
    %v289 = vpop.f32.mrf.mxu0
    %v290 = vadd.f32 0.0, %v289
    %v291 = vpop.f32.mrf.mxu0
    %292 = vmatprep.mubr.f32.mxu0 0.0
    %293 = vmatmul.mubr.f32.gmra.mxu0 %v109
    %v294 = vpop.f32.mrf.mxu0
    %v295 = vadd.f32 0.0, %v294
    %v296 = vpop.f32.mrf.mxu0
    %297 = vmatprep.mubr.f32.mxu0 0.0
    %298 = vmatmul.mubr.f32.gmra.mxu0 %v112
    %v299 = vpop.f32.mrf.mxu0
    %v300 = vadd.f32 0.0, %v299
    %v301 = vpop.f32.mrf.mxu0
    %302 = vmatprep.mubr.f32.mxu0 0.0
    %303 = vmatmul.mubr.f32.gmra.mxu0 %v115
    %v304 = vpop.f32.mrf.mxu0
    %v305 = vadd.f32 0.0, %v304
    %v306 = vpop.f32.mrf.mxu0
    %307 = vmatprep.mubr.f32.mxu0 0.0
    %308 = vmatmul.mubr.f32.gmra.mxu0 %v118
    %v309 = vpop.f32.mrf.mxu0
    %v310 = vadd.f32 0.0, %v309
    %v311 = vpop.f32.mrf.mxu0
    %312 = vmatprep.mubr.f32.mxu0 0.0
    %313 = vmatmul.mubr.f32.gmra.mxu0 %v121
    %v314 = vpop.f32.mrf.mxu0
    %v315 = vadd.f32 0.0, %v314
    %v316 = vpop.f32.mrf.mxu0
    %317 = vmatprep.mubr.f32.mxu0 0.0
    %318 = vmatmul.mubr.f32.gmra.mxu0 %v124
    %v319 = vpop.f32.mrf.mxu0
    %v320 = vadd.f32 0.0, %v319
    %v321 = vpop.f32.mrf.mxu0
    %322 = vmatprep.mubr.f32.mxu0 0.0
    %323 = vmatmul.mubr.f32.gmra.mxu0 %v127
    %v324 = vpop.f32.mrf.mxu0
    %v325 = vadd.f32 0.0, %v324
    %v326 = vpop.f32.mrf.mxu0
    %327 = vmatprep.mubr.f32.mxu0 0.0
    %328 = vmatmul.mubr.f32.gmra.mxu0 %v130
    %v329 = vpop.f32.mrf.mxu0
    %v330 = vadd.f32 0.0, %v329
    %v331 = vpop.f32.mrf.mxu0
    %332 = vmatprep.mubr.f32.mxu0 0.0
    %333 = vmatmul.mubr.f32.gmra.mxu0 %v133
    %v334 = vpop.f32.mrf.mxu0
    %v335 = vadd.f32 0.0, %v334
    %v336 = vpop.f32.mrf.mxu0
    %337 = vmatprep.mubr.f32.mxu0 0.0
    %338 = vmatmul.mubr.f32.gmra.mxu0 %v136
    %v339 = vpop.f32.mrf.mxu0
    %v340 = vadd.f32 0.0, %v339
    %v341 = vpop.f32.mrf.mxu0
    %342 = vdwg.mxu0
    %vm343 = vcmask 523264
    %344 = vst.msk [vmem:[#allocation2] sm:$0xff] %vm343, %v205
    %345 = vst.msk [vmem:[#allocation2 + $0x8] sm:$0xff] %vm343, %v210
    %346 = vst.msk [vmem:[#allocation2 + $0x10] sm:$0xff] %vm343, %v215
    %347 = vst.msk [vmem:[#allocation2 + $0x18] sm:$0xff] %vm343, %v220
    %348 = vst.msk [vmem:[#allocation2 + $0x20] sm:$0xff] %vm343, %v225
    %349 = vst.msk [vmem:[#allocation2 + $0x28] sm:$0xff] %vm343, %v230
    %350 = vst.msk [vmem:[#allocation2 + $0x30] sm:$0xff] %vm343, %v235
    %351 = vst.msk [vmem:[#allocation2 + $0x38] sm:$0xff] %vm343, %v240
    %352 = vst.msk [vmem:[#allocation2 + $0x40] sm:$0xff] %vm343, %v245
    %353 = vst.msk [vmem:[#allocation2 + $0x48] sm:$0xff] %vm343, %v250
    %354 = vst.msk [vmem:[#allocation2 + $0x50] sm:$0xff] %vm343, %v255
    %355 = vst.msk [vmem:[#allocation2 + $0x58] sm:$0xff] %vm343, %v260
    %356 = vst.msk [vmem:[#allocation2 + $0x60] sm:$0xff] %vm343, %v265
    %357 = vst.msk [vmem:[#allocation2 + $0x68] sm:$0xff] %vm343, %v270
    %358 = vst.msk [vmem:[#allocation2 + $0x70] sm:$0xff] %vm343, %v275
    %359 = vst.msk [vmem:[#allocation2 + $0x78] sm:$0xff] %vm343, %v280
    %360 = vst.msk [vmem:[#allocation2 + $0x80] sm:$0xff] %vm343, %v285
    %361 = vst.msk [vmem:[#allocation2 + $0x88] sm:$0xff] %vm343, %v290
    %362 = vst.msk [vmem:[#allocation2 + $0x90] sm:$0xff] %vm343, %v295
    %363 = vst.msk [vmem:[#allocation2 + $0x98] sm:$0xff] %vm343, %v300
    %364 = vst.msk [vmem:[#allocation2 + $0xa0] sm:$0xff] %vm343, %v305
    %365 = vst.msk [vmem:[#allocation2 + $0xa8] sm:$0xff] %vm343, %v310
    %366 = vst.msk [vmem:[#allocation2 + $0xb0] sm:$0xff] %vm343, %v315
    %367 = vst.msk [vmem:[#allocation2 + $0xb8] sm:$0xff] %vm343, %v320
    %368 = vst.msk [vmem:[#allocation2 + $0xc0] sm:$0xff] %vm343, %v325
    %369 = vst.msk [vmem:[#allocation2 + $0xc8] sm:$0xff] %vm343, %v330
    %370 = vst.msk [vmem:[#allocation2 + $0xd0] sm:$0xff] %vm343, %v335
    %371 = vst.msk [vmem:[#allocation2 + $0xd8] sm:$0xff] %vm343, %v340
    %v372 = vld [vmem:[%s2] sm:$0xff]
    %v373 = vld [vmem:[%s2 + $0x8] sm:$0xff]
    %v374 = vld [vmem:[%s2 + $0x10] sm:$0xff]
    %v375 = vld [vmem:[%s2 + $0x18] sm:$0xff]
    %v376 = vld [vmem:[%s2 + $0x20] sm:$0xff]
    %v377 = vld [vmem:[%s2 + $0x28] sm:$0xff]
    %v378 = vld [vmem:[%s2 + $0x30] sm:$0xff]
    %v379 = vld [vmem:[%s2 + $0x38] sm:$0xff]
    %v380 = vld [vmem:[#allocation2] sm:$0xff]
    %v382 = vsel %vm343, 0.0, 0
    %384 = vmatprep.subr.mxu0 0.0
    %385 = vmatpush1.msra.mxu0 0.0
    %386 = vmatprep.subr.mxu0 0.0
    %387 = vmatpush1.msra.mxu0 0.0
    %388 = vmatprep.subr.mxu0 0.0
    %389 = vmatpush1.msra.mxu0 0.0
    %390 = vmatprep.subr.mxu0 0.0
    %391 = vmatpush1.msra.mxu0 0.0
    %392 = vmatprep.subr.mxu0 0.0
    %393 = vmatpush1.msra.mxu0 0.0
    %394 = vmatprep.subr.mxu0 0.0
    %395 = vmatpush1.msra.mxu0 0.0
    %396 = vmatprep.subr.mxu0 0.0
    %397 = vmatpush1.msra.mxu0 0.0
    %398 = vmatprep.subr.mxu0 0.0
    %399 = vmatpush1.msra.mxu0 0.0
    %400 = vmatprep.subr.mxu0 0.0
    %401 = vmatpush1.msra.mxu0 %v379
    %402 = vmatprep.subr.mxu0 0.0
    %403 = vmatpush1.msra.mxu0 %v378
    %404 = vmatprep.subr.mxu0 0.0
    %405 = vmatpush1.msra.mxu0 %v377
    %406 = vmatprep.subr.mxu0 0.0
    %407 = vmatpush1.msra.mxu0 %v376
    %408 = vmatprep.subr.mxu0 0.0
    %409 = vmatpush1.msra.mxu0 %v375
    %410 = vmatprep.subr.mxu0 0.0
    %411 = vmatpush1.msra.mxu0 %v374
    %412 = vmatprep.subr.mxu0 0.0
    %413 = vmatpush1.msra.mxu0 %v373
    %414 = vmatprep.subr.mxu0 0.0
    %415 = vmatpush1.msra.mxu0 %v372
    %416 = vmatprep.subr.mxu0 0.0
    %417 = vmatpush2.msra.mxu0 0.0
    %418 = vmatprep.subr.mxu0 0.0
    %419 = vmatpush2.msra.mxu0 0.0
    %420 = vmatprep.subr.mxu0 0.0
    %421 = vmatpush2.msra.mxu0 0.0
    %422 = vmatprep.subr.mxu0 0.0
    %423 = vmatpush2.msra.mxu0 0.0
    %424 = vmatprep.subr.mxu0 0.0
    %425 = vmatpush2.msra.mxu0 0.0
    %426 = vmatprep.subr.mxu0 0.0
    %427 = vmatpush2.msra.mxu0 0.0
    %428 = vmatprep.subr.mxu0 0.0
    %429 = vmatpush2.msra.mxu0 0.0
    %430 = vmatprep.subr.mxu0 0.0
    %431 = vmatpush2.msra.mxu0 0.0
    %432 = vmatprep.subr.mxu0 0.0
    %433 = vmatpush2.msra.mxu0 0.0
    %434 = vmatprep.subr.mxu0 0.0
    %435 = vmatpush2.msra.mxu0 0.0
    %436 = vmatprep.subr.mxu0 0.0
    %437 = vmatpush2.msra.mxu0 0.0
    %438 = vmatprep.subr.mxu0 0.0
    %439 = vmatpush2.msra.mxu0 0.0
    %440 = vmatprep.subr.mxu0 0.0
    %441 = vmatpush2.msra.mxu0 0.0
    %442 = vmatprep.subr.mxu0 0.0
    %443 = vmatpush2.msra.mxu0 0.0
    %444 = vmatprep.subr.mxu0 0.0
    %445 = vmatpush2.msra.mxu0 0.0
    %446 = vmatprep.subr.mxu0 0.0
    %447 = vmatpush2.msra.mxu0 0.0
    %448 = vmatprep.mubr.f32.mxu0 0.0
    %449 = vmatmul.mubr.f32.gmra.mxu0 %v382
    %v450 = vpop.f32.mrf.mxu0
    %v451 = vadd.f32 0.0, %v450
    %v452 = vpop.f32.mrf.mxu0
    %453 = vdwg.mxu0
    %v454 = vadd.f32 %v380, %v451
    %v455 = vtanh.pop %v454
    %v456 = vld [vmem:[#allocation2 + $0x8] sm:$0xff]
    %v458 = vsel %vm343, %v455, 0
    %460 = vmatprep.subr.mxu0 0.0
    %461 = vmatpush1.msra.mxu0 0.0
    %462 = vmatprep.subr.mxu0 0.0
    %463 = vmatpush1.msra.mxu0 0.0
    %464 = vmatprep.subr.mxu0 0.0
    %465 = vmatpush1.msra.mxu0 0.0
    %466 = vmatprep.subr.mxu0 0.0
    %467 = vmatpush1.msra.mxu0 0.0
    %468 = vmatprep.subr.mxu0 0.0
    %469 = vmatpush1.msra.mxu0 0.0
    %470 = vmatprep.subr.mxu0 0.0
    %471 = vmatpush1.msra.mxu0 0.0
    %472 = vmatprep.subr.mxu0 0.0
    %473 = vmatpush1.msra.mxu0 0.0
    %474 = vmatprep.subr.mxu0 0.0
    %475 = vmatpush1.msra.mxu0 0.0
    %476 = vmatprep.subr.mxu0 0.0
    %477 = vmatpush1.msra.mxu0 %v379
    %478 = vmatprep.subr.mxu0 0.0
    %479 = vmatpush1.msra.mxu0 %v378
    %480 = vmatprep.subr.mxu0 0.0
    %481 = vmatpush1.msra.mxu0 %v377
    %482 = vmatprep.subr.mxu0 0.0
    %483 = vmatpush1.msra.mxu0 %v376
    %484 = vmatprep.subr.mxu0 0.0
    %485 = vmatpush1.msra.mxu0 %v375
    %486 = vmatprep.subr.mxu0 0.0
    %487 = vmatpush1.msra.mxu0 %v374
    %488 = vmatprep.subr.mxu0 0.0
    %489 = vmatpush1.msra.mxu0 %v373
    %490 = vmatprep.subr.mxu0 0.0
    %491 = vmatpush1.msra.mxu0 %v372
    %492 = vmatprep.subr.mxu0 0.0
    %493 = vmatpush2.msra.mxu0 0.0
    %494 = vmatprep.subr.mxu0 0.0
    %495 = vmatpush2.msra.mxu0 0.0
    %496 = vmatprep.subr.mxu0 0.0
    %497 = vmatpush2.msra.mxu0 0.0
    %498 = vmatprep.subr.mxu0 0.0
    %499 = vmatpush2.msra.mxu0 0.0
    %500 = vmatprep.subr.mxu0 0.0
    %501 = vmatpush2.msra.mxu0 0.0
    %502 = vmatprep.subr.mxu0 0.0
    %503 = vmatpush2.msra.mxu0 0.0
    %504 = vmatprep.subr.mxu0 0.0
    %505 = vmatpush2.msra.mxu0 0.0
    %506 = vmatprep.subr.mxu0 0.0
    %507 = vmatpush2.msra.mxu0 0.0
    %508 = vmatprep.subr.mxu0 0.0
    %509 = vmatpush2.msra.mxu0 0.0
    %510 = vmatprep.subr.mxu0 0.0
    %511 = vmatpush2.msra.mxu0 0.0
    %512 = vmatprep.subr.mxu0 0.0
    %513 = vmatpush2.msra.mxu0 0.0
    %514 = vmatprep.subr.mxu0 0.0
    %515 = vmatpush2.msra.mxu0 0.0
    %516 = vmatprep.subr.mxu0 0.0
    %517 = vmatpush2.msra.mxu0 0.0
    %518 = vmatprep.subr.mxu0 0.0
    %519 = vmatpush2.msra.mxu0 0.0
    %520 = vmatprep.subr.mxu0 0.0
    %521 = vmatpush2.msra.mxu0 0.0
    %522 = vmatprep.subr.mxu0 0.0
    %523 = vmatpush2.msra.mxu0 0.0
    %524 = vmatprep.mubr.f32.mxu0 0.0
    %525 = vmatmul.mubr.f32.gmra.mxu0 %v458
    %v526 = vpop.f32.mrf.mxu0
    %v527 = vadd.f32 0.0, %v526
    %v528 = vpop.f32.mrf.mxu0
    %529 = vdwg.mxu0
    %v530 = vadd.f32 %v456, %v527
    %v531 = vtanh.pop %v530
    %533 = vrot.lane.b32.xlu0 %v531, 96
    %v534 = vpop.permute.xlu0 %533
    %536 = vst.msk [vmem:[#allocation3] sm:$0xff] %vm53, %v534
    %v537 = vld [vmem:[#allocation2 + $0x10] sm:$0xff]
    %v538 = vsel %vm343, %v531, 0
    %540 = vmatprep.subr.mxu0 0.0
    %541 = vmatpush1.msra.mxu0 0.0
    %542 = vmatprep.subr.mxu0 0.0
    %543 = vmatpush1.msra.mxu0 0.0
    %544 = vmatprep.subr.mxu0 0.0
    %545 = vmatpush1.msra.mxu0 0.0
    %546 = vmatprep.subr.mxu0 0.0
    %547 = vmatpush1.msra.mxu0 0.0
    %548 = vmatprep.subr.mxu0 0.0
    %549 = vmatpush1.msra.mxu0 0.0
    %550 = vmatprep.subr.mxu0 0.0
    %551 = vmatpush1.msra.mxu0 0.0
    %552 = vmatprep.subr.mxu0 0.0
    %553 = vmatpush1.msra.mxu0 0.0
    %554 = vmatprep.subr.mxu0 0.0
    %555 = vmatpush1.msra.mxu0 0.0
    %556 = vmatprep.subr.mxu0 0.0
    %557 = vmatpush1.msra.mxu0 %v379
    %558 = vmatprep.subr.mxu0 0.0
    %559 = vmatpush1.msra.mxu0 %v378
    %560 = vmatprep.subr.mxu0 0.0
    %561 = vmatpush1.msra.mxu0 %v377
    %562 = vmatprep.subr.mxu0 0.0
    %563 = vmatpush1.msra.mxu0 %v376
    %564 = vmatprep.subr.mxu0 0.0
    %565 = vmatpush1.msra.mxu0 %v375
    %566 = vmatprep.subr.mxu0 0.0
    %567 = vmatpush1.msra.mxu0 %v374
    %568 = vmatprep.subr.mxu0 0.0
    %569 = vmatpush1.msra.mxu0 %v373
    %570 = vmatprep.subr.mxu0 0.0
    %571 = vmatpush1.msra.mxu0 %v372
    %572 = vmatprep.subr.mxu0 0.0
    %573 = vmatpush2.msra.mxu0 0.0
    %574 = vmatprep.subr.mxu0 0.0
    %575 = vmatpush2.msra.mxu0 0.0
    %576 = vmatprep.subr.mxu0 0.0
    %577 = vmatpush2.msra.mxu0 0.0
    %578 = vmatprep.subr.mxu0 0.0
    %579 = vmatpush2.msra.mxu0 0.0
    %580 = vmatprep.subr.mxu0 0.0
    %581 = vmatpush2.msra.mxu0 0.0
    %582 = vmatprep.subr.mxu0 0.0
    %583 = vmatpush2.msra.mxu0 0.0
    %584 = vmatprep.subr.mxu0 0.0
    %585 = vmatpush2.msra.mxu0 0.0
    %586 = vmatprep.subr.mxu0 0.0
    %587 = vmatpush2.msra.mxu0 0.0
    %588 = vmatprep.subr.mxu0 0.0
    %589 = vmatpush2.msra.mxu0 0.0
    %590 = vmatprep.subr.mxu0 0.0
    %591 = vmatpush2.msra.mxu0 0.0
    %592 = vmatprep.subr.mxu0 0.0
    %593 = vmatpush2.msra.mxu0 0.0
    %594 = vmatprep.subr.mxu0 0.0
    %595 = vmatpush2.msra.mxu0 0.0
    %596 = vmatprep.subr.mxu0 0.0
    %597 = vmatpush2.msra.mxu0 0.0
    %598 = vmatprep.subr.mxu0 0.0
    %599 = vmatpush2.msra.mxu0 0.0
    %600 = vmatprep.subr.mxu0 0.0
    %601 = vmatpush2.msra.mxu0 0.0
    %602 = vmatprep.subr.mxu0 0.0
    %603 = vmatpush2.msra.mxu0 0.0
    %604 = vmatprep.mubr.f32.mxu0 0.0
    %605 = vmatmul.mubr.f32.gmra.mxu0 %v538
    %v606 = vpop.f32.mrf.mxu0
    %v607 = vadd.f32 0.0, %v606
    %v608 = vpop.f32.mrf.mxu0
    %609 = vdwg.mxu0
    %v610 = vadd.f32 %v537, %v607
    %v611 = vtanh.pop %v610
    %vm612 = vcmask 523520
    %613 = vst.msk [vmem:[#allocation3] sm:$0xff] %vm612, %v611
    %v614 = vld [vmem:[#allocation2 + $0x18] sm:$0xff]
    %v616 = vsel %vm343, %v611, 0
    %618 = vmatprep.subr.mxu0 0.0
    %619 = vmatpush1.msra.mxu0 0.0
    %620 = vmatprep.subr.mxu0 0.0
    %621 = vmatpush1.msra.mxu0 0.0
    %622 = vmatprep.subr.mxu0 0.0
    %623 = vmatpush1.msra.mxu0 0.0
    %624 = vmatprep.subr.mxu0 0.0
    %625 = vmatpush1.msra.mxu0 0.0
    %626 = vmatprep.subr.mxu0 0.0
    %627 = vmatpush1.msra.mxu0 0.0
    %628 = vmatprep.subr.mxu0 0.0
    %629 = vmatpush1.msra.mxu0 0.0
    %630 = vmatprep.subr.mxu0 0.0
    %631 = vmatpush1.msra.mxu0 0.0
    %632 = vmatprep.subr.mxu0 0.0
    %633 = vmatpush1.msra.mxu0 0.0
    %634 = vmatprep.subr.mxu0 0.0
    %635 = vmatpush1.msra.mxu0 %v379
    %636 = vmatprep.subr.mxu0 0.0
    %637 = vmatpush1.msra.mxu0 %v378
    %638 = vmatprep.subr.mxu0 0.0
    %639 = vmatpush1.msra.mxu0 %v377
    %640 = vmatprep.subr.mxu0 0.0
    %641 = vmatpush1.msra.mxu0 %v376
    %642 = vmatprep.subr.mxu0 0.0
    %643 = vmatpush1.msra.mxu0 %v375
    %644 = vmatprep.subr.mxu0 0.0
    %645 = vmatpush1.msra.mxu0 %v374
    %646 = vmatprep.subr.mxu0 0.0
    %647 = vmatpush1.msra.mxu0 %v373
    %648 = vmatprep.subr.mxu0 0.0
    %649 = vmatpush1.msra.mxu0 %v372
    %650 = vmatprep.subr.mxu0 0.0
    %651 = vmatpush2.msra.mxu0 0.0
    %652 = vmatprep.subr.mxu0 0.0
    %653 = vmatpush2.msra.mxu0 0.0
    %654 = vmatprep.subr.mxu0 0.0
    %655 = vmatpush2.msra.mxu0 0.0
    %656 = vmatprep.subr.mxu0 0.0
    %657 = vmatpush2.msra.mxu0 0.0
    %658 = vmatprep.subr.mxu0 0.0
    %659 = vmatpush2.msra.mxu0 0.0
    %660 = vmatprep.subr.mxu0 0.0
    %661 = vmatpush2.msra.mxu0 0.0
    %662 = vmatprep.subr.mxu0 0.0
    %663 = vmatpush2.msra.mxu0 0.0
    %664 = vmatprep.subr.mxu0 0.0
    %665 = vmatpush2.msra.mxu0 0.0
    %666 = vmatprep.subr.mxu0 0.0
    %667 = vmatpush2.msra.mxu0 0.0
    %668 = vmatprep.subr.mxu0 0.0
    %669 = vmatpush2.msra.mxu0 0.0
    %670 = vmatprep.subr.mxu0 0.0
    %671 = vmatpush2.msra.mxu0 0.0
    %672 = vmatprep.subr.mxu0 0.0
    %673 = vmatpush2.msra.mxu0 0.0
    %674 = vmatprep.subr.mxu0 0.0
    %675 = vmatpush2.msra.mxu0 0.0
    %676 = vmatprep.subr.mxu0 0.0
    %677 = vmatpush2.msra.mxu0 0.0
    %678 = vmatprep.subr.mxu0 0.0
    %679 = vmatpush2.msra.mxu0 0.0
    %680 = vmatprep.subr.mxu0 0.0
    %681 = vmatpush2.msra.mxu0 0.0
    %682 = vmatprep.mubr.f32.mxu0 0.0
    %683 = vmatmul.mubr.f32.gmra.mxu0 %v616
    %v684 = vpop.f32.mrf.mxu0
    %v685 = vadd.f32 0.0, %v684
    %v686 = vpop.f32.mrf.mxu0
    %687 = vdwg.mxu0
    %v688 = vadd.f32 %v614, %v685
    %v689 = vtanh.pop %v688
    %691 = vrot.lane.b32.xlu0 %v689, 32
    %v692 = vpop.permute.xlu0 %691
    %vm694 = vcmask 785920
    %695 = vst.msk [vmem:[#allocation3] sm:$0xff] %vm694, %v692
    %v696 = vld [vmem:[#allocation2 + $0x20] sm:$0xff]
    %v697 = vsel %vm343, %v689, 0
    %699 = vmatprep.subr.mxu0 0.0
    %700 = vmatpush1.msra.mxu0 0.0
    %701 = vmatprep.subr.mxu0 0.0
    %702 = vmatpush1.msra.mxu0 0.0
    %703 = vmatprep.subr.mxu0 0.0
    %704 = vmatpush1.msra.mxu0 0.0
    %705 = vmatprep.subr.mxu0 0.0
    %706 = vmatpush1.msra.mxu0 0.0
    %707 = vmatprep.subr.mxu0 0.0
    %708 = vmatpush1.msra.mxu0 0.0
    %709 = vmatprep.subr.mxu0 0.0
    %710 = vmatpush1.msra.mxu0 0.0
    %711 = vmatprep.subr.mxu0 0.0
    %712 = vmatpush1.msra.mxu0 0.0
    %713 = vmatprep.subr.mxu0 0.0
    %714 = vmatpush1.msra.mxu0 0.0
    %715 = vmatprep.subr.mxu0 0.0
    %716 = vmatpush1.msra.mxu0 %v379
    %717 = vmatprep.subr.mxu0 0.0
    %718 = vmatpush1.msra.mxu0 %v378
    %719 = vmatprep.subr.mxu0 0.0
    %720 = vmatpush1.msra.mxu0 %v377
    %721 = vmatprep.subr.mxu0 0.0
    %722 = vmatpush1.msra.mxu0 %v376
    %723 = vmatprep.subr.mxu0 0.0
    %724 = vmatpush1.msra.mxu0 %v375
    %725 = vmatprep.subr.mxu0 0.0
    %726 = vmatpush1.msra.mxu0 %v374
    %727 = vmatprep.subr.mxu0 0.0
    %728 = vmatpush1.msra.mxu0 %v373
    %729 = vmatprep.subr.mxu0 0.0
    %730 = vmatpush1.msra.mxu0 %v372
    %731 = vmatprep.subr.mxu0 0.0
    %732 = vmatpush2.msra.mxu0 0.0
    %733 = vmatprep.subr.mxu0 0.0
    %734 = vmatpush2.msra.mxu0 0.0
    %735 = vmatprep.subr.mxu0 0.0
    %736 = vmatpush2.msra.mxu0 0.0
    %737 = vmatprep.subr.mxu0 0.0
    %738 = vmatpush2.msra.mxu0 0.0
    %739 = vmatprep.subr.mxu0 0.0
    %740 = vmatpush2.msra.mxu0 0.0
    %741 = vmatprep.subr.mxu0 0.0
    %742 = vmatpush2.msra.mxu0 0.0
    %743 = vmatprep.subr.mxu0 0.0
    %744 = vmatpush2.msra.mxu0 0.0
    %745 = vmatprep.subr.mxu0 0.0
    %746 = vmatpush2.msra.mxu0 0.0
    %747 = vmatprep.subr.mxu0 0.0
    %748 = vmatpush2.msra.mxu0 0.0
    %749 = vmatprep.subr.mxu0 0.0
    %750 = vmatpush2.msra.mxu0 0.0
    %751 = vmatprep.subr.mxu0 0.0
    %752 = vmatpush2.msra.mxu0 0.0
    %753 = vmatprep.subr.mxu0 0.0
    %754 = vmatpush2.msra.mxu0 0.0
    %755 = vmatprep.subr.mxu0 0.0
    %756 = vmatpush2.msra.mxu0 0.0
    %757 = vmatprep.subr.mxu0 0.0
    %758 = vmatpush2.msra.mxu0 0.0
    %759 = vmatprep.subr.mxu0 0.0
    %760 = vmatpush2.msra.mxu0 0.0
    %761 = vmatprep.subr.mxu0 0.0
    %762 = vmatpush2.msra.mxu0 0.0
    %763 = vmatprep.mubr.f32.mxu0 0.0
    %764 = vmatmul.mubr.f32.gmra.mxu0 %v697
    %v765 = vpop.f32.mrf.mxu0
    %v766 = vadd.f32 0.0, %v765
    %v767 = vpop.f32.mrf.mxu0
    %768 = vdwg.mxu0
    %v769 = vadd.f32 %v696, %v766
    %v770 = vtanh.pop %v769
    %772 = vrot.lane.b32.xlu0 %v770, 64
    %v773 = vpop.permute.xlu0 %772
    %vm775 = vcmask 1048320
    %776 = vst.msk [vmem:[#allocation3] sm:$0xff] %vm775, %v773
    %v777 = vld [vmem:[#allocation2 + $0x28] sm:$0xff]
    %v778 = vsel %vm343, %v770, 0
    %780 = vmatprep.subr.mxu0 0.0
    %781 = vmatpush1.msra.mxu0 0.0
    %782 = vmatprep.subr.mxu0 0.0
    %783 = vmatpush1.msra.mxu0 0.0
    %784 = vmatprep.subr.mxu0 0.0
    %785 = vmatpush1.msra.mxu0 0.0
    %786 = vmatprep.subr.mxu0 0.0
    %787 = vmatpush1.msra.mxu0 0.0
    %788 = vmatprep.subr.mxu0 0.0
    %789 = vmatpush1.msra.mxu0 0.0
    %790 = vmatprep.subr.mxu0 0.0
    %791 = vmatpush1.msra.mxu0 0.0
    %792 = vmatprep.subr.mxu0 0.0
    %793 = vmatpush1.msra.mxu0 0.0
    %794 = vmatprep.subr.mxu0 0.0
    %795 = vmatpush1.msra.mxu0 0.0
    %796 = vmatprep.subr.mxu0 0.0
    %797 = vmatpush1.msra.mxu0 %v379
    %798 = vmatprep.subr.mxu0 0.0
    %799 = vmatpush1.msra.mxu0 %v378
    %800 = vmatprep.subr.mxu0 0.0
    %801 = vmatpush1.msra.mxu0 %v377
    %802 = vmatprep.subr.mxu0 0.0
    %803 = vmatpush1.msra.mxu0 %v376
    %804 = vmatprep.subr.mxu0 0.0
    %805 = vmatpush1.msra.mxu0 %v375
    %806 = vmatprep.subr.mxu0 0.0
    %807 = vmatpush1.msra.mxu0 %v374
    %808 = vmatprep.subr.mxu0 0.0
    %809 = vmatpush1.msra.mxu0 %v373
    %810 = vmatprep.subr.mxu0 0.0
    %811 = vmatpush1.msra.mxu0 %v372
    %812 = vmatprep.subr.mxu0 0.0
    %813 = vmatpush2.msra.mxu0 0.0
    %814 = vmatprep.subr.mxu0 0.0
    %815 = vmatpush2.msra.mxu0 0.0
    %816 = vmatprep.subr.mxu0 0.0
    %817 = vmatpush2.msra.mxu0 0.0
    %818 = vmatprep.subr.mxu0 0.0
    %819 = vmatpush2.msra.mxu0 0.0
    %820 = vmatprep.subr.mxu0 0.0
    %821 = vmatpush2.msra.mxu0 0.0
    %822 = vmatprep.subr.mxu0 0.0
    %823 = vmatpush2.msra.mxu0 0.0
    %824 = vmatprep.subr.mxu0 0.0
    %825 = vmatpush2.msra.mxu0 0.0
    %826 = vmatprep.subr.mxu0 0.0
    %827 = vmatpush2.msra.mxu0 0.0
    %828 = vmatprep.subr.mxu0 0.0
    %829 = vmatpush2.msra.mxu0 0.0
    %830 = vmatprep.subr.mxu0 0.0
    %831 = vmatpush2.msra.mxu0 0.0
    %832 = vmatprep.subr.mxu0 0.0
    %833 = vmatpush2.msra.mxu0 0.0
    %834 = vmatprep.subr.mxu0 0.0
    %835 = vmatpush2.msra.mxu0 0.0
    %836 = vmatprep.subr.mxu0 0.0
    %837 = vmatpush2.msra.mxu0 0.0
    %838 = vmatprep.subr.mxu0 0.0
    %839 = vmatpush2.msra.mxu0 0.0
    %840 = vmatprep.subr.mxu0 0.0
    %841 = vmatpush2.msra.mxu0 0.0
    %842 = vmatprep.subr.mxu0 0.0
    %843 = vmatpush2.msra.mxu0 0.0
    %844 = vmatprep.mubr.f32.mxu0 0.0
    %845 = vmatmul.mubr.f32.gmra.mxu0 %v778
    %v846 = vpop.f32.mrf.mxu0
    %v847 = vadd.f32 0.0, %v846
    %v848 = vpop.f32.mrf.mxu0
    %849 = vdwg.mxu0
    %v850 = vadd.f32 %v777, %v847
    %v851 = vtanh.pop %v850
    %853 = vrot.lane.b32.xlu0 %v851, 96
    %v854 = vpop.permute.xlu0 %853
    %856 = vst.msk [vmem:[#allocation3 + $0x8] sm:$0xff] %vm53, %v854
    %v857 = vld [vmem:[#allocation2 + $0x30] sm:$0xff]
    %v858 = vsel %vm343, %v851, 0
    %860 = vmatprep.subr.mxu0 0.0
    %861 = vmatpush1.msra.mxu0 0.0
    %862 = vmatprep.subr.mxu0 0.0
    %863 = vmatpush1.msra.mxu0 0.0
    %864 = vmatprep.subr.mxu0 0.0
    %865 = vmatpush1.msra.mxu0 0.0
    %866 = vmatprep.subr.mxu0 0.0
    %867 = vmatpush1.msra.mxu0 0.0
    %868 = vmatprep.subr.mxu0 0.0
    %869 = vmatpush1.msra.mxu0 0.0
    %870 = vmatprep.subr.mxu0 0.0
    %871 = vmatpush1.msra.mxu0 0.0
    %872 = vmatprep.subr.mxu0 0.0
    %873 = vmatpush1.msra.mxu0 0.0
    %874 = vmatprep.subr.mxu0 0.0
    %875 = vmatpush1.msra.mxu0 0.0
    %876 = vmatprep.subr.mxu0 0.0
    %877 = vmatpush1.msra.mxu0 %v379
    %878 = vmatprep.subr.mxu0 0.0
    %879 = vmatpush1.msra.mxu0 %v378
    %880 = vmatprep.subr.mxu0 0.0
    %881 = vmatpush1.msra.mxu0 %v377
    %882 = vmatprep.subr.mxu0 0.0
    %883 = vmatpush1.msra.mxu0 %v376
    %884 = vmatprep.subr.mxu0 0.0
    %885 = vmatpush1.msra.mxu0 %v375
    %886 = vmatprep.subr.mxu0 0.0
    %887 = vmatpush1.msra.mxu0 %v374
    %888 = vmatprep.subr.mxu0 0.0
    %889 = vmatpush1.msra.mxu0 %v373
    %890 = vmatprep.subr.mxu0 0.0
    %891 = vmatpush1.msra.mxu0 %v372
    %892 = vmatprep.subr.mxu0 0.0
    %893 = vmatpush2.msra.mxu0 0.0
    %894 = vmatprep.subr.mxu0 0.0
    %895 = vmatpush2.msra.mxu0 0.0
    %896 = vmatprep.subr.mxu0 0.0
    %897 = vmatpush2.msra.mxu0 0.0
    %898 = vmatprep.subr.mxu0 0.0
    %899 = vmatpush2.msra.mxu0 0.0
    %900 = vmatprep.subr.mxu0 0.0
    %901 = vmatpush2.msra.mxu0 0.0
    %902 = vmatprep.subr.mxu0 0.0
    %903 = vmatpush2.msra.mxu0 0.0
    %904 = vmatprep.subr.mxu0 0.0
    %905 = vmatpush2.msra.mxu0 0.0
    %906 = vmatprep.subr.mxu0 0.0
    %907 = vmatpush2.msra.mxu0 0.0
    %908 = vmatprep.subr.mxu0 0.0
    %909 = vmatpush2.msra.mxu0 0.0
    %910 = vmatprep.subr.mxu0 0.0
    %911 = vmatpush2.msra.mxu0 0.0
    %912 = vmatprep.subr.mxu0 0.0
    %913 = vmatpush2.msra.mxu0 0.0
    %914 = vmatprep.subr.mxu0 0.0
    %915 = vmatpush2.msra.mxu0 0.0
    %916 = vmatprep.subr.mxu0 0.0
    %917 = vmatpush2.msra.mxu0 0.0
    %918 = vmatprep.subr.mxu0 0.0
    %919 = vmatpush2.msra.mxu0 0.0
    %920 = vmatprep.subr.mxu0 0.0
    %921 = vmatpush2.msra.mxu0 0.0
    %922 = vmatprep.subr.mxu0 0.0
    %923 = vmatpush2.msra.mxu0 0.0
    %924 = vmatprep.mubr.f32.mxu0 0.0
    %925 = vmatmul.mubr.f32.gmra.mxu0 %v858
    %v926 = vpop.f32.mrf.mxu0
    %v927 = vadd.f32 0.0, %v926
    %v928 = vpop.f32.mrf.mxu0
    %929 = vdwg.mxu0
    %v930 = vadd.f32 %v857, %v927
    %v931 = vtanh.pop %v930
    %932 = vst.msk [vmem:[#allocation3 + $0x8] sm:$0xff] %vm612, %v931
    %v933 = vld [vmem:[#allocation2 + $0x38] sm:$0xff]
    %v935 = vsel %vm343, %v931, 0
    %937 = vmatprep.subr.mxu0 0.0
    %938 = vmatpush1.msra.mxu0 0.0
    %939 = vmatprep.subr.mxu0 0.0
    %940 = vmatpush1.msra.mxu0 0.0
    %941 = vmatprep.subr.mxu0 0.0
    %942 = vmatpush1.msra.mxu0 0.0
    %943 = vmatprep.subr.mxu0 0.0
    %944 = vmatpush1.msra.mxu0 0.0
    %945 = vmatprep.subr.mxu0 0.0
    %946 = vmatpush1.msra.mxu0 0.0
    %947 = vmatprep.subr.mxu0 0.0
    %948 = vmatpush1.msra.mxu0 0.0
    %949 = vmatprep.subr.mxu0 0.0
    %950 = vmatpush1.msra.mxu0 0.0
    %951 = vmatprep.subr.mxu0 0.0
    %952 = vmatpush1.msra.mxu0 0.0
    %953 = vmatprep.subr.mxu0 0.0
    %954 = vmatpush1.msra.mxu0 %v379
    %955 = vmatprep.subr.mxu0 0.0
    %956 = vmatpush1.msra.mxu0 %v378
    %957 = vmatprep.subr.mxu0 0.0
    %958 = vmatpush1.msra.mxu0 %v377
    %959 = vmatprep.subr.mxu0 0.0
    %960 = vmatpush1.msra.mxu0 %v376
    %961 = vmatprep.subr.mxu0 0.0
    %962 = vmatpush1.msra.mxu0 %v375
    %963 = vmatprep.subr.mxu0 0.0
    %964 = vmatpush1.msra.mxu0 %v374
    %965 = vmatprep.subr.mxu0 0.0
    %966 = vmatpush1.msra.mxu0 %v373
    %967 = vmatprep.subr.mxu0 0.0
    %968 = vmatpush1.msra.mxu0 %v372
    %969 = vmatprep.subr.mxu0 0.0
    %970 = vmatpush2.msra.mxu0 0.0
    %971 = vmatprep.subr.mxu0 0.0
    %972 = vmatpush2.msra.mxu0 0.0
    %973 = vmatprep.subr.mxu0 0.0
    %974 = vmatpush2.msra.mxu0 0.0
    %975 = vmatprep.subr.mxu0 0.0
    %976 = vmatpush2.msra.mxu0 0.0
    %977 = vmatprep.subr.mxu0 0.0
    %978 = vmatpush2.msra.mxu0 0.0
    %979 = vmatprep.subr.mxu0 0.0
    %980 = vmatpush2.msra.mxu0 0.0
    %981 = vmatprep.subr.mxu0 0.0
    %982 = vmatpush2.msra.mxu0 0.0
    %983 = vmatprep.subr.mxu0 0.0
    %984 = vmatpush2.msra.mxu0 0.0
    %985 = vmatprep.subr.mxu0 0.0
    %986 = vmatpush2.msra.mxu0 0.0
    %987 = vmatprep.subr.mxu0 0.0
    %988 = vmatpush2.msra.mxu0 0.0
    %989 = vmatprep.subr.mxu0 0.0
    %990 = vmatpush2.msra.mxu0 0.0
    %991 = vmatprep.subr.mxu0 0.0
    %992 = vmatpush2.msra.mxu0 0.0
    %993 = vmatprep.subr.mxu0 0.0
    %994 = vmatpush2.msra.mxu0 0.0
    %995 = vmatprep.subr.mxu0 0.0
    %996 = vmatpush2.msra.mxu0 0.0
    %997 = vmatprep.subr.mxu0 0.0
    %998 = vmatpush2.msra.mxu0 0.0
    %999 = vmatprep.subr.mxu0 0.0
    %1000 = vmatpush2.msra.mxu0 0.0
    %1001 = vmatprep.mubr.f32.mxu0 0.0
    %1002 = vmatmul.mubr.f32.gmra.mxu0 %v935
    %v1003 = vpop.f32.mrf.mxu0
    %v1004 = vadd.f32 0.0, %v1003
    %v1005 = vpop.f32.mrf.mxu0
    %1006 = vdwg.mxu0
    %v1007 = vadd.f32 %v933, %v1004
    %v1008 = vtanh.pop %v1007
    %1010 = vrot.lane.b32.xlu0 %v1008, 32
    %v1011 = vpop.permute.xlu0 %1010
    %1013 = vst.msk [vmem:[#allocation3 + $0x8] sm:$0xff] %vm694, %v1011
    %v1014 = vld [vmem:[#allocation2 + $0x40] sm:$0xff]
    %v1015 = vsel %vm343, %v1008, 0
    %1017 = vmatprep.subr.mxu0 0.0
    %1018 = vmatpush1.msra.mxu0 0.0
    %1019 = vmatprep.subr.mxu0 0.0
    %1020 = vmatpush1.msra.mxu0 0.0
    %1021 = vmatprep.subr.mxu0 0.0
    %1022 = vmatpush1.msra.mxu0 0.0
    %1023 = vmatprep.subr.mxu0 0.0
    %1024 = vmatpush1.msra.mxu0 0.0
    %1025 = vmatprep.subr.mxu0 0.0
    %1026 = vmatpush1.msra.mxu0 0.0
    %1027 = vmatprep.subr.mxu0 0.0
    %1028 = vmatpush1.msra.mxu0 0.0
    %1029 = vmatprep.subr.mxu0 0.0
    %1030 = vmatpush1.msra.mxu0 0.0
    %1031 = vmatprep.subr.mxu0 0.0
    %1032 = vmatpush1.msra.mxu0 0.0
    %1033 = vmatprep.subr.mxu0 0.0
    %1034 = vmatpush1.msra.mxu0 %v379
    %1035 = vmatprep.subr.mxu0 0.0
    %1036 = vmatpush1.msra.mxu0 %v378
    %1037 = vmatprep.subr.mxu0 0.0
    %1038 = vmatpush1.msra.mxu0 %v377
    %1039 = vmatprep.subr.mxu0 0.0
    %1040 = vmatpush1.msra.mxu0 %v376
    %1041 = vmatprep.subr.mxu0 0.0
    %1042 = vmatpush1.msra.mxu0 %v375
    %1043 = vmatprep.subr.mxu0 0.0
    %1044 = vmatpush1.msra.mxu0 %v374
    %1045 = vmatprep.subr.mxu0 0.0
    %1046 = vmatpush1.msra.mxu0 %v373
    %1047 = vmatprep.subr.mxu0 0.0
    %1048 = vmatpush1.msra.mxu0 %v372
    %1049 = vmatprep.subr.mxu0 0.0
    %1050 = vmatpush2.msra.mxu0 0.0
    %1051 = vmatprep.subr.mxu0 0.0
    %1052 = vmatpush2.msra.mxu0 0.0
    %1053 = vmatprep.subr.mxu0 0.0
    %1054 = vmatpush2.msra.mxu0 0.0
    %1055 = vmatprep.subr.mxu0 0.0
    %1056 = vmatpush2.msra.mxu0 0.0
    %1057 = vmatprep.subr.mxu0 0.0
    %1058 = vmatpush2.msra.mxu0 0.0
    %1059 = vmatprep.subr.mxu0 0.0
    %1060 = vmatpush2.msra.mxu0 0.0
    %1061 = vmatprep.subr.mxu0 0.0
    %1062 = vmatpush2.msra.mxu0 0.0
    %1063 = vmatprep.subr.mxu0 0.0
    %1064 = vmatpush2.msra.mxu0 0.0
    %1065 = vmatprep.subr.mxu0 0.0
    %1066 = vmatpush2.msra.mxu0 0.0
    %1067 = vmatprep.subr.mxu0 0.0
    %1068 = vmatpush2.msra.mxu0 0.0
    %1069 = vmatprep.subr.mxu0 0.0
    %1070 = vmatpush2.msra.mxu0 0.0
    %1071 = vmatprep.subr.mxu0 0.0
    %1072 = vmatpush2.msra.mxu0 0.0
    %1073 = vmatprep.subr.mxu0 0.0
    %1074 = vmatpush2.msra.mxu0 0.0
    %1075 = vmatprep.subr.mxu0 0.0
    %1076 = vmatpush2.msra.mxu0 0.0
    %1077 = vmatprep.subr.mxu0 0.0
    %1078 = vmatpush2.msra.mxu0 0.0
    %1079 = vmatprep.subr.mxu0 0.0
    %1080 = vmatpush2.msra.mxu0 0.0
    %1081 = vmatprep.mubr.f32.mxu0 0.0
    %1082 = vmatmul.mubr.f32.gmra.mxu0 %v1015
    %v1083 = vpop.f32.mrf.mxu0
    %v1084 = vadd.f32 0.0, %v1083
    %v1085 = vpop.f32.mrf.mxu0
    %1086 = vdwg.mxu0
    %v1087 = vadd.f32 %v1014, %v1084
    %v1088 = vtanh.pop %v1087
    %1090 = vrot.lane.b32.xlu0 %v1088, 64
    %v1091 = vpop.permute.xlu0 %1090
    %1093 = vst.msk [vmem:[#allocation3 + $0x8] sm:$0xff] %vm775, %v1091
    %v1094 = vld [vmem:[#allocation2 + $0x48] sm:$0xff]
    %v1095 = vsel %vm343, %v1088, 0
    %1097 = vmatprep.subr.mxu0 0.0
    %1098 = vmatpush1.msra.mxu0 0.0
    %1099 = vmatprep.subr.mxu0 0.0
    %1100 = vmatpush1.msra.mxu0 0.0
    %1101 = vmatprep.subr.mxu0 0.0
    %1102 = vmatpush1.msra.mxu0 0.0
    %1103 = vmatprep.subr.mxu0 0.0
    %1104 = vmatpush1.msra.mxu0 0.0
    %1105 = vmatprep.subr.mxu0 0.0
    %1106 = vmatpush1.msra.mxu0 0.0
    %1107 = vmatprep.subr.mxu0 0.0
    %1108 = vmatpush1.msra.mxu0 0.0
    %1109 = vmatprep.subr.mxu0 0.0
    %1110 = vmatpush1.msra.mxu0 0.0
    %1111 = vmatprep.subr.mxu0 0.0
    %1112 = vmatpush1.msra.mxu0 0.0
    %1113 = vmatprep.subr.mxu0 0.0
    %1114 = vmatpush1.msra.mxu0 %v379
    %1115 = vmatprep.subr.mxu0 0.0
    %1116 = vmatpush1.msra.mxu0 %v378
    %1117 = vmatprep.subr.mxu0 0.0
    %1118 = vmatpush1.msra.mxu0 %v377
    %1119 = vmatprep.subr.mxu0 0.0
    %1120 = vmatpush1.msra.mxu0 %v376
    %1121 = vmatprep.subr.mxu0 0.0
    %1122 = vmatpush1.msra.mxu0 %v375
    %1123 = vmatprep.subr.mxu0 0.0
    %1124 = vmatpush1.msra.mxu0 %v374
    %1125 = vmatprep.subr.mxu0 0.0
    %1126 = vmatpush1.msra.mxu0 %v373
    %1127 = vmatprep.subr.mxu0 0.0
    %1128 = vmatpush1.msra.mxu0 %v372
    %1129 = vmatprep.subr.mxu0 0.0
    %1130 = vmatpush2.msra.mxu0 0.0
    %1131 = vmatprep.subr.mxu0 0.0
    %1132 = vmatpush2.msra.mxu0 0.0
    %1133 = vmatprep.subr.mxu0 0.0
    %1134 = vmatpush2.msra.mxu0 0.0
    %1135 = vmatprep.subr.mxu0 0.0
    %1136 = vmatpush2.msra.mxu0 0.0
    %1137 = vmatprep.subr.mxu0 0.0
    %1138 = vmatpush2.msra.mxu0 0.0
    %1139 = vmatprep.subr.mxu0 0.0
    %1140 = vmatpush2.msra.mxu0 0.0
    %1141 = vmatprep.subr.mxu0 0.0
    %1142 = vmatpush2.msra.mxu0 0.0
    %1143 = vmatprep.subr.mxu0 0.0
    %1144 = vmatpush2.msra.mxu0 0.0
    %1145 = vmatprep.subr.mxu0 0.0
    %1146 = vmatpush2.msra.mxu0 0.0
    %1147 = vmatprep.subr.mxu0 0.0
    %1148 = vmatpush2.msra.mxu0 0.0
    %1149 = vmatprep.subr.mxu0 0.0
    %1150 = vmatpush2.msra.mxu0 0.0
    %1151 = vmatprep.subr.mxu0 0.0
    %1152 = vmatpush2.msra.mxu0 0.0
    %1153 = vmatprep.subr.mxu0 0.0
    %1154 = vmatpush2.msra.mxu0 0.0
    %1155 = vmatprep.subr.mxu0 0.0
    %1156 = vmatpush2.msra.mxu0 0.0
    %1157 = vmatprep.subr.mxu0 0.0
    %1158 = vmatpush2.msra.mxu0 0.0
    %1159 = vmatprep.subr.mxu0 0.0
    %1160 = vmatpush2.msra.mxu0 0.0
    %1161 = vmatprep.mubr.f32.mxu0 0.0
    %1162 = vmatmul.mubr.f32.gmra.mxu0 %v1095
    %v1163 = vpop.f32.mrf.mxu0
    %v1164 = vadd.f32 0.0, %v1163
    %v1165 = vpop.f32.mrf.mxu0
    %1166 = vdwg.mxu0
    %v1167 = vadd.f32 %v1094, %v1164
    %v1168 = vtanh.pop %v1167
    %1170 = vrot.lane.b32.xlu0 %v1168, 96
    %v1171 = vpop.permute.xlu0 %1170
    %1173 = vst.msk [vmem:[#allocation3 + $0x10] sm:$0xff] %vm53, %v1171
    %v1174 = vld [vmem:[#allocation2 + $0x50] sm:$0xff]
    %v1175 = vsel %vm343, %v1168, 0
    %1177 = vmatprep.subr.mxu0 0.0
    %1178 = vmatpush1.msra.mxu0 0.0
    %1179 = vmatprep.subr.mxu0 0.0
    %1180 = vmatpush1.msra.mxu0 0.0
    %1181 = vmatprep.subr.mxu0 0.0
    %1182 = vmatpush1.msra.mxu0 0.0
    %1183 = vmatprep.subr.mxu0 0.0
    %1184 = vmatpush1.msra.mxu0 0.0
    %1185 = vmatprep.subr.mxu0 0.0
    %1186 = vmatpush1.msra.mxu0 0.0
    %1187 = vmatprep.subr.mxu0 0.0
    %1188 = vmatpush1.msra.mxu0 0.0
    %1189 = vmatprep.subr.mxu0 0.0
    %1190 = vmatpush1.msra.mxu0 0.0
    %1191 = vmatprep.subr.mxu0 0.0
    %1192 = vmatpush1.msra.mxu0 0.0
    %1193 = vmatprep.subr.mxu0 0.0
    %1194 = vmatpush1.msra.mxu0 %v379
    %1195 = vmatprep.subr.mxu0 0.0
    %1196 = vmatpush1.msra.mxu0 %v378
    %1197 = vmatprep.subr.mxu0 0.0
    %1198 = vmatpush1.msra.mxu0 %v377
    %1199 = vmatprep.subr.mxu0 0.0
    %1200 = vmatpush1.msra.mxu0 %v376
    %1201 = vmatprep.subr.mxu0 0.0
    %1202 = vmatpush1.msra.mxu0 %v375
    %1203 = vmatprep.subr.mxu0 0.0
    %1204 = vmatpush1.msra.mxu0 %v374
    %1205 = vmatprep.subr.mxu0 0.0
    %1206 = vmatpush1.msra.mxu0 %v373
    %1207 = vmatprep.subr.mxu0 0.0
    %1208 = vmatpush1.msra.mxu0 %v372
    %1209 = vmatprep.subr.mxu0 0.0
    %1210 = vmatpush2.msra.mxu0 0.0
    %1211 = vmatprep.subr.mxu0 0.0
    %1212 = vmatpush2.msra.mxu0 0.0
    %1213 = vmatprep.subr.mxu0 0.0
    %1214 = vmatpush2.msra.mxu0 0.0
    %1215 = vmatprep.subr.mxu0 0.0
    %1216 = vmatpush2.msra.mxu0 0.0
    %1217 = vmatprep.subr.mxu0 0.0
    %1218 = vmatpush2.msra.mxu0 0.0
    %1219 = vmatprep.subr.mxu0 0.0
    %1220 = vmatpush2.msra.mxu0 0.0
    %1221 = vmatprep.subr.mxu0 0.0
    %1222 = vmatpush2.msra.mxu0 0.0
    %1223 = vmatprep.subr.mxu0 0.0
    %1224 = vmatpush2.msra.mxu0 0.0
    %1225 = vmatprep.subr.mxu0 0.0
    %1226 = vmatpush2.msra.mxu0 0.0
    %1227 = vmatprep.subr.mxu0 0.0
    %1228 = vmatpush2.msra.mxu0 0.0
    %1229 = vmatprep.subr.mxu0 0.0
    %1230 = vmatpush2.msra.mxu0 0.0
    %1231 = vmatprep.subr.mxu0 0.0
    %1232 = vmatpush2.msra.mxu0 0.0
    %1233 = vmatprep.subr.mxu0 0.0
    %1234 = vmatpush2.msra.mxu0 0.0
    %1235 = vmatprep.subr.mxu0 0.0
    %1236 = vmatpush2.msra.mxu0 0.0
    %1237 = vmatprep.subr.mxu0 0.0
    %1238 = vmatpush2.msra.mxu0 0.0
    %1239 = vmatprep.subr.mxu0 0.0
    %1240 = vmatpush2.msra.mxu0 0.0
    %1241 = vmatprep.mubr.f32.mxu0 0.0
    %1242 = vmatmul.mubr.f32.gmra.mxu0 %v1175
    %v1243 = vpop.f32.mrf.mxu0
    %v1244 = vadd.f32 0.0, %v1243
    %v1245 = vpop.f32.mrf.mxu0
    %1246 = vdwg.mxu0
    %v1247 = vadd.f32 %v1174, %v1244
    %v1248 = vtanh.pop %v1247
    %1249 = vst.msk [vmem:[#allocation3 + $0x10] sm:$0xff] %vm612, %v1248
    %v1250 = vld [vmem:[#allocation2 + $0x58] sm:$0xff]
    %v1252 = vsel %vm343, %v1248, 0
    %1254 = vmatprep.subr.mxu0 0.0
    %1255 = vmatpush1.msra.mxu0 0.0
    %1256 = vmatprep.subr.mxu0 0.0
    %1257 = vmatpush1.msra.mxu0 0.0
    %1258 = vmatprep.subr.mxu0 0.0
    %1259 = vmatpush1.msra.mxu0 0.0
    %1260 = vmatprep.subr.mxu0 0.0
    %1261 = vmatpush1.msra.mxu0 0.0
    %1262 = vmatprep.subr.mxu0 0.0
    %1263 = vmatpush1.msra.mxu0 0.0
    %1264 = vmatprep.subr.mxu0 0.0
    %1265 = vmatpush1.msra.mxu0 0.0
    %1266 = vmatprep.subr.mxu0 0.0
    %1267 = vmatpush1.msra.mxu0 0.0
    %1268 = vmatprep.subr.mxu0 0.0
    %1269 = vmatpush1.msra.mxu0 0.0
    %1270 = vmatprep.subr.mxu0 0.0
    %1271 = vmatpush1.msra.mxu0 %v379
    %1272 = vmatprep.subr.mxu0 0.0
    %1273 = vmatpush1.msra.mxu0 %v378
    %1274 = vmatprep.subr.mxu0 0.0
    %1275 = vmatpush1.msra.mxu0 %v377
    %1276 = vmatprep.subr.mxu0 0.0
    %1277 = vmatpush1.msra.mxu0 %v376
    %1278 = vmatprep.subr.mxu0 0.0
    %1279 = vmatpush1.msra.mxu0 %v375
    %1280 = vmatprep.subr.mxu0 0.0
    %1281 = vmatpush1.msra.mxu0 %v374
    %1282 = vmatprep.subr.mxu0 0.0
    %1283 = vmatpush1.msra.mxu0 %v373
    %1284 = vmatprep.subr.mxu0 0.0
    %1285 = vmatpush1.msra.mxu0 %v372
    %1286 = vmatprep.subr.mxu0 0.0
    %1287 = vmatpush2.msra.mxu0 0.0
    %1288 = vmatprep.subr.mxu0 0.0
    %1289 = vmatpush2.msra.mxu0 0.0
    %1290 = vmatprep.subr.mxu0 0.0
    %1291 = vmatpush2.msra.mxu0 0.0
    %1292 = vmatprep.subr.mxu0 0.0
    %1293 = vmatpush2.msra.mxu0 0.0
    %1294 = vmatprep.subr.mxu0 0.0
    %1295 = vmatpush2.msra.mxu0 0.0
    %1296 = vmatprep.subr.mxu0 0.0
    %1297 = vmatpush2.msra.mxu0 0.0
    %1298 = vmatprep.subr.mxu0 0.0
    %1299 = vmatpush2.msra.mxu0 0.0
    %1300 = vmatprep.subr.mxu0 0.0
    %1301 = vmatpush2.msra.mxu0 0.0
    %1302 = vmatprep.subr.mxu0 0.0
    %1303 = vmatpush2.msra.mxu0 0.0
    %1304 = vmatprep.subr.mxu0 0.0
    %1305 = vmatpush2.msra.mxu0 0.0
    %1306 = vmatprep.subr.mxu0 0.0
    %1307 = vmatpush2.msra.mxu0 0.0
    %1308 = vmatprep.subr.mxu0 0.0
    %1309 = vmatpush2.msra.mxu0 0.0
    %1310 = vmatprep.subr.mxu0 0.0
    %1311 = vmatpush2.msra.mxu0 0.0
    %1312 = vmatprep.subr.mxu0 0.0
    %1313 = vmatpush2.msra.mxu0 0.0
    %1314 = vmatprep.subr.mxu0 0.0
    %1315 = vmatpush2.msra.mxu0 0.0
    %1316 = vmatprep.subr.mxu0 0.0
    %1317 = vmatpush2.msra.mxu0 0.0
    %1318 = vmatprep.mubr.f32.mxu0 0.0
    %1319 = vmatmul.mubr.f32.gmra.mxu0 %v1252
    %v1320 = vpop.f32.mrf.mxu0
    %v1321 = vadd.f32 0.0, %v1320
    %v1322 = vpop.f32.mrf.mxu0
    %1323 = vdwg.mxu0
    %v1324 = vadd.f32 %v1250, %v1321
    %v1325 = vtanh.pop %v1324
    %1327 = vrot.lane.b32.xlu0 %v1325, 32
    %v1328 = vpop.permute.xlu0 %1327
    %1330 = vst.msk [vmem:[#allocation3 + $0x10] sm:$0xff] %vm694, %v1328
    %v1331 = vld [vmem:[#allocation2 + $0x60] sm:$0xff]
    %v1332 = vsel %vm343, %v1325, 0
    %1334 = vmatprep.subr.mxu0 0.0
    %1335 = vmatpush1.msra.mxu0 0.0
    %1336 = vmatprep.subr.mxu0 0.0
    %1337 = vmatpush1.msra.mxu0 0.0
    %1338 = vmatprep.subr.mxu0 0.0
    %1339 = vmatpush1.msra.mxu0 0.0
    %1340 = vmatprep.subr.mxu0 0.0
    %1341 = vmatpush1.msra.mxu0 0.0
    %1342 = vmatprep.subr.mxu0 0.0
    %1343 = vmatpush1.msra.mxu0 0.0
    %1344 = vmatprep.subr.mxu0 0.0
    %1345 = vmatpush1.msra.mxu0 0.0
    %1346 = vmatprep.subr.mxu0 0.0
    %1347 = vmatpush1.msra.mxu0 0.0
    %1348 = vmatprep.subr.mxu0 0.0
    %1349 = vmatpush1.msra.mxu0 0.0
    %1350 = vmatprep.subr.mxu0 0.0
    %1351 = vmatpush1.msra.mxu0 %v379
    %1352 = vmatprep.subr.mxu0 0.0
    %1353 = vmatpush1.msra.mxu0 %v378
    %1354 = vmatprep.subr.mxu0 0.0
    %1355 = vmatpush1.msra.mxu0 %v377
    %1356 = vmatprep.subr.mxu0 0.0
    %1357 = vmatpush1.msra.mxu0 %v376
    %1358 = vmatprep.subr.mxu0 0.0
    %1359 = vmatpush1.msra.mxu0 %v375
    %1360 = vmatprep.subr.mxu0 0.0
    %1361 = vmatpush1.msra.mxu0 %v374
    %1362 = vmatprep.subr.mxu0 0.0
    %1363 = vmatpush1.msra.mxu0 %v373
    %1364 = vmatprep.subr.mxu0 0.0
    %1365 = vmatpush1.msra.mxu0 %v372
    %1366 = vmatprep.subr.mxu0 0.0
    %1367 = vmatpush2.msra.mxu0 0.0
    %1368 = vmatprep.subr.mxu0 0.0
    %1369 = vmatpush2.msra.mxu0 0.0
    %1370 = vmatprep.subr.mxu0 0.0
    %1371 = vmatpush2.msra.mxu0 0.0
    %1372 = vmatprep.subr.mxu0 0.0
    %1373 = vmatpush2.msra.mxu0 0.0
    %1374 = vmatprep.subr.mxu0 0.0
    %1375 = vmatpush2.msra.mxu0 0.0
    %1376 = vmatprep.subr.mxu0 0.0
    %1377 = vmatpush2.msra.mxu0 0.0
    %1378 = vmatprep.subr.mxu0 0.0
    %1379 = vmatpush2.msra.mxu0 0.0
    %1380 = vmatprep.subr.mxu0 0.0
    %1381 = vmatpush2.msra.mxu0 0.0
    %1382 = vmatprep.subr.mxu0 0.0
    %1383 = vmatpush2.msra.mxu0 0.0
    %1384 = vmatprep.subr.mxu0 0.0
    %1385 = vmatpush2.msra.mxu0 0.0
    %1386 = vmatprep.subr.mxu0 0.0
    %1387 = vmatpush2.msra.mxu0 0.0
    %1388 = vmatprep.subr.mxu0 0.0
    %1389 = vmatpush2.msra.mxu0 0.0
    %1390 = vmatprep.subr.mxu0 0.0
    %1391 = vmatpush2.msra.mxu0 0.0
    %1392 = vmatprep.subr.mxu0 0.0
    %1393 = vmatpush2.msra.mxu0 0.0
    %1394 = vmatprep.subr.mxu0 0.0
    %1395 = vmatpush2.msra.mxu0 0.0
    %1396 = vmatprep.subr.mxu0 0.0
    %1397 = vmatpush2.msra.mxu0 0.0
    %1398 = vmatprep.mubr.f32.mxu0 0.0
    %1399 = vmatmul.mubr.f32.gmra.mxu0 %v1332
    %v1400 = vpop.f32.mrf.mxu0
    %v1401 = vadd.f32 0.0, %v1400
    %v1402 = vpop.f32.mrf.mxu0
    %1403 = vdwg.mxu0
    %v1404 = vadd.f32 %v1331, %v1401
    %v1405 = vtanh.pop %v1404
    %1407 = vrot.lane.b32.xlu0 %v1405, 64
    %v1408 = vpop.permute.xlu0 %1407
    %1410 = vst.msk [vmem:[#allocation3 + $0x10] sm:$0xff] %vm775, %v1408
    %v1411 = vld [vmem:[#allocation2 + $0x68] sm:$0xff]
    %v1412 = vsel %vm343, %v1405, 0
    %1414 = vmatprep.subr.mxu0 0.0
    %1415 = vmatpush1.msra.mxu0 0.0
    %1416 = vmatprep.subr.mxu0 0.0
    %1417 = vmatpush1.msra.mxu0 0.0
    %1418 = vmatprep.subr.mxu0 0.0
    %1419 = vmatpush1.msra.mxu0 0.0
    %1420 = vmatprep.subr.mxu0 0.0
    %1421 = vmatpush1.msra.mxu0 0.0
    %1422 = vmatprep.subr.mxu0 0.0
    %1423 = vmatpush1.msra.mxu0 0.0
    %1424 = vmatprep.subr.mxu0 0.0
    %1425 = vmatpush1.msra.mxu0 0.0
    %1426 = vmatprep.subr.mxu0 0.0
    %1427 = vmatpush1.msra.mxu0 0.0
    %1428 = vmatprep.subr.mxu0 0.0
    %1429 = vmatpush1.msra.mxu0 0.0
    %1430 = vmatprep.subr.mxu0 0.0
    %1431 = vmatpush1.msra.mxu0 %v379
    %1432 = vmatprep.subr.mxu0 0.0
    %1433 = vmatpush1.msra.mxu0 %v378
    %1434 = vmatprep.subr.mxu0 0.0
    %1435 = vmatpush1.msra.mxu0 %v377
    %1436 = vmatprep.subr.mxu0 0.0
    %1437 = vmatpush1.msra.mxu0 %v376
    %1438 = vmatprep.subr.mxu0 0.0
    %1439 = vmatpush1.msra.mxu0 %v375
    %1440 = vmatprep.subr.mxu0 0.0
    %1441 = vmatpush1.msra.mxu0 %v374
    %1442 = vmatprep.subr.mxu0 0.0
    %1443 = vmatpush1.msra.mxu0 %v373
    %1444 = vmatprep.subr.mxu0 0.0
    %1445 = vmatpush1.msra.mxu0 %v372
    %1446 = vmatprep.subr.mxu0 0.0
    %1447 = vmatpush2.msra.mxu0 0.0
    %1448 = vmatprep.subr.mxu0 0.0
    %1449 = vmatpush2.msra.mxu0 0.0
    %1450 = vmatprep.subr.mxu0 0.0
    %1451 = vmatpush2.msra.mxu0 0.0
    %1452 = vmatprep.subr.mxu0 0.0
    %1453 = vmatpush2.msra.mxu0 0.0
    %1454 = vmatprep.subr.mxu0 0.0
    %1455 = vmatpush2.msra.mxu0 0.0
    %1456 = vmatprep.subr.mxu0 0.0
    %1457 = vmatpush2.msra.mxu0 0.0
    %1458 = vmatprep.subr.mxu0 0.0
    %1459 = vmatpush2.msra.mxu0 0.0
    %1460 = vmatprep.subr.mxu0 0.0
    %1461 = vmatpush2.msra.mxu0 0.0
    %1462 = vmatprep.subr.mxu0 0.0
    %1463 = vmatpush2.msra.mxu0 0.0
    %1464 = vmatprep.subr.mxu0 0.0
    %1465 = vmatpush2.msra.mxu0 0.0
    %1466 = vmatprep.subr.mxu0 0.0
    %1467 = vmatpush2.msra.mxu0 0.0
    %1468 = vmatprep.subr.mxu0 0.0
    %1469 = vmatpush2.msra.mxu0 0.0
    %1470 = vmatprep.subr.mxu0 0.0
    %1471 = vmatpush2.msra.mxu0 0.0
    %1472 = vmatprep.subr.mxu0 0.0
    %1473 = vmatpush2.msra.mxu0 0.0
    %1474 = vmatprep.subr.mxu0 0.0
    %1475 = vmatpush2.msra.mxu0 0.0
    %1476 = vmatprep.subr.mxu0 0.0
    %1477 = vmatpush2.msra.mxu0 0.0
    %1478 = vmatprep.mubr.f32.mxu0 0.0
    %1479 = vmatmul.mubr.f32.gmra.mxu0 %v1412
    %v1480 = vpop.f32.mrf.mxu0
    %v1481 = vadd.f32 0.0, %v1480
    %v1482 = vpop.f32.mrf.mxu0
    %1483 = vdwg.mxu0
    %v1484 = vadd.f32 %v1411, %v1481
    %v1485 = vtanh.pop %v1484
    %1487 = vrot.lane.b32.xlu0 %v1485, 96
    %v1488 = vpop.permute.xlu0 %1487
    %1490 = vst.msk [vmem:[#allocation3 + $0x18] sm:$0xff] %vm53, %v1488
    %v1491 = vld [vmem:[#allocation2 + $0x70] sm:$0xff]
    %v1492 = vsel %vm343, %v1485, 0
    %1494 = vmatprep.subr.mxu0 0.0
    %1495 = vmatpush1.msra.mxu0 0.0
    %1496 = vmatprep.subr.mxu0 0.0
    %1497 = vmatpush1.msra.mxu0 0.0
    %1498 = vmatprep.subr.mxu0 0.0
    %1499 = vmatpush1.msra.mxu0 0.0
    %1500 = vmatprep.subr.mxu0 0.0
    %1501 = vmatpush1.msra.mxu0 0.0
    %1502 = vmatprep.subr.mxu0 0.0
    %1503 = vmatpush1.msra.mxu0 0.0
    %1504 = vmatprep.subr.mxu0 0.0
    %1505 = vmatpush1.msra.mxu0 0.0
    %1506 = vmatprep.subr.mxu0 0.0
    %1507 = vmatpush1.msra.mxu0 0.0
    %1508 = vmatprep.subr.mxu0 0.0
    %1509 = vmatpush1.msra.mxu0 0.0
    %1510 = vmatprep.subr.mxu0 0.0
    %1511 = vmatpush1.msra.mxu0 %v379
    %1512 = vmatprep.subr.mxu0 0.0
    %1513 = vmatpush1.msra.mxu0 %v378
    %1514 = vmatprep.subr.mxu0 0.0
    %1515 = vmatpush1.msra.mxu0 %v377
    %1516 = vmatprep.subr.mxu0 0.0
    %1517 = vmatpush1.msra.mxu0 %v376
    %1518 = vmatprep.subr.mxu0 0.0
    %1519 = vmatpush1.msra.mxu0 %v375
    %1520 = vmatprep.subr.mxu0 0.0
    %1521 = vmatpush1.msra.mxu0 %v374
    %1522 = vmatprep.subr.mxu0 0.0
    %1523 = vmatpush1.msra.mxu0 %v373
    %1524 = vmatprep.subr.mxu0 0.0
    %1525 = vmatpush1.msra.mxu0 %v372
    %1526 = vmatprep.subr.mxu0 0.0
    %1527 = vmatpush2.msra.mxu0 0.0
    %1528 = vmatprep.subr.mxu0 0.0
    %1529 = vmatpush2.msra.mxu0 0.0
    %1530 = vmatprep.subr.mxu0 0.0
    %1531 = vmatpush2.msra.mxu0 0.0
    %1532 = vmatprep.subr.mxu0 0.0
    %1533 = vmatpush2.msra.mxu0 0.0
    %1534 = vmatprep.subr.mxu0 0.0
    %1535 = vmatpush2.msra.mxu0 0.0
    %1536 = vmatprep.subr.mxu0 0.0
    %1537 = vmatpush2.msra.mxu0 0.0
    %1538 = vmatprep.subr.mxu0 0.0
    %1539 = vmatpush2.msra.mxu0 0.0
    %1540 = vmatprep.subr.mxu0 0.0
    %1541 = vmatpush2.msra.mxu0 0.0
    %1542 = vmatprep.subr.mxu0 0.0
    %1543 = vmatpush2.msra.mxu0 0.0
    %1544 = vmatprep.subr.mxu0 0.0
    %1545 = vmatpush2.msra.mxu0 0.0
    %1546 = vmatprep.subr.mxu0 0.0
    %1547 = vmatpush2.msra.mxu0 0.0
    %1548 = vmatprep.subr.mxu0 0.0
    %1549 = vmatpush2.msra.mxu0 0.0
    %1550 = vmatprep.subr.mxu0 0.0
    %1551 = vmatpush2.msra.mxu0 0.0
    %1552 = vmatprep.subr.mxu0 0.0
    %1553 = vmatpush2.msra.mxu0 0.0
    %1554 = vmatprep.subr.mxu0 0.0
    %1555 = vmatpush2.msra.mxu0 0.0
    %1556 = vmatprep.subr.mxu0 0.0
    %1557 = vmatpush2.msra.mxu0 0.0
    %1558 = vmatprep.mubr.f32.mxu0 0.0
    %1559 = vmatmul.mubr.f32.gmra.mxu0 %v1492
    %v1560 = vpop.f32.mrf.mxu0
    %v1561 = vadd.f32 0.0, %v1560
    %v1562 = vpop.f32.mrf.mxu0
    %1563 = vdwg.mxu0
    %v1564 = vadd.f32 %v1491, %v1561
    %v1565 = vtanh.pop %v1564
    %1566 = vst.msk [vmem:[#allocation3 + $0x18] sm:$0xff] %vm612, %v1565
    %v1567 = vld [vmem:[#allocation2 + $0x78] sm:$0xff]
    %v1569 = vsel %vm343, %v1565, 0
    %1571 = vmatprep.subr.mxu0 0.0
    %1572 = vmatpush1.msra.mxu0 0.0
    %1573 = vmatprep.subr.mxu0 0.0
    %1574 = vmatpush1.msra.mxu0 0.0
    %1575 = vmatprep.subr.mxu0 0.0
    %1576 = vmatpush1.msra.mxu0 0.0
    %1577 = vmatprep.subr.mxu0 0.0
    %1578 = vmatpush1.msra.mxu0 0.0
    %1579 = vmatprep.subr.mxu0 0.0
    %1580 = vmatpush1.msra.mxu0 0.0
    %1581 = vmatprep.subr.mxu0 0.0
    %1582 = vmatpush1.msra.mxu0 0.0
    %1583 = vmatprep.subr.mxu0 0.0
    %1584 = vmatpush1.msra.mxu0 0.0
    %1585 = vmatprep.subr.mxu0 0.0
    %1586 = vmatpush1.msra.mxu0 0.0
    %1587 = vmatprep.subr.mxu0 0.0
    %1588 = vmatpush1.msra.mxu0 %v379
    %1589 = vmatprep.subr.mxu0 0.0
    %1590 = vmatpush1.msra.mxu0 %v378
    %1591 = vmatprep.subr.mxu0 0.0
    %1592 = vmatpush1.msra.mxu0 %v377
    %1593 = vmatprep.subr.mxu0 0.0
    %1594 = vmatpush1.msra.mxu0 %v376
    %1595 = vmatprep.subr.mxu0 0.0
    %1596 = vmatpush1.msra.mxu0 %v375
    %1597 = vmatprep.subr.mxu0 0.0
    %1598 = vmatpush1.msra.mxu0 %v374
    %1599 = vmatprep.subr.mxu0 0.0
    %1600 = vmatpush1.msra.mxu0 %v373
    %1601 = vmatprep.subr.mxu0 0.0
    %1602 = vmatpush1.msra.mxu0 %v372
    %1603 = vmatprep.subr.mxu0 0.0
    %1604 = vmatpush2.msra.mxu0 0.0
    %1605 = vmatprep.subr.mxu0 0.0
    %1606 = vmatpush2.msra.mxu0 0.0
    %1607 = vmatprep.subr.mxu0 0.0
    %1608 = vmatpush2.msra.mxu0 0.0
    %1609 = vmatprep.subr.mxu0 0.0
    %1610 = vmatpush2.msra.mxu0 0.0
    %1611 = vmatprep.subr.mxu0 0.0
    %1612 = vmatpush2.msra.mxu0 0.0
    %1613 = vmatprep.subr.mxu0 0.0
    %1614 = vmatpush2.msra.mxu0 0.0
    %1615 = vmatprep.subr.mxu0 0.0
    %1616 = vmatpush2.msra.mxu0 0.0
    %1617 = vmatprep.subr.mxu0 0.0
    %1618 = vmatpush2.msra.mxu0 0.0
    %1619 = vmatprep.subr.mxu0 0.0
    %1620 = vmatpush2.msra.mxu0 0.0
    %1621 = vmatprep.subr.mxu0 0.0
    %1622 = vmatpush2.msra.mxu0 0.0
    %1623 = vmatprep.subr.mxu0 0.0
    %1624 = vmatpush2.msra.mxu0 0.0
    %1625 = vmatprep.subr.mxu0 0.0
    %1626 = vmatpush2.msra.mxu0 0.0
    %1627 = vmatprep.subr.mxu0 0.0
    %1628 = vmatpush2.msra.mxu0 0.0
    %1629 = vmatprep.subr.mxu0 0.0
    %1630 = vmatpush2.msra.mxu0 0.0
    %1631 = vmatprep.subr.mxu0 0.0
    %1632 = vmatpush2.msra.mxu0 0.0
    %1633 = vmatprep.subr.mxu0 0.0
    %1634 = vmatpush2.msra.mxu0 0.0
    %1635 = vmatprep.mubr.f32.mxu0 0.0
    %1636 = vmatmul.mubr.f32.gmra.mxu0 %v1569
    %v1637 = vpop.f32.mrf.mxu0
    %v1638 = vadd.f32 0.0, %v1637
    %v1639 = vpop.f32.mrf.mxu0
    %1640 = vdwg.mxu0
    %v1641 = vadd.f32 %v1567, %v1638
    %v1642 = vtanh.pop %v1641
    %1644 = vrot.lane.b32.xlu0 %v1642, 32
    %v1645 = vpop.permute.xlu0 %1644
    %1647 = vst.msk [vmem:[#allocation3 + $0x18] sm:$0xff] %vm694, %v1645
    %v1648 = vld [vmem:[#allocation2 + $0x80] sm:$0xff]
    %v1649 = vsel %vm343, %v1642, 0
    %1651 = vmatprep.subr.mxu0 0.0
    %1652 = vmatpush1.msra.mxu0 0.0
    %1653 = vmatprep.subr.mxu0 0.0
    %1654 = vmatpush1.msra.mxu0 0.0
    %1655 = vmatprep.subr.mxu0 0.0
    %1656 = vmatpush1.msra.mxu0 0.0
    %1657 = vmatprep.subr.mxu0 0.0
    %1658 = vmatpush1.msra.mxu0 0.0
    %1659 = vmatprep.subr.mxu0 0.0
    %1660 = vmatpush1.msra.mxu0 0.0
    %1661 = vmatprep.subr.mxu0 0.0
    %1662 = vmatpush1.msra.mxu0 0.0
    %1663 = vmatprep.subr.mxu0 0.0
    %1664 = vmatpush1.msra.mxu0 0.0
    %1665 = vmatprep.subr.mxu0 0.0
    %1666 = vmatpush1.msra.mxu0 0.0
    %1667 = vmatprep.subr.mxu0 0.0
    %1668 = vmatpush1.msra.mxu0 %v379
    %1669 = vmatprep.subr.mxu0 0.0
    %1670 = vmatpush1.msra.mxu0 %v378
    %1671 = vmatprep.subr.mxu0 0.0
    %1672 = vmatpush1.msra.mxu0 %v377
    %1673 = vmatprep.subr.mxu0 0.0
    %1674 = vmatpush1.msra.mxu0 %v376
    %1675 = vmatprep.subr.mxu0 0.0
    %1676 = vmatpush1.msra.mxu0 %v375
    %1677 = vmatprep.subr.mxu0 0.0
    %1678 = vmatpush1.msra.mxu0 %v374
    %1679 = vmatprep.subr.mxu0 0.0
    %1680 = vmatpush1.msra.mxu0 %v373
    %1681 = vmatprep.subr.mxu0 0.0
    %1682 = vmatpush1.msra.mxu0 %v372
    %1683 = vmatprep.subr.mxu0 0.0
    %1684 = vmatpush2.msra.mxu0 0.0
    %1685 = vmatprep.subr.mxu0 0.0
    %1686 = vmatpush2.msra.mxu0 0.0
    %1687 = vmatprep.subr.mxu0 0.0
    %1688 = vmatpush2.msra.mxu0 0.0
    %1689 = vmatprep.subr.mxu0 0.0
    %1690 = vmatpush2.msra.mxu0 0.0
    %1691 = vmatprep.subr.mxu0 0.0
    %1692 = vmatpush2.msra.mxu0 0.0
    %1693 = vmatprep.subr.mxu0 0.0
    %1694 = vmatpush2.msra.mxu0 0.0
    %1695 = vmatprep.subr.mxu0 0.0
    %1696 = vmatpush2.msra.mxu0 0.0
    %1697 = vmatprep.subr.mxu0 0.0
    %1698 = vmatpush2.msra.mxu0 0.0
    %1699 = vmatprep.subr.mxu0 0.0
    %1700 = vmatpush2.msra.mxu0 0.0
    %1701 = vmatprep.subr.mxu0 0.0
    %1702 = vmatpush2.msra.mxu0 0.0
    %1703 = vmatprep.subr.mxu0 0.0
    %1704 = vmatpush2.msra.mxu0 0.0
    %1705 = vmatprep.subr.mxu0 0.0
    %1706 = vmatpush2.msra.mxu0 0.0
    %1707 = vmatprep.subr.mxu0 0.0
    %1708 = vmatpush2.msra.mxu0 0.0
    %1709 = vmatprep.subr.mxu0 0.0
    %1710 = vmatpush2.msra.mxu0 0.0
    %1711 = vmatprep.subr.mxu0 0.0
    %1712 = vmatpush2.msra.mxu0 0.0
    %1713 = vmatprep.subr.mxu0 0.0
    %1714 = vmatpush2.msra.mxu0 0.0
    %1715 = vmatprep.mubr.f32.mxu0 0.0
    %1716 = vmatmul.mubr.f32.gmra.mxu0 %v1649
    %v1717 = vpop.f32.mrf.mxu0
    %v1718 = vadd.f32 0.0, %v1717
    %v1719 = vpop.f32.mrf.mxu0
    %1720 = vdwg.mxu0
    %v1721 = vadd.f32 %v1648, %v1718
    %v1722 = vtanh.pop %v1721
    %1724 = vrot.lane.b32.xlu0 %v1722, 64
    %v1725 = vpop.permute.xlu0 %1724
    %1727 = vst.msk [vmem:[#allocation3 + $0x18] sm:$0xff] %vm775, %v1725
    %v1728 = vld [vmem:[#allocation2 + $0x88] sm:$0xff]
    %v1729 = vsel %vm343, %v1722, 0
    %1731 = vmatprep.subr.mxu0 0.0
    %1732 = vmatpush1.msra.mxu0 0.0
    %1733 = vmatprep.subr.mxu0 0.0
    %1734 = vmatpush1.msra.mxu0 0.0
    %1735 = vmatprep.subr.mxu0 0.0
    %1736 = vmatpush1.msra.mxu0 0.0
    %1737 = vmatprep.subr.mxu0 0.0
    %1738 = vmatpush1.msra.mxu0 0.0
    %1739 = vmatprep.subr.mxu0 0.0
    %1740 = vmatpush1.msra.mxu0 0.0
    %1741 = vmatprep.subr.mxu0 0.0
    %1742 = vmatpush1.msra.mxu0 0.0
    %1743 = vmatprep.subr.mxu0 0.0
    %1744 = vmatpush1.msra.mxu0 0.0
    %1745 = vmatprep.subr.mxu0 0.0
    %1746 = vmatpush1.msra.mxu0 0.0
    %1747 = vmatprep.subr.mxu0 0.0
    %1748 = vmatpush1.msra.mxu0 %v379
    %1749 = vmatprep.subr.mxu0 0.0
    %1750 = vmatpush1.msra.mxu0 %v378
    %1751 = vmatprep.subr.mxu0 0.0
    %1752 = vmatpush1.msra.mxu0 %v377
    %1753 = vmatprep.subr.mxu0 0.0
    %1754 = vmatpush1.msra.mxu0 %v376
    %1755 = vmatprep.subr.mxu0 0.0
    %1756 = vmatpush1.msra.mxu0 %v375
    %1757 = vmatprep.subr.mxu0 0.0
    %1758 = vmatpush1.msra.mxu0 %v374
    %1759 = vmatprep.subr.mxu0 0.0
    %1760 = vmatpush1.msra.mxu0 %v373
    %1761 = vmatprep.subr.mxu0 0.0
    %1762 = vmatpush1.msra.mxu0 %v372
    %1763 = vmatprep.subr.mxu0 0.0
    %1764 = vmatpush2.msra.mxu0 0.0
    %1765 = vmatprep.subr.mxu0 0.0
    %1766 = vmatpush2.msra.mxu0 0.0
    %1767 = vmatprep.subr.mxu0 0.0
    %1768 = vmatpush2.msra.mxu0 0.0
    %1769 = vmatprep.subr.mxu0 0.0
    %1770 = vmatpush2.msra.mxu0 0.0
    %1771 = vmatprep.subr.mxu0 0.0
    %1772 = vmatpush2.msra.mxu0 0.0
    %1773 = vmatprep.subr.mxu0 0.0
    %1774 = vmatpush2.msra.mxu0 0.0
    %1775 = vmatprep.subr.mxu0 0.0
    %1776 = vmatpush2.msra.mxu0 0.0
    %1777 = vmatprep.subr.mxu0 0.0
    %1778 = vmatpush2.msra.mxu0 0.0
    %1779 = vmatprep.subr.mxu0 0.0
    %1780 = vmatpush2.msra.mxu0 0.0
    %1781 = vmatprep.subr.mxu0 0.0
    %1782 = vmatpush2.msra.mxu0 0.0
    %1783 = vmatprep.subr.mxu0 0.0
    %1784 = vmatpush2.msra.mxu0 0.0
    %1785 = vmatprep.subr.mxu0 0.0
    %1786 = vmatpush2.msra.mxu0 0.0
    %1787 = vmatprep.subr.mxu0 0.0
    %1788 = vmatpush2.msra.mxu0 0.0
    %1789 = vmatprep.subr.mxu0 0.0
    %1790 = vmatpush2.msra.mxu0 0.0
    %1791 = vmatprep.subr.mxu0 0.0
    %1792 = vmatpush2.msra.mxu0 0.0
    %1793 = vmatprep.subr.mxu0 0.0
    %1794 = vmatpush2.msra.mxu0 0.0
    %1795 = vmatprep.mubr.f32.mxu0 0.0
    %1796 = vmatmul.mubr.f32.gmra.mxu0 %v1729
    %v1797 = vpop.f32.mrf.mxu0
    %v1798 = vadd.f32 0.0, %v1797
    %v1799 = vpop.f32.mrf.mxu0
    %1800 = vdwg.mxu0
    %v1801 = vadd.f32 %v1728, %v1798
    %v1802 = vtanh.pop %v1801
    %1804 = vrot.lane.b32.xlu0 %v1802, 96
    %v1805 = vpop.permute.xlu0 %1804
    %1807 = vst.msk [vmem:[#allocation3 + $0x20] sm:$0xff] %vm53, %v1805
    %v1808 = vld [vmem:[#allocation2 + $0x90] sm:$0xff]
    %v1809 = vsel %vm343, %v1802, 0
    %1811 = vmatprep.subr.mxu0 0.0
    %1812 = vmatpush1.msra.mxu0 0.0
    %1813 = vmatprep.subr.mxu0 0.0
    %1814 = vmatpush1.msra.mxu0 0.0
    %1815 = vmatprep.subr.mxu0 0.0
    %1816 = vmatpush1.msra.mxu0 0.0
    %1817 = vmatprep.subr.mxu0 0.0
    %1818 = vmatpush1.msra.mxu0 0.0
    %1819 = vmatprep.subr.mxu0 0.0
    %1820 = vmatpush1.msra.mxu0 0.0
    %1821 = vmatprep.subr.mxu0 0.0
    %1822 = vmatpush1.msra.mxu0 0.0
    %1823 = vmatprep.subr.mxu0 0.0
    %1824 = vmatpush1.msra.mxu0 0.0
    %1825 = vmatprep.subr.mxu0 0.0
    %1826 = vmatpush1.msra.mxu0 0.0
    %1827 = vmatprep.subr.mxu0 0.0
    %1828 = vmatpush1.msra.mxu0 %v379
    %1829 = vmatprep.subr.mxu0 0.0
    %1830 = vmatpush1.msra.mxu0 %v378
    %1831 = vmatprep.subr.mxu0 0.0
    %1832 = vmatpush1.msra.mxu0 %v377
    %1833 = vmatprep.subr.mxu0 0.0
    %1834 = vmatpush1.msra.mxu0 %v376
    %1835 = vmatprep.subr.mxu0 0.0
    %1836 = vmatpush1.msra.mxu0 %v375
    %1837 = vmatprep.subr.mxu0 0.0
    %1838 = vmatpush1.msra.mxu0 %v374
    %1839 = vmatprep.subr.mxu0 0.0
    %1840 = vmatpush1.msra.mxu0 %v373
    %1841 = vmatprep.subr.mxu0 0.0
    %1842 = vmatpush1.msra.mxu0 %v372
    %1843 = vmatprep.subr.mxu0 0.0
    %1844 = vmatpush2.msra.mxu0 0.0
    %1845 = vmatprep.subr.mxu0 0.0
    %1846 = vmatpush2.msra.mxu0 0.0
    %1847 = vmatprep.subr.mxu0 0.0
    %1848 = vmatpush2.msra.mxu0 0.0
    %1849 = vmatprep.subr.mxu0 0.0
    %1850 = vmatpush2.msra.mxu0 0.0
    %1851 = vmatprep.subr.mxu0 0.0
    %1852 = vmatpush2.msra.mxu0 0.0
    %1853 = vmatprep.subr.mxu0 0.0
    %1854 = vmatpush2.msra.mxu0 0.0
    %1855 = vmatprep.subr.mxu0 0.0
    %1856 = vmatpush2.msra.mxu0 0.0
    %1857 = vmatprep.subr.mxu0 0.0
    %1858 = vmatpush2.msra.mxu0 0.0
    %1859 = vmatprep.subr.mxu0 0.0
    %1860 = vmatpush2.msra.mxu0 0.0
    %1861 = vmatprep.subr.mxu0 0.0
    %1862 = vmatpush2.msra.mxu0 0.0
    %1863 = vmatprep.subr.mxu0 0.0
    %1864 = vmatpush2.msra.mxu0 0.0
    %1865 = vmatprep.subr.mxu0 0.0
    %1866 = vmatpush2.msra.mxu0 0.0
    %1867 = vmatprep.subr.mxu0 0.0
    %1868 = vmatpush2.msra.mxu0 0.0
    %1869 = vmatprep.subr.mxu0 0.0
    %1870 = vmatpush2.msra.mxu0 0.0
    %1871 = vmatprep.subr.mxu0 0.0
    %1872 = vmatpush2.msra.mxu0 0.0
    %1873 = vmatprep.subr.mxu0 0.0
    %1874 = vmatpush2.msra.mxu0 0.0
    %1875 = vmatprep.mubr.f32.mxu0 0.0
    %1876 = vmatmul.mubr.f32.gmra.mxu0 %v1809
    %v1877 = vpop.f32.mrf.mxu0
    %v1878 = vadd.f32 0.0, %v1877
    %v1879 = vpop.f32.mrf.mxu0
    %1880 = vdwg.mxu0
    %v1881 = vadd.f32 %v1808, %v1878
    %v1882 = vtanh.pop %v1881
    %1883 = vst.msk [vmem:[#allocation3 + $0x20] sm:$0xff] %vm612, %v1882
    %v1884 = vld [vmem:[#allocation2 + $0x98] sm:$0xff]
    %v1886 = vsel %vm343, %v1882, 0
    %1888 = vmatprep.subr.mxu0 0.0
    %1889 = vmatpush1.msra.mxu0 0.0
    %1890 = vmatprep.subr.mxu0 0.0
    %1891 = vmatpush1.msra.mxu0 0.0
    %1892 = vmatprep.subr.mxu0 0.0
    %1893 = vmatpush1.msra.mxu0 0.0
    %1894 = vmatprep.subr.mxu0 0.0
    %1895 = vmatpush1.msra.mxu0 0.0
    %1896 = vmatprep.subr.mxu0 0.0
    %1897 = vmatpush1.msra.mxu0 0.0
    %1898 = vmatprep.subr.mxu0 0.0
    %1899 = vmatpush1.msra.mxu0 0.0
    %1900 = vmatprep.subr.mxu0 0.0
    %1901 = vmatpush1.msra.mxu0 0.0
    %1902 = vmatprep.subr.mxu0 0.0
    %1903 = vmatpush1.msra.mxu0 0.0
    %1904 = vmatprep.subr.mxu0 0.0
    %1905 = vmatpush1.msra.mxu0 %v379
    %1906 = vmatprep.subr.mxu0 0.0
    %1907 = vmatpush1.msra.mxu0 %v378
    %1908 = vmatprep.subr.mxu0 0.0
    %1909 = vmatpush1.msra.mxu0 %v377
    %1910 = vmatprep.subr.mxu0 0.0
    %1911 = vmatpush1.msra.mxu0 %v376
    %1912 = vmatprep.subr.mxu0 0.0
    %1913 = vmatpush1.msra.mxu0 %v375
    %1914 = vmatprep.subr.mxu0 0.0
    %1915 = vmatpush1.msra.mxu0 %v374
    %1916 = vmatprep.subr.mxu0 0.0
    %1917 = vmatpush1.msra.mxu0 %v373
    %1918 = vmatprep.subr.mxu0 0.0
    %1919 = vmatpush1.msra.mxu0 %v372
    %1920 = vmatprep.subr.mxu0 0.0
    %1921 = vmatpush2.msra.mxu0 0.0
    %1922 = vmatprep.subr.mxu0 0.0
    %1923 = vmatpush2.msra.mxu0 0.0
    %1924 = vmatprep.subr.mxu0 0.0
    %1925 = vmatpush2.msra.mxu0 0.0
    %1926 = vmatprep.subr.mxu0 0.0
    %1927 = vmatpush2.msra.mxu0 0.0
    %1928 = vmatprep.subr.mxu0 0.0
    %1929 = vmatpush2.msra.mxu0 0.0
    %1930 = vmatprep.subr.mxu0 0.0
    %1931 = vmatpush2.msra.mxu0 0.0
    %1932 = vmatprep.subr.mxu0 0.0
    %1933 = vmatpush2.msra.mxu0 0.0
    %1934 = vmatprep.subr.mxu0 0.0
    %1935 = vmatpush2.msra.mxu0 0.0
    %1936 = vmatprep.subr.mxu0 0.0
    %1937 = vmatpush2.msra.mxu0 0.0
    %1938 = vmatprep.subr.mxu0 0.0
    %1939 = vmatpush2.msra.mxu0 0.0
    %1940 = vmatprep.subr.mxu0 0.0
    %1941 = vmatpush2.msra.mxu0 0.0
    %1942 = vmatprep.subr.mxu0 0.0
    %1943 = vmatpush2.msra.mxu0 0.0
    %1944 = vmatprep.subr.mxu0 0.0
    %1945 = vmatpush2.msra.mxu0 0.0
    %1946 = vmatprep.subr.mxu0 0.0
    %1947 = vmatpush2.msra.mxu0 0.0
    %1948 = vmatprep.subr.mxu0 0.0
    %1949 = vmatpush2.msra.mxu0 0.0
    %1950 = vmatprep.subr.mxu0 0.0
    %1951 = vmatpush2.msra.mxu0 0.0
    %1952 = vmatprep.mubr.f32.mxu0 0.0
    %1953 = vmatmul.mubr.f32.gmra.mxu0 %v1886
    %v1954 = vpop.f32.mrf.mxu0
    %v1955 = vadd.f32 0.0, %v1954
    %v1956 = vpop.f32.mrf.mxu0
    %1957 = vdwg.mxu0
    %v1958 = vadd.f32 %v1884, %v1955
    %v1959 = vtanh.pop %v1958
    %1961 = vrot.lane.b32.xlu0 %v1959, 32
    %v1962 = vpop.permute.xlu0 %1961
    %1964 = vst.msk [vmem:[#allocation3 + $0x20] sm:$0xff] %vm694, %v1962
    %v1965 = vld [vmem:[#allocation2 + $0xa0] sm:$0xff]
    %v1966 = vsel %vm343, %v1959, 0
    %1968 = vmatprep.subr.mxu0 0.0
    %1969 = vmatpush1.msra.mxu0 0.0
    %1970 = vmatprep.subr.mxu0 0.0
    %1971 = vmatpush1.msra.mxu0 0.0
    %1972 = vmatprep.subr.mxu0 0.0
    %1973 = vmatpush1.msra.mxu0 0.0
    %1974 = vmatprep.subr.mxu0 0.0
    %1975 = vmatpush1.msra.mxu0 0.0
    %1976 = vmatprep.subr.mxu0 0.0
    %1977 = vmatpush1.msra.mxu0 0.0
    %1978 = vmatprep.subr.mxu0 0.0
    %1979 = vmatpush1.msra.mxu0 0.0
    %1980 = vmatprep.subr.mxu0 0.0
    %1981 = vmatpush1.msra.mxu0 0.0
    %1982 = vmatprep.subr.mxu0 0.0
    %1983 = vmatpush1.msra.mxu0 0.0
    %1984 = vmatprep.subr.mxu0 0.0
    %1985 = vmatpush1.msra.mxu0 %v379
    %1986 = vmatprep.subr.mxu0 0.0
    %1987 = vmatpush1.msra.mxu0 %v378
    %1988 = vmatprep.subr.mxu0 0.0
    %1989 = vmatpush1.msra.mxu0 %v377
    %1990 = vmatprep.subr.mxu0 0.0
    %1991 = vmatpush1.msra.mxu0 %v376
    %1992 = vmatprep.subr.mxu0 0.0
    %1993 = vmatpush1.msra.mxu0 %v375
    %1994 = vmatprep.subr.mxu0 0.0
    %1995 = vmatpush1.msra.mxu0 %v374
    %1996 = vmatprep.subr.mxu0 0.0
    %1997 = vmatpush1.msra.mxu0 %v373
    %1998 = vmatprep.subr.mxu0 0.0
    %1999 = vmatpush1.msra.mxu0 %v372
    %2000 = vmatprep.subr.mxu0 0.0
    %2001 = vmatpush2.msra.mxu0 0.0
    %2002 = vmatprep.subr.mxu0 0.0
    %2003 = vmatpush2.msra.mxu0 0.0
    %2004 = vmatprep.subr.mxu0 0.0
    %2005 = vmatpush2.msra.mxu0 0.0
    %2006 = vmatprep.subr.mxu0 0.0
    %2007 = vmatpush2.msra.mxu0 0.0
    %2008 = vmatprep.subr.mxu0 0.0
    %2009 = vmatpush2.msra.mxu0 0.0
    %2010 = vmatprep.subr.mxu0 0.0
    %2011 = vmatpush2.msra.mxu0 0.0
    %2012 = vmatprep.subr.mxu0 0.0
    %2013 = vmatpush2.msra.mxu0 0.0
    %2014 = vmatprep.subr.mxu0 0.0
    %2015 = vmatpush2.msra.mxu0 0.0
    %2016 = vmatprep.subr.mxu0 0.0
    %2017 = vmatpush2.msra.mxu0 0.0
    %2018 = vmatprep.subr.mxu0 0.0
    %2019 = vmatpush2.msra.mxu0 0.0
    %2020 = vmatprep.subr.mxu0 0.0
    %2021 = vmatpush2.msra.mxu0 0.0
    %2022 = vmatprep.subr.mxu0 0.0
    %2023 = vmatpush2.msra.mxu0 0.0
    %2024 = vmatprep.subr.mxu0 0.0
    %2025 = vmatpush2.msra.mxu0 0.0
    %2026 = vmatprep.subr.mxu0 0.0
    %2027 = vmatpush2.msra.mxu0 0.0
    %2028 = vmatprep.subr.mxu0 0.0
    %2029 = vmatpush2.msra.mxu0 0.0
    %2030 = vmatprep.subr.mxu0 0.0
    %2031 = vmatpush2.msra.mxu0 0.0
    %2032 = vmatprep.mubr.f32.mxu0 0.0
    %2033 = vmatmul.mubr.f32.gmra.mxu0 %v1966
    %v2034 = vpop.f32.mrf.mxu0
    %v2035 = vadd.f32 0.0, %v2034
    %v2036 = vpop.f32.mrf.mxu0
    %2037 = vdwg.mxu0
    %v2038 = vadd.f32 %v1965, %v2035
    %v2039 = vtanh.pop %v2038
    %2041 = vrot.lane.b32.xlu0 %v2039, 64
    %v2042 = vpop.permute.xlu0 %2041
    %2044 = vst.msk [vmem:[#allocation3 + $0x20] sm:$0xff] %vm775, %v2042
    %v2045 = vld [vmem:[#allocation2 + $0xa8] sm:$0xff]
    %v2046 = vsel %vm343, %v2039, 0
    %2048 = vmatprep.subr.mxu0 0.0
    %2049 = vmatpush1.msra.mxu0 0.0
    %2050 = vmatprep.subr.mxu0 0.0
    %2051 = vmatpush1.msra.mxu0 0.0
    %2052 = vmatprep.subr.mxu0 0.0
    %2053 = vmatpush1.msra.mxu0 0.0
    %2054 = vmatprep.subr.mxu0 0.0
    %2055 = vmatpush1.msra.mxu0 0.0
    %2056 = vmatprep.subr.mxu0 0.0
    %2057 = vmatpush1.msra.mxu0 0.0
    %2058 = vmatprep.subr.mxu0 0.0
    %2059 = vmatpush1.msra.mxu0 0.0
    %2060 = vmatprep.subr.mxu0 0.0
    %2061 = vmatpush1.msra.mxu0 0.0
    %2062 = vmatprep.subr.mxu0 0.0
    %2063 = vmatpush1.msra.mxu0 0.0
    %2064 = vmatprep.subr.mxu0 0.0
    %2065 = vmatpush1.msra.mxu0 %v379
    %2066 = vmatprep.subr.mxu0 0.0
    %2067 = vmatpush1.msra.mxu0 %v378
    %2068 = vmatprep.subr.mxu0 0.0
    %2069 = vmatpush1.msra.mxu0 %v377
    %2070 = vmatprep.subr.mxu0 0.0
    %2071 = vmatpush1.msra.mxu0 %v376
    %2072 = vmatprep.subr.mxu0 0.0
    %2073 = vmatpush1.msra.mxu0 %v375
    %2074 = vmatprep.subr.mxu0 0.0
    %2075 = vmatpush1.msra.mxu0 %v374
    %2076 = vmatprep.subr.mxu0 0.0
    %2077 = vmatpush1.msra.mxu0 %v373
    %2078 = vmatprep.subr.mxu0 0.0
    %2079 = vmatpush1.msra.mxu0 %v372
    %2080 = vmatprep.subr.mxu0 0.0
    %2081 = vmatpush2.msra.mxu0 0.0
    %2082 = vmatprep.subr.mxu0 0.0
    %2083 = vmatpush2.msra.mxu0 0.0
    %2084 = vmatprep.subr.mxu0 0.0
    %2085 = vmatpush2.msra.mxu0 0.0
    %2086 = vmatprep.subr.mxu0 0.0
    %2087 = vmatpush2.msra.mxu0 0.0
    %2088 = vmatprep.subr.mxu0 0.0
    %2089 = vmatpush2.msra.mxu0 0.0
    %2090 = vmatprep.subr.mxu0 0.0
    %2091 = vmatpush2.msra.mxu0 0.0
    %2092 = vmatprep.subr.mxu0 0.0
    %2093 = vmatpush2.msra.mxu0 0.0
    %2094 = vmatprep.subr.mxu0 0.0
    %2095 = vmatpush2.msra.mxu0 0.0
    %2096 = vmatprep.subr.mxu0 0.0
    %2097 = vmatpush2.msra.mxu0 0.0
    %2098 = vmatprep.subr.mxu0 0.0
    %2099 = vmatpush2.msra.mxu0 0.0
    %2100 = vmatprep.subr.mxu0 0.0
    %2101 = vmatpush2.msra.mxu0 0.0
    %2102 = vmatprep.subr.mxu0 0.0
    %2103 = vmatpush2.msra.mxu0 0.0
    %2104 = vmatprep.subr.mxu0 0.0
    %2105 = vmatpush2.msra.mxu0 0.0
    %2106 = vmatprep.subr.mxu0 0.0
    %2107 = vmatpush2.msra.mxu0 0.0
    %2108 = vmatprep.subr.mxu0 0.0
    %2109 = vmatpush2.msra.mxu0 0.0
    %2110 = vmatprep.subr.mxu0 0.0
    %2111 = vmatpush2.msra.mxu0 0.0
    %2112 = vmatprep.mubr.f32.mxu0 0.0
    %2113 = vmatmul.mubr.f32.gmra.mxu0 %v2046
    %v2114 = vpop.f32.mrf.mxu0
    %v2115 = vadd.f32 0.0, %v2114
    %v2116 = vpop.f32.mrf.mxu0
    %2117 = vdwg.mxu0
    %v2118 = vadd.f32 %v2045, %v2115
    %v2119 = vtanh.pop %v2118
    %2121 = vrot.lane.b32.xlu0 %v2119, 96
    %v2122 = vpop.permute.xlu0 %2121
    %2124 = vst.msk [vmem:[#allocation3 + $0x28] sm:$0xff] %vm53, %v2122
    %v2125 = vld [vmem:[#allocation2 + $0xb0] sm:$0xff]
    %v2126 = vsel %vm343, %v2119, 0
    %2128 = vmatprep.subr.mxu0 0.0
    %2129 = vmatpush1.msra.mxu0 0.0
    %2130 = vmatprep.subr.mxu0 0.0
    %2131 = vmatpush1.msra.mxu0 0.0
    %2132 = vmatprep.subr.mxu0 0.0
    %2133 = vmatpush1.msra.mxu0 0.0
    %2134 = vmatprep.subr.mxu0 0.0
    %2135 = vmatpush1.msra.mxu0 0.0
    %2136 = vmatprep.subr.mxu0 0.0
    %2137 = vmatpush1.msra.mxu0 0.0
    %2138 = vmatprep.subr.mxu0 0.0
    %2139 = vmatpush1.msra.mxu0 0.0
    %2140 = vmatprep.subr.mxu0 0.0
    %2141 = vmatpush1.msra.mxu0 0.0
    %2142 = vmatprep.subr.mxu0 0.0
    %2143 = vmatpush1.msra.mxu0 0.0
    %2144 = vmatprep.subr.mxu0 0.0
    %2145 = vmatpush1.msra.mxu0 %v379
    %2146 = vmatprep.subr.mxu0 0.0
    %2147 = vmatpush1.msra.mxu0 %v378
    %2148 = vmatprep.subr.mxu0 0.0
    %2149 = vmatpush1.msra.mxu0 %v377
    %2150 = vmatprep.subr.mxu0 0.0
    %2151 = vmatpush1.msra.mxu0 %v376
    %2152 = vmatprep.subr.mxu0 0.0
    %2153 = vmatpush1.msra.mxu0 %v375
    %2154 = vmatprep.subr.mxu0 0.0
    %2155 = vmatpush1.msra.mxu0 %v374
    %2156 = vmatprep.subr.mxu0 0.0
    %2157 = vmatpush1.msra.mxu0 %v373
    %2158 = vmatprep.subr.mxu0 0.0
    %2159 = vmatpush1.msra.mxu0 %v372
    %2160 = vmatprep.subr.mxu0 0.0
    %2161 = vmatpush2.msra.mxu0 0.0
    %2162 = vmatprep.subr.mxu0 0.0
    %2163 = vmatpush2.msra.mxu0 0.0
    %2164 = vmatprep.subr.mxu0 0.0
    %2165 = vmatpush2.msra.mxu0 0.0
    %2166 = vmatprep.subr.mxu0 0.0
    %2167 = vmatpush2.msra.mxu0 0.0
    %2168 = vmatprep.subr.mxu0 0.0
    %2169 = vmatpush2.msra.mxu0 0.0
    %2170 = vmatprep.subr.mxu0 0.0
    %2171 = vmatpush2.msra.mxu0 0.0
    %2172 = vmatprep.subr.mxu0 0.0
    %2173 = vmatpush2.msra.mxu0 0.0
    %2174 = vmatprep.subr.mxu0 0.0
    %2175 = vmatpush2.msra.mxu0 0.0
    %2176 = vmatprep.subr.mxu0 0.0
    %2177 = vmatpush2.msra.mxu0 0.0
    %2178 = vmatprep.subr.mxu0 0.0
    %2179 = vmatpush2.msra.mxu0 0.0
    %2180 = vmatprep.subr.mxu0 0.0
    %2181 = vmatpush2.msra.mxu0 0.0
    %2182 = vmatprep.subr.mxu0 0.0
    %2183 = vmatpush2.msra.mxu0 0.0
    %2184 = vmatprep.subr.mxu0 0.0
    %2185 = vmatpush2.msra.mxu0 0.0
    %2186 = vmatprep.subr.mxu0 0.0
    %2187 = vmatpush2.msra.mxu0 0.0
    %2188 = vmatprep.subr.mxu0 0.0
    %2189 = vmatpush2.msra.mxu0 0.0
    %2190 = vmatprep.subr.mxu0 0.0
    %2191 = vmatpush2.msra.mxu0 0.0
    %2192 = vmatprep.mubr.f32.mxu0 0.0
    %2193 = vmatmul.mubr.f32.gmra.mxu0 %v2126
    %v2194 = vpop.f32.mrf.mxu0
    %v2195 = vadd.f32 0.0, %v2194
    %v2196 = vpop.f32.mrf.mxu0
    %2197 = vdwg.mxu0
    %v2198 = vadd.f32 %v2125, %v2195
    %v2199 = vtanh.pop %v2198
    %2200 = vst.msk [vmem:[#allocation3 + $0x28] sm:$0xff] %vm612, %v2199
    %v2201 = vld [vmem:[#allocation2 + $0xb8] sm:$0xff]
    %v2203 = vsel %vm343, %v2199, 0
    %2205 = vmatprep.subr.mxu0 0.0
    %2206 = vmatpush1.msra.mxu0 0.0
    %2207 = vmatprep.subr.mxu0 0.0
    %2208 = vmatpush1.msra.mxu0 0.0
    %2209 = vmatprep.subr.mxu0 0.0
    %2210 = vmatpush1.msra.mxu0 0.0
    %2211 = vmatprep.subr.mxu0 0.0
    %2212 = vmatpush1.msra.mxu0 0.0
    %2213 = vmatprep.subr.mxu0 0.0
    %2214 = vmatpush1.msra.mxu0 0.0
    %2215 = vmatprep.subr.mxu0 0.0
    %2216 = vmatpush1.msra.mxu0 0.0
    %2217 = vmatprep.subr.mxu0 0.0
    %2218 = vmatpush1.msra.mxu0 0.0
    %2219 = vmatprep.subr.mxu0 0.0
    %2220 = vmatpush1.msra.mxu0 0.0
    %2221 = vmatprep.subr.mxu0 0.0
    %2222 = vmatpush1.msra.mxu0 %v379
    %2223 = vmatprep.subr.mxu0 0.0
    %2224 = vmatpush1.msra.mxu0 %v378
    %2225 = vmatprep.subr.mxu0 0.0
    %2226 = vmatpush1.msra.mxu0 %v377
    %2227 = vmatprep.subr.mxu0 0.0
    %2228 = vmatpush1.msra.mxu0 %v376
    %2229 = vmatprep.subr.mxu0 0.0
    %2230 = vmatpush1.msra.mxu0 %v375
    %2231 = vmatprep.subr.mxu0 0.0
    %2232 = vmatpush1.msra.mxu0 %v374
    %2233 = vmatprep.subr.mxu0 0.0
    %2234 = vmatpush1.msra.mxu0 %v373
    %2235 = vmatprep.subr.mxu0 0.0
    %2236 = vmatpush1.msra.mxu0 %v372
    %2237 = vmatprep.subr.mxu0 0.0
    %2238 = vmatpush2.msra.mxu0 0.0
    %2239 = vmatprep.subr.mxu0 0.0
    %2240 = vmatpush2.msra.mxu0 0.0
    %2241 = vmatprep.subr.mxu0 0.0
    %2242 = vmatpush2.msra.mxu0 0.0
    %2243 = vmatprep.subr.mxu0 0.0
    %2244 = vmatpush2.msra.mxu0 0.0
    %2245 = vmatprep.subr.mxu0 0.0
    %2246 = vmatpush2.msra.mxu0 0.0
    %2247 = vmatprep.subr.mxu0 0.0
    %2248 = vmatpush2.msra.mxu0 0.0
    %2249 = vmatprep.subr.mxu0 0.0
    %2250 = vmatpush2.msra.mxu0 0.0
    %2251 = vmatprep.subr.mxu0 0.0
    %2252 = vmatpush2.msra.mxu0 0.0
    %2253 = vmatprep.subr.mxu0 0.0
    %2254 = vmatpush2.msra.mxu0 0.0
    %2255 = vmatprep.subr.mxu0 0.0
    %2256 = vmatpush2.msra.mxu0 0.0
    %2257 = vmatprep.subr.mxu0 0.0
    %2258 = vmatpush2.msra.mxu0 0.0
    %2259 = vmatprep.subr.mxu0 0.0
    %2260 = vmatpush2.msra.mxu0 0.0
    %2261 = vmatprep.subr.mxu0 0.0
    %2262 = vmatpush2.msra.mxu0 0.0
    %2263 = vmatprep.subr.mxu0 0.0
    %2264 = vmatpush2.msra.mxu0 0.0
    %2265 = vmatprep.subr.mxu0 0.0
    %2266 = vmatpush2.msra.mxu0 0.0
    %2267 = vmatprep.subr.mxu0 0.0
    %2268 = vmatpush2.msra.mxu0 0.0
    %2269 = vmatprep.mubr.f32.mxu0 0.0
    %2270 = vmatmul.mubr.f32.gmra.mxu0 %v2203
    %v2271 = vpop.f32.mrf.mxu0
    %v2272 = vadd.f32 0.0, %v2271
    %v2273 = vpop.f32.mrf.mxu0
    %2274 = vdwg.mxu0
    %v2275 = vadd.f32 %v2201, %v2272
    %v2276 = vtanh.pop %v2275
    %2278 = vrot.lane.b32.xlu0 %v2276, 32
    %v2279 = vpop.permute.xlu0 %2278
    %2281 = vst.msk [vmem:[#allocation3 + $0x28] sm:$0xff] %vm694, %v2279
    %v2282 = vld [vmem:[#allocation2 + $0xc0] sm:$0xff]
    %v2283 = vsel %vm343, %v2276, 0
    %2285 = vmatprep.subr.mxu0 0.0
    %2286 = vmatpush1.msra.mxu0 0.0
    %2287 = vmatprep.subr.mxu0 0.0
    %2288 = vmatpush1.msra.mxu0 0.0
    %2289 = vmatprep.subr.mxu0 0.0
    %2290 = vmatpush1.msra.mxu0 0.0
    %2291 = vmatprep.subr.mxu0 0.0
    %2292 = vmatpush1.msra.mxu0 0.0
    %2293 = vmatprep.subr.mxu0 0.0
    %2294 = vmatpush1.msra.mxu0 0.0
    %2295 = vmatprep.subr.mxu0 0.0
    %2296 = vmatpush1.msra.mxu0 0.0
    %2297 = vmatprep.subr.mxu0 0.0
    %2298 = vmatpush1.msra.mxu0 0.0
    %2299 = vmatprep.subr.mxu0 0.0
    %2300 = vmatpush1.msra.mxu0 0.0
    %2301 = vmatprep.subr.mxu0 0.0
    %2302 = vmatpush1.msra.mxu0 %v379
    %2303 = vmatprep.subr.mxu0 0.0
    %2304 = vmatpush1.msra.mxu0 %v378
    %2305 = vmatprep.subr.mxu0 0.0
    %2306 = vmatpush1.msra.mxu0 %v377
    %2307 = vmatprep.subr.mxu0 0.0
    %2308 = vmatpush1.msra.mxu0 %v376
    %2309 = vmatprep.subr.mxu0 0.0
    %2310 = vmatpush1.msra.mxu0 %v375
    %2311 = vmatprep.subr.mxu0 0.0
    %2312 = vmatpush1.msra.mxu0 %v374
    %2313 = vmatprep.subr.mxu0 0.0
    %2314 = vmatpush1.msra.mxu0 %v373
    %2315 = vmatprep.subr.mxu0 0.0
    %2316 = vmatpush1.msra.mxu0 %v372
    %2317 = vmatprep.subr.mxu0 0.0
    %2318 = vmatpush2.msra.mxu0 0.0
    %2319 = vmatprep.subr.mxu0 0.0
    %2320 = vmatpush2.msra.mxu0 0.0
    %2321 = vmatprep.subr.mxu0 0.0
    %2322 = vmatpush2.msra.mxu0 0.0
    %2323 = vmatprep.subr.mxu0 0.0
    %2324 = vmatpush2.msra.mxu0 0.0
    %2325 = vmatprep.subr.mxu0 0.0
    %2326 = vmatpush2.msra.mxu0 0.0
    %2327 = vmatprep.subr.mxu0 0.0
    %2328 = vmatpush2.msra.mxu0 0.0
    %2329 = vmatprep.subr.mxu0 0.0
    %2330 = vmatpush2.msra.mxu0 0.0
    %2331 = vmatprep.subr.mxu0 0.0
    %2332 = vmatpush2.msra.mxu0 0.0
    %2333 = vmatprep.subr.mxu0 0.0
    %2334 = vmatpush2.msra.mxu0 0.0
    %2335 = vmatprep.subr.mxu0 0.0
    %2336 = vmatpush2.msra.mxu0 0.0
    %2337 = vmatprep.subr.mxu0 0.0
    %2338 = vmatpush2.msra.mxu0 0.0
    %2339 = vmatprep.subr.mxu0 0.0
    %2340 = vmatpush2.msra.mxu0 0.0
    %2341 = vmatprep.subr.mxu0 0.0
    %2342 = vmatpush2.msra.mxu0 0.0
    %2343 = vmatprep.subr.mxu0 0.0
    %2344 = vmatpush2.msra.mxu0 0.0
    %2345 = vmatprep.subr.mxu0 0.0
    %2346 = vmatpush2.msra.mxu0 0.0
    %2347 = vmatprep.subr.mxu0 0.0
    %2348 = vmatpush2.msra.mxu0 0.0
    %2349 = vmatprep.mubr.f32.mxu0 0.0
    %2350 = vmatmul.mubr.f32.gmra.mxu0 %v2283
    %v2351 = vpop.f32.mrf.mxu0
    %v2352 = vadd.f32 0.0, %v2351
    %v2353 = vpop.f32.mrf.mxu0
    %2354 = vdwg.mxu0
    %v2355 = vadd.f32 %v2282, %v2352
    %v2356 = vtanh.pop %v2355
    %2358 = vrot.lane.b32.xlu0 %v2356, 64
    %v2359 = vpop.permute.xlu0 %2358
    %2361 = vst.msk [vmem:[#allocation3 + $0x28] sm:$0xff] %vm775, %v2359
    %v2362 = vld [vmem:[#allocation2 + $0xc8] sm:$0xff]
    %v2363 = vsel %vm343, %v2356, 0
    %2365 = vmatprep.subr.mxu0 0.0
    %2366 = vmatpush1.msra.mxu0 0.0
    %2367 = vmatprep.subr.mxu0 0.0
    %2368 = vmatpush1.msra.mxu0 0.0
    %2369 = vmatprep.subr.mxu0 0.0
    %2370 = vmatpush1.msra.mxu0 0.0
    %2371 = vmatprep.subr.mxu0 0.0
    %2372 = vmatpush1.msra.mxu0 0.0
    %2373 = vmatprep.subr.mxu0 0.0
    %2374 = vmatpush1.msra.mxu0 0.0
    %2375 = vmatprep.subr.mxu0 0.0
    %2376 = vmatpush1.msra.mxu0 0.0
    %2377 = vmatprep.subr.mxu0 0.0
    %2378 = vmatpush1.msra.mxu0 0.0
    %2379 = vmatprep.subr.mxu0 0.0
    %2380 = vmatpush1.msra.mxu0 0.0
    %2381 = vmatprep.subr.mxu0 0.0
    %2382 = vmatpush1.msra.mxu0 %v379
    %2383 = vmatprep.subr.mxu0 0.0
    %2384 = vmatpush1.msra.mxu0 %v378
    %2385 = vmatprep.subr.mxu0 0.0
    %2386 = vmatpush1.msra.mxu0 %v377
    %2387 = vmatprep.subr.mxu0 0.0
    %2388 = vmatpush1.msra.mxu0 %v376
    %2389 = vmatprep.subr.mxu0 0.0
    %2390 = vmatpush1.msra.mxu0 %v375
    %2391 = vmatprep.subr.mxu0 0.0
    %2392 = vmatpush1.msra.mxu0 %v374
    %2393 = vmatprep.subr.mxu0 0.0
    %2394 = vmatpush1.msra.mxu0 %v373
    %2395 = vmatprep.subr.mxu0 0.0
    %2396 = vmatpush1.msra.mxu0 %v372
    %2397 = vmatprep.subr.mxu0 0.0
    %2398 = vmatpush2.msra.mxu0 0.0
    %2399 = vmatprep.subr.mxu0 0.0
    %2400 = vmatpush2.msra.mxu0 0.0
    %2401 = vmatprep.subr.mxu0 0.0
    %2402 = vmatpush2.msra.mxu0 0.0
    %2403 = vmatprep.subr.mxu0 0.0
    %2404 = vmatpush2.msra.mxu0 0.0
    %2405 = vmatprep.subr.mxu0 0.0
    %2406 = vmatpush2.msra.mxu0 0.0
    %2407 = vmatprep.subr.mxu0 0.0
    %2408 = vmatpush2.msra.mxu0 0.0
    %2409 = vmatprep.subr.mxu0 0.0
    %2410 = vmatpush2.msra.mxu0 0.0
    %2411 = vmatprep.subr.mxu0 0.0
    %2412 = vmatpush2.msra.mxu0 0.0
    %2413 = vmatprep.subr.mxu0 0.0
    %2414 = vmatpush2.msra.mxu0 0.0
    %2415 = vmatprep.subr.mxu0 0.0
    %2416 = vmatpush2.msra.mxu0 0.0
    %2417 = vmatprep.subr.mxu0 0.0
    %2418 = vmatpush2.msra.mxu0 0.0
    %2419 = vmatprep.subr.mxu0 0.0
    %2420 = vmatpush2.msra.mxu0 0.0
    %2421 = vmatprep.subr.mxu0 0.0
    %2422 = vmatpush2.msra.mxu0 0.0
    %2423 = vmatprep.subr.mxu0 0.0
    %2424 = vmatpush2.msra.mxu0 0.0
    %2425 = vmatprep.subr.mxu0 0.0
    %2426 = vmatpush2.msra.mxu0 0.0
    %2427 = vmatprep.subr.mxu0 0.0
    %2428 = vmatpush2.msra.mxu0 0.0
    %2429 = vmatprep.mubr.f32.mxu0 0.0
    %2430 = vmatmul.mubr.f32.gmra.mxu0 %v2363
    %v2431 = vpop.f32.mrf.mxu0
    %v2432 = vadd.f32 0.0, %v2431
    %v2433 = vpop.f32.mrf.mxu0
    %2434 = vdwg.mxu0
    %v2435 = vadd.f32 %v2362, %v2432
    %v2436 = vtanh.pop %v2435
    %2438 = vrot.lane.b32.xlu0 %v2436, 96
    %v2439 = vpop.permute.xlu0 %2438
    %2441 = vst.msk [vmem:[#allocation3 + $0x30] sm:$0xff] %vm53, %v2439
    %v2442 = vld [vmem:[#allocation2 + $0xd0] sm:$0xff]
    %v2443 = vsel %vm343, %v2436, 0
    %2445 = vmatprep.subr.mxu0 0.0
    %2446 = vmatpush1.msra.mxu0 0.0
    %2447 = vmatprep.subr.mxu0 0.0
    %2448 = vmatpush1.msra.mxu0 0.0
    %2449 = vmatprep.subr.mxu0 0.0
    %2450 = vmatpush1.msra.mxu0 0.0
    %2451 = vmatprep.subr.mxu0 0.0
    %2452 = vmatpush1.msra.mxu0 0.0
    %2453 = vmatprep.subr.mxu0 0.0
    %2454 = vmatpush1.msra.mxu0 0.0
    %2455 = vmatprep.subr.mxu0 0.0
    %2456 = vmatpush1.msra.mxu0 0.0
    %2457 = vmatprep.subr.mxu0 0.0
    %2458 = vmatpush1.msra.mxu0 0.0
    %2459 = vmatprep.subr.mxu0 0.0
    %2460 = vmatpush1.msra.mxu0 0.0
    %2461 = vmatprep.subr.mxu0 0.0
    %2462 = vmatpush1.msra.mxu0 %v379
    %2463 = vmatprep.subr.mxu0 0.0
    %2464 = vmatpush1.msra.mxu0 %v378
    %2465 = vmatprep.subr.mxu0 0.0
    %2466 = vmatpush1.msra.mxu0 %v377
    %2467 = vmatprep.subr.mxu0 0.0
    %2468 = vmatpush1.msra.mxu0 %v376
    %2469 = vmatprep.subr.mxu0 0.0
    %2470 = vmatpush1.msra.mxu0 %v375
    %2471 = vmatprep.subr.mxu0 0.0
    %2472 = vmatpush1.msra.mxu0 %v374
    %2473 = vmatprep.subr.mxu0 0.0
    %2474 = vmatpush1.msra.mxu0 %v373
    %2475 = vmatprep.subr.mxu0 0.0
    %2476 = vmatpush1.msra.mxu0 %v372
    %2477 = vmatprep.subr.mxu0 0.0
    %2478 = vmatpush2.msra.mxu0 0.0
    %2479 = vmatprep.subr.mxu0 0.0
    %2480 = vmatpush2.msra.mxu0 0.0
    %2481 = vmatprep.subr.mxu0 0.0
    %2482 = vmatpush2.msra.mxu0 0.0
    %2483 = vmatprep.subr.mxu0 0.0
    %2484 = vmatpush2.msra.mxu0 0.0
    %2485 = vmatprep.subr.mxu0 0.0
    %2486 = vmatpush2.msra.mxu0 0.0
    %2487 = vmatprep.subr.mxu0 0.0
    %2488 = vmatpush2.msra.mxu0 0.0
    %2489 = vmatprep.subr.mxu0 0.0
    %2490 = vmatpush2.msra.mxu0 0.0
    %2491 = vmatprep.subr.mxu0 0.0
    %2492 = vmatpush2.msra.mxu0 0.0
    %2493 = vmatprep.subr.mxu0 0.0
    %2494 = vmatpush2.msra.mxu0 0.0
    %2495 = vmatprep.subr.mxu0 0.0
    %2496 = vmatpush2.msra.mxu0 0.0
    %2497 = vmatprep.subr.mxu0 0.0
    %2498 = vmatpush2.msra.mxu0 0.0
    %2499 = vmatprep.subr.mxu0 0.0
    %2500 = vmatpush2.msra.mxu0 0.0
    %2501 = vmatprep.subr.mxu0 0.0
    %2502 = vmatpush2.msra.mxu0 0.0
    %2503 = vmatprep.subr.mxu0 0.0
    %2504 = vmatpush2.msra.mxu0 0.0
    %2505 = vmatprep.subr.mxu0 0.0
    %2506 = vmatpush2.msra.mxu0 0.0
    %2507 = vmatprep.subr.mxu0 0.0
    %2508 = vmatpush2.msra.mxu0 0.0
    %2509 = vmatprep.mubr.f32.mxu0 0.0
    %2510 = vmatmul.mubr.f32.gmra.mxu0 %v2443
    %v2511 = vpop.f32.mrf.mxu0
    %v2512 = vadd.f32 0.0, %v2511
    %v2513 = vpop.f32.mrf.mxu0
    %2514 = vdwg.mxu0
    %v2515 = vadd.f32 %v2442, %v2512
    %v2516 = vtanh.pop %v2515
    %2517 = vst.msk [vmem:[#allocation3 + $0x30] sm:$0xff] %vm612, %v2516
    %v2518 = vld [vmem:[#allocation2 + $0xd8] sm:$0xff]
    %v2520 = vsel %vm343, %v2516, 0
    %2522 = vmatprep.subr.mxu0 0.0
    %2523 = vmatpush1.msra.mxu0 0.0
    %2524 = vmatprep.subr.mxu0 0.0
    %2525 = vmatpush1.msra.mxu0 0.0
    %2526 = vmatprep.subr.mxu0 0.0
    %2527 = vmatpush1.msra.mxu0 0.0
    %2528 = vmatprep.subr.mxu0 0.0
    %2529 = vmatpush1.msra.mxu0 0.0
    %2530 = vmatprep.subr.mxu0 0.0
    %2531 = vmatpush1.msra.mxu0 0.0
    %2532 = vmatprep.subr.mxu0 0.0
    %2533 = vmatpush1.msra.mxu0 0.0
    %2534 = vmatprep.subr.mxu0 0.0
    %2535 = vmatpush1.msra.mxu0 0.0
    %2536 = vmatprep.subr.mxu0 0.0
    %2537 = vmatpush1.msra.mxu0 0.0
    %2538 = vmatprep.subr.mxu0 0.0
    %2539 = vmatpush1.msra.mxu0 %v379
    %2540 = vmatprep.subr.mxu0 0.0
    %2541 = vmatpush1.msra.mxu0 %v378
    %2542 = vmatprep.subr.mxu0 0.0
    %2543 = vmatpush1.msra.mxu0 %v377
    %2544 = vmatprep.subr.mxu0 0.0
    %2545 = vmatpush1.msra.mxu0 %v376
    %2546 = vmatprep.subr.mxu0 0.0
    %2547 = vmatpush1.msra.mxu0 %v375
    %2548 = vmatprep.subr.mxu0 0.0
    %2549 = vmatpush1.msra.mxu0 %v374
    %2550 = vmatprep.subr.mxu0 0.0
    %2551 = vmatpush1.msra.mxu0 %v373
    %2552 = vmatprep.subr.mxu0 0.0
    %2553 = vmatpush1.msra.mxu0 %v372
    %2554 = vmatprep.subr.mxu0 0.0
    %2555 = vmatpush2.msra.mxu0 0.0
    %2556 = vmatprep.subr.mxu0 0.0
    %2557 = vmatpush2.msra.mxu0 0.0
    %2558 = vmatprep.subr.mxu0 0.0
    %2559 = vmatpush2.msra.mxu0 0.0
    %2560 = vmatprep.subr.mxu0 0.0
    %2561 = vmatpush2.msra.mxu0 0.0
    %2562 = vmatprep.subr.mxu0 0.0
    %2563 = vmatpush2.msra.mxu0 0.0
    %2564 = vmatprep.subr.mxu0 0.0
    %2565 = vmatpush2.msra.mxu0 0.0
    %2566 = vmatprep.subr.mxu0 0.0
    %2567 = vmatpush2.msra.mxu0 0.0
    %2568 = vmatprep.subr.mxu0 0.0
    %2569 = vmatpush2.msra.mxu0 0.0
    %2570 = vmatprep.subr.mxu0 0.0
    %2571 = vmatpush2.msra.mxu0 0.0
    %2572 = vmatprep.subr.mxu0 0.0
    %2573 = vmatpush2.msra.mxu0 0.0
    %2574 = vmatprep.subr.mxu0 0.0
    %2575 = vmatpush2.msra.mxu0 0.0
    %2576 = vmatprep.subr.mxu0 0.0
    %2577 = vmatpush2.msra.mxu0 0.0
    %2578 = vmatprep.subr.mxu0 0.0
    %2579 = vmatpush2.msra.mxu0 0.0
    %2580 = vmatprep.subr.mxu0 0.0
    %2581 = vmatpush2.msra.mxu0 0.0
    %2582 = vmatprep.subr.mxu0 0.0
    %2583 = vmatpush2.msra.mxu0 0.0
    %2584 = vmatprep.subr.mxu0 0.0
    %2585 = vmatpush2.msra.mxu0 0.0
    %2586 = vmatprep.mubr.f32.mxu0 0.0
    %2587 = vmatmul.mubr.f32.gmra.mxu0 %v2520
    %v2588 = vpop.f32.mrf.mxu0
    %v2589 = vadd.f32 0.0, %v2588
    %v2590 = vpop.f32.mrf.mxu0
    %2591 = vdwg.mxu0
    %v2592 = vadd.f32 %v2518, %v2589
    %v2593 = vtanh.pop %v2592
    %2595 = vrot.lane.b32.xlu0 %v2593, 32
    %v2596 = vpop.permute.xlu0 %2595
    %2598 = vst.msk [vmem:[#allocation3 + $0x30] sm:$0xff] %vm694, %v2596
    %v2599 = vsel %vm343, %v2593, 0
    %2601 = vmatprep.subr.mxu0 0.0
    %2602 = vmatpush1.msra.mxu0 0.0
    %2603 = vmatprep.subr.mxu0 0.0
    %2604 = vmatpush1.msra.mxu0 0.0
    %2605 = vmatprep.subr.mxu0 0.0
    %2606 = vmatpush1.msra.mxu0 0.0
    %2607 = vmatprep.subr.mxu0 0.0
    %2608 = vmatpush1.msra.mxu0 0.0
    %2609 = vmatprep.subr.mxu0 0.0
    %2610 = vmatpush1.msra.mxu0 0.0
    %2611 = vmatprep.subr.mxu0 0.0
    %2612 = vmatpush1.msra.mxu0 0.0
    %2613 = vmatprep.subr.mxu0 0.0
    %2614 = vmatpush1.msra.mxu0 0.0
    %2615 = vmatprep.subr.mxu0 0.0
    %2616 = vmatpush1.msra.mxu0 0.0
    %2617 = vmatprep.subr.mxu0 0.0
    %2618 = vmatpush1.msra.mxu0 %v379
    %2619 = vmatprep.subr.mxu0 0.0
    %2620 = vmatpush1.msra.mxu0 %v378
    %2621 = vmatprep.subr.mxu0 0.0
    %2622 = vmatpush1.msra.mxu0 %v377
    %2623 = vmatprep.subr.mxu0 0.0
    %2624 = vmatpush1.msra.mxu0 %v376
    %2625 = vmatprep.subr.mxu0 0.0
    %2626 = vmatpush1.msra.mxu0 %v375
    %2627 = vmatprep.subr.mxu0 0.0
    %2628 = vmatpush1.msra.mxu0 %v374
    %2629 = vmatprep.subr.mxu0 0.0
    %2630 = vmatpush1.msra.mxu0 %v373
    %2631 = vmatprep.subr.mxu0 0.0
    %2632 = vmatpush1.msra.mxu0 %v372
    %2633 = vmatprep.subr.mxu0 0.0
    %2634 = vmatpush2.msra.mxu0 0.0
    %2635 = vmatprep.subr.mxu0 0.0
    %2636 = vmatpush2.msra.mxu0 0.0
    %2637 = vmatprep.subr.mxu0 0.0
    %2638 = vmatpush2.msra.mxu0 0.0
    %2639 = vmatprep.subr.mxu0 0.0
    %2640 = vmatpush2.msra.mxu0 0.0
    %2641 = vmatprep.subr.mxu0 0.0
    %2642 = vmatpush2.msra.mxu0 0.0
    %2643 = vmatprep.subr.mxu0 0.0
    %2644 = vmatpush2.msra.mxu0 0.0
    %2645 = vmatprep.subr.mxu0 0.0
    %2646 = vmatpush2.msra.mxu0 0.0
    %2647 = vmatprep.subr.mxu0 0.0
    %2648 = vmatpush2.msra.mxu0 0.0
    %2649 = vmatprep.subr.mxu0 0.0
    %2650 = vmatpush2.msra.mxu0 0.0
    %2651 = vmatprep.subr.mxu0 0.0
    %2652 = vmatpush2.msra.mxu0 0.0
    %2653 = vmatprep.subr.mxu0 0.0
    %2654 = vmatpush2.msra.mxu0 0.0
    %2655 = vmatprep.subr.mxu0 0.0
    %2656 = vmatpush2.msra.mxu0 0.0
    %2657 = vmatprep.subr.mxu0 0.0
    %2658 = vmatpush2.msra.mxu0 0.0
    %2659 = vmatprep.subr.mxu0 0.0
    %2660 = vmatpush2.msra.mxu0 0.0
    %2661 = vmatprep.subr.mxu0 0.0
    %2662 = vmatpush2.msra.mxu0 0.0
    %2663 = vmatprep.subr.mxu0 0.0
    %2664 = vmatpush2.msra.mxu0 0.0
    %2665 = vmatprep.mubr.f32.mxu0 0.0
    %2666 = vmatmul.mubr.f32.gmra.mxu0 %v2599
    %v2667 = vpop.f32.mrf.mxu0
    %v2668 = vadd.f32 0.0, %v2667
    %v2669 = vpop.f32.mrf.mxu0
    %2670 = vdwg.mxu0
    %v2671 = vtanh.pop %v2668
    %2673 = vrot.lane.b32.xlu0 %v2671, 64
    %v2674 = vpop.permute.xlu0 %2673
    %2676 = vst.msk [vmem:[#allocation3 + $0x30] sm:$0xff] %vm775, %v2674
    %v2677 = vld [vmem:[#allocation3] sm:$0xff]
    %v2678 = vld [vmem:[#allocation3 + $0x8] sm:$0xff]
    %v2679 = vld [vmem:[#allocation3 + $0x10] sm:$0xff]
    %v2680 = vld [vmem:[#allocation3 + $0x18] sm:$0xff]
    %v2681 = vld [vmem:[#allocation3 + $0x20] sm:$0xff]
    %v2682 = vld [vmem:[#allocation3 + $0x28] sm:$0xff]
    %v2683 = vld [vmem:[#allocation3 + $0x30] sm:$0xff]
    %v2684 = vld [vmem:[%s3] sm:$0xff]
    %v2685 = vld [vmem:[%s3 + $0x8] sm:$0xff]
    %v2686 = vld [vmem:[%s3 + $0x10] sm:$0xff]
    %v2687 = vld [vmem:[%s3 + $0x18] sm:$0xff]
    %v2688 = vld [vmem:[%s3 + $0x20] sm:$0xff]
    %v2689 = vld [vmem:[%s3 + $0x28] sm:$0xff]
    %v2690 = vld [vmem:[%s3 + $0x30] sm:$0xff]
    %v2691 = vld [vmem:[%s3 + $0x38] sm:$0xff]
    %v2692 = vld [vmem:[%s3 + $0x40] sm:$0xff]
    %v2693 = vld [vmem:[%s3 + $0x48] sm:$0xff]
    %v2694 = vld [vmem:[%s3 + $0x50] sm:$0xff]
    %v2695 = vld [vmem:[%s3 + $0x58] sm:$0xff]
    %v2696 = vld [vmem:[%s3 + $0x60] sm:$0xff]
    %v2697 = vld [vmem:[%s3 + $0x68] sm:$0xff]
    %v2698 = vld [vmem:[%s3 + $0x70] sm:$0xff]
    %v2699 = vld [vmem:[%s3 + $0x78] sm:$0xff]
    %v2700 = vld [vmem:[%s3 + $0x80] sm:$0xff]
    %v2701 = vld [vmem:[%s3 + $0x88] sm:$0xff]
    %v2702 = vld [vmem:[%s3 + $0x90] sm:$0xff]
    %v2703 = vld [vmem:[%s3 + $0x98] sm:$0xff]
    %v2704 = vld [vmem:[%s3 + $0xa0] sm:$0xff]
    %v2705 = vld [vmem:[%s3 + $0xa8] sm:$0xff]
    %v2706 = vld [vmem:[%s3 + $0xb0] sm:$0xff]
    %v2707 = vld [vmem:[%s3 + $0xb8] sm:$0xff]
    %v2708 = vld [vmem:[%s3 + $0xc0] sm:$0xff]
    %v2709 = vld [vmem:[%s3 + $0xc8] sm:$0xff]
    %v2710 = vld [vmem:[%s3 + $0xd0] sm:$0xff]
    %v2711 = vld [vmem:[%s3 + $0xd8] sm:$0xff]
    %v2712 = vld [vmem:[%s3 + $0xe0] sm:$0xff]
    %v2713 = vld [vmem:[%s3 + $0xe8] sm:$0xff]
    %v2714 = vld [vmem:[%s3 + $0xf0] sm:$0xff]
    %v2715 = vld [vmem:[%s3 + $0xf8] sm:$0xff]
    %v2716 = vld [vmem:[%s3 + $0x100] sm:$0xff]
    %v2717 = vld [vmem:[%s3 + $0x108] sm:$0xff]
    %v2718 = vld [vmem:[%s3 + $0x110] sm:$0xff]
    %v2719 = vld [vmem:[%s3 + $0x118] sm:$0xff]
    %v2720 = vld [vmem:[%s3 + $0x120] sm:$0xff]
    %v2721 = vld [vmem:[%s3 + $0x128] sm:$0xff]
    %v2722 = vld [vmem:[%s3 + $0x130] sm:$0xff]
    %v2723 = vld [vmem:[%s3 + $0x138] sm:$0xff]
    %v2724 = vld [vmem:[%s3 + $0x140] sm:$0xff]
    %v2725 = vld [vmem:[%s3 + $0x148] sm:$0xff]
    %v2726 = vld [vmem:[%s3 + $0x150] sm:$0xff]
    %v2727 = vld [vmem:[%s3 + $0x158] sm:$0xff]
    %v2728 = vld [vmem:[%s3 + $0x160] sm:$0xff]
    %v2729 = vld [vmem:[%s3 + $0x168] sm:$0xff]
    %v2730 = vld [vmem:[%s3 + $0x170] sm:$0xff]
    %v2731 = vld [vmem:[%s3 + $0x178] sm:$0xff]
    %v2732 = vld [vmem:[%s3 + $0x180] sm:$0xff]
    %v2733 = vld [vmem:[%s3 + $0x188] sm:$0xff]
    %v2734 = vld [vmem:[%s3 + $0x190] sm:$0xff]
    %v2735 = vld [vmem:[%s3 + $0x198] sm:$0xff]
    %v2736 = vld [vmem:[%s3 + $0x1a0] sm:$0xff]
    %v2737 = vld [vmem:[%s3 + $0x1a8] sm:$0xff]
    %v2738 = vld [vmem:[%s3 + $0x1b0] sm:$0xff]
    %v2739 = vld [vmem:[%s3 + $0x1b8] sm:$0xff]
    %v2740 = vld [vmem:[%s3 + $0x1c0] sm:$0xff]
    %v2741 = vld [vmem:[%s3 + $0x1c8] sm:$0xff]
    %v2742 = vld [vmem:[%s3 + $0x1d0] sm:$0xff]
    %v2743 = vld [vmem:[%s3 + $0x1d8] sm:$0xff]
    %v2744 = vld [vmem:[%s3 + $0x1e0] sm:$0xff]
    %v2745 = vld [vmem:[%s3 + $0x1e8] sm:$0xff]
    %v2746 = vld [vmem:[%s3 + $0x1f0] sm:$0xff]
    %v2747 = vld [vmem:[%s3 + $0x1f8] sm:$0xff]
    %v2748 = vld [vmem:[%s3 + $0x200] sm:$0xff]
    %v2749 = vld [vmem:[%s3 + $0x208] sm:$0xff]
    %v2750 = vld [vmem:[%s3 + $0x210] sm:$0xff]
    %v2751 = vld [vmem:[%s3 + $0x218] sm:$0xff]
    %v2752 = vld [vmem:[%s3 + $0x220] sm:$0xff]
    %v2753 = vld [vmem:[%s3 + $0x228] sm:$0xff]
    %v2754 = vld [vmem:[%s3 + $0x230] sm:$0xff]
    %v2755 = vld [vmem:[%s3 + $0x238] sm:$0xff]
    %v2756 = vld [vmem:[%s3 + $0x240] sm:$0xff]
    %v2757 = vld [vmem:[%s3 + $0x248] sm:$0xff]
    %v2758 = vld [vmem:[%s3 + $0x250] sm:$0xff]
    %v2759 = vld [vmem:[%s3 + $0x258] sm:$0xff]
    %v2760 = vld [vmem:[%s3 + $0x260] sm:$0xff]
    %v2761 = vld [vmem:[%s3 + $0x268] sm:$0xff]
    %v2762 = vld [vmem:[%s3 + $0x270] sm:$0xff]
    %v2763 = vld [vmem:[%s3 + $0x278] sm:$0xff]
    %v2764 = vld [vmem:[%s3 + $0x280] sm:$0xff]
    %v2765 = vld [vmem:[%s3 + $0x288] sm:$0xff]
    %v2766 = vld [vmem:[%s3 + $0x290] sm:$0xff]
    %v2767 = vld [vmem:[%s3 + $0x298] sm:$0xff]
    %v2768 = vld [vmem:[%s3 + $0x2a0] sm:$0xff]
    %v2769 = vld [vmem:[%s3 + $0x2a8] sm:$0xff]
    %v2770 = vld [vmem:[%s3 + $0x2b0] sm:$0xff]
    %v2771 = vld [vmem:[%s3 + $0x2b8] sm:$0xff]
    %v2772 = vld [vmem:[%s3 + $0x2c0] sm:$0xff]
    %v2773 = vld [vmem:[%s3 + $0x2c8] sm:$0xff]
    %v2774 = vld [vmem:[%s3 + $0x2d0] sm:$0xff]
    %v2775 = vld [vmem:[%s3 + $0x2d8] sm:$0xff]
    %v2776 = vld [vmem:[%s3 + $0x2e0] sm:$0xff]
    %v2777 = vld [vmem:[%s3 + $0x2e8] sm:$0xff]
    %v2778 = vld [vmem:[%s3 + $0x2f0] sm:$0xff]
    %v2779 = vld [vmem:[%s3 + $0x2f8] sm:$0xff]
    %v2780 = vld [vmem:[%s3 + $0x300] sm:$0xff]
    %v2781 = vld [vmem:[%s3 + $0x308] sm:$0xff]
    %v2782 = vld [vmem:[%s3 + $0x310] sm:$0xff]
    %v2783 = vld [vmem:[%s3 + $0x318] sm:$0xff]
    %v2784 = vld [vmem:[%s3 + $0x320] sm:$0xff]
    %v2785 = vld [vmem:[%s3 + $0x328] sm:$0xff]
    %v2786 = vld [vmem:[%s3 + $0x330] sm:$0xff]
    %v2787 = vld [vmem:[%s3 + $0x338] sm:$0xff]
    %v2788 = vld [vmem:[%s3 + $0x340] sm:$0xff]
    %v2789 = vld [vmem:[%s3 + $0x348] sm:$0xff]
    %v2790 = vld [vmem:[%s3 + $0x350] sm:$0xff]
    %v2791 = vld [vmem:[%s3 + $0x358] sm:$0xff]
    %v2792 = vld [vmem:[%s3 + $0x360] sm:$0xff]
    %v2793 = vld [vmem:[%s3 + $0x368] sm:$0xff]
    %v2794 = vld [vmem:[%s3 + $0x370] sm:$0xff]
    %v2795 = vld [vmem:[%s3 + $0x378] sm:$0xff]
    %v2796 = vld [vmem:[%s4] sm:$0x1]
    %v2798 = vlaneseq
    %v2799 = vshrl.u32 %v2798, 7
    %v2800 = vsub.s32 0, %v2799
    %v2801 = vrot.slane %v2796, %v2800
    %2803 = vmatprep.subr.mxu0 0.0
    %2804 = vmatpush1.msra.mxu0 %v2699
    %2805 = vmatprep.subr.mxu0 0.0
    %2806 = vmatpush1.msra.mxu0 %v2698
    %2807 = vmatprep.subr.mxu0 0.0
    %2808 = vmatpush1.msra.mxu0 %v2697
    %2809 = vmatprep.subr.mxu0 0.0
    %2810 = vmatpush1.msra.mxu0 %v2696
    %2811 = vmatprep.subr.mxu0 0.0
    %2812 = vmatpush1.msra.mxu0 %v2695
    %2813 = vmatprep.subr.mxu0 0.0
    %2814 = vmatpush1.msra.mxu0 %v2694
    %2815 = vmatprep.subr.mxu0 0.0
    %2816 = vmatpush1.msra.mxu0 %v2693
    %2817 = vmatprep.subr.mxu0 0.0
    %2818 = vmatpush1.msra.mxu0 %v2692
    %2819 = vmatprep.subr.mxu0 0.0
    %2820 = vmatpush1.msra.mxu0 %v2691
    %2821 = vmatprep.subr.mxu0 0.0
    %2822 = vmatpush1.msra.mxu0 %v2690
    %2823 = vmatprep.subr.mxu0 0.0
    %2824 = vmatpush1.msra.mxu0 %v2689
    %2825 = vmatprep.subr.mxu0 0.0
    %2826 = vmatpush1.msra.mxu0 %v2688
    %2827 = vmatprep.subr.mxu0 0.0
    %2828 = vmatpush1.msra.mxu0 %v2687
    %2829 = vmatprep.subr.mxu0 0.0
    %2830 = vmatpush1.msra.mxu0 %v2686
    %2831 = vmatprep.subr.mxu0 0.0
    %2832 = vmatpush1.msra.mxu0 %v2685
    %2833 = vmatprep.subr.mxu0 0.0
    %2834 = vmatpush1.msra.mxu0 %v2684
    %2835 = vmatprep.subr.mxu0 0.0
    %2836 = vmatpush2.msra.mxu0 %v2715
    %2837 = vmatprep.subr.mxu0 0.0
    %2838 = vmatpush2.msra.mxu0 %v2714
    %2839 = vmatprep.subr.mxu0 0.0
    %2840 = vmatpush2.msra.mxu0 %v2713
    %2841 = vmatprep.subr.mxu0 0.0
    %2842 = vmatpush2.msra.mxu0 %v2712
    %2843 = vmatprep.subr.mxu0 0.0
    %2844 = vmatpush2.msra.mxu0 %v2711
    %2845 = vmatprep.subr.mxu0 0.0
    %2846 = vmatpush2.msra.mxu0 %v2710
    %2847 = vmatprep.subr.mxu0 0.0
    %2848 = vmatpush2.msra.mxu0 %v2709
    %2849 = vmatprep.subr.mxu0 0.0
    %2850 = vmatpush2.msra.mxu0 %v2708
    %2851 = vmatprep.subr.mxu0 0.0
    %2852 = vmatpush2.msra.mxu0 %v2707
    %2853 = vmatprep.subr.mxu0 0.0
    %2854 = vmatpush2.msra.mxu0 %v2706
    %2855 = vmatprep.subr.mxu0 0.0
    %2856 = vmatpush2.msra.mxu0 %v2705
    %2857 = vmatprep.subr.mxu0 0.0
    %2858 = vmatpush2.msra.mxu0 %v2704
    %2859 = vmatprep.subr.mxu0 0.0
    %2860 = vmatpush2.msra.mxu0 %v2703
    %2861 = vmatprep.subr.mxu0 0.0
    %2862 = vmatpush2.msra.mxu0 %v2702
    %2863 = vmatprep.subr.mxu0 0.0
    %2864 = vmatpush2.msra.mxu0 %v2701
    %2865 = vmatprep.subr.mxu0 0.0
    %2866 = vmatpush2.msra.mxu0 %v2700
    %2867 = vmatprep.mubr.f32.mxu0 %v2678
    %2868 = vmatmul.mubr.f32.gmra.mxu0 %v2677
    %v2869 = vpop.f32.mrf.mxu0
    %v2870 = vadd.f32 %v2801, %v2869
    %v2871 = vpop.f32.mrf.mxu0
    %2872 = vdwg.mxu0
    %2873 = vmatprep.subr.mxu0 0.0
    %2874 = vmatpush1.msra.mxu0 %v2731
    %2875 = vmatprep.subr.mxu0 0.0
    %2876 = vmatpush1.msra.mxu0 %v2730
    %2877 = vmatprep.subr.mxu0 0.0
    %2878 = vmatpush1.msra.mxu0 %v2729
    %2879 = vmatprep.subr.mxu0 0.0
    %2880 = vmatpush1.msra.mxu0 %v2728
    %2881 = vmatprep.subr.mxu0 0.0
    %2882 = vmatpush1.msra.mxu0 %v2727
    %2883 = vmatprep.subr.mxu0 0.0
    %2884 = vmatpush1.msra.mxu0 %v2726
    %2885 = vmatprep.subr.mxu0 0.0
    %2886 = vmatpush1.msra.mxu0 %v2725
    %2887 = vmatprep.subr.mxu0 0.0
    %2888 = vmatpush1.msra.mxu0 %v2724
    %2889 = vmatprep.subr.mxu0 0.0
    %2890 = vmatpush1.msra.mxu0 %v2723
    %2891 = vmatprep.subr.mxu0 0.0
    %2892 = vmatpush1.msra.mxu0 %v2722
    %2893 = vmatprep.subr.mxu0 0.0
    %2894 = vmatpush1.msra.mxu0 %v2721
    %2895 = vmatprep.subr.mxu0 0.0
    %2896 = vmatpush1.msra.mxu0 %v2720
    %2897 = vmatprep.subr.mxu0 0.0
    %2898 = vmatpush1.msra.mxu0 %v2719
    %2899 = vmatprep.subr.mxu0 0.0
    %2900 = vmatpush1.msra.mxu0 %v2718
    %2901 = vmatprep.subr.mxu0 0.0
    %2902 = vmatpush1.msra.mxu0 %v2717
    %2903 = vmatprep.subr.mxu0 0.0
    %2904 = vmatpush1.msra.mxu0 %v2716
    %2905 = vmatprep.subr.mxu0 0.0
    %2906 = vmatpush2.msra.mxu0 %v2747
    %2907 = vmatprep.subr.mxu0 0.0
    %2908 = vmatpush2.msra.mxu0 %v2746
    %2909 = vmatprep.subr.mxu0 0.0
    %2910 = vmatpush2.msra.mxu0 %v2745
    %2911 = vmatprep.subr.mxu0 0.0
    %2912 = vmatpush2.msra.mxu0 %v2744
    %2913 = vmatprep.subr.mxu0 0.0
    %2914 = vmatpush2.msra.mxu0 %v2743
    %2915 = vmatprep.subr.mxu0 0.0
    %2916 = vmatpush2.msra.mxu0 %v2742
    %2917 = vmatprep.subr.mxu0 0.0
    %2918 = vmatpush2.msra.mxu0 %v2741
    %2919 = vmatprep.subr.mxu0 0.0
    %2920 = vmatpush2.msra.mxu0 %v2740
    %2921 = vmatprep.subr.mxu0 0.0
    %2922 = vmatpush2.msra.mxu0 %v2739
    %2923 = vmatprep.subr.mxu0 0.0
    %2924 = vmatpush2.msra.mxu0 %v2738
    %2925 = vmatprep.subr.mxu0 0.0
    %2926 = vmatpush2.msra.mxu0 %v2737
    %2927 = vmatprep.subr.mxu0 0.0
    %2928 = vmatpush2.msra.mxu0 %v2736
    %2929 = vmatprep.subr.mxu0 0.0
    %2930 = vmatpush2.msra.mxu0 %v2735
    %2931 = vmatprep.subr.mxu0 0.0
    %2932 = vmatpush2.msra.mxu0 %v2734
    %2933 = vmatprep.subr.mxu0 0.0
    %2934 = vmatpush2.msra.mxu0 %v2733
    %2935 = vmatprep.subr.mxu0 0.0
    %2936 = vmatpush2.msra.mxu0 %v2732
    %2937 = vmatprep.mubr.f32.mxu0 %v2680
    %2938 = vmatmul.mubr.f32.gmra.mxu0 %v2679
    %v2939 = vpop.f32.mrf.mxu0
    %v2940 = vadd.f32 %v2870, %v2939
    %v2941 = vpop.f32.mrf.mxu0
    %2942 = vdwg.mxu0
    %2943 = vmatprep.subr.mxu0 0.0
    %2944 = vmatpush1.msra.mxu0 %v2763
    %2945 = vmatprep.subr.mxu0 0.0
    %2946 = vmatpush1.msra.mxu0 %v2762
    %2947 = vmatprep.subr.mxu0 0.0
    %2948 = vmatpush1.msra.mxu0 %v2761
    %2949 = vmatprep.subr.mxu0 0.0
    %2950 = vmatpush1.msra.mxu0 %v2760
    %2951 = vmatprep.subr.mxu0 0.0
    %2952 = vmatpush1.msra.mxu0 %v2759
    %2953 = vmatprep.subr.mxu0 0.0
    %2954 = vmatpush1.msra.mxu0 %v2758
    %2955 = vmatprep.subr.mxu0 0.0
    %2956 = vmatpush1.msra.mxu0 %v2757
    %2957 = vmatprep.subr.mxu0 0.0
    %2958 = vmatpush1.msra.mxu0 %v2756
    %2959 = vmatprep.subr.mxu0 0.0
    %2960 = vmatpush1.msra.mxu0 %v2755
    %2961 = vmatprep.subr.mxu0 0.0
    %2962 = vmatpush1.msra.mxu0 %v2754
    %2963 = vmatprep.subr.mxu0 0.0
    %2964 = vmatpush1.msra.mxu0 %v2753
    %2965 = vmatprep.subr.mxu0 0.0
    %2966 = vmatpush1.msra.mxu0 %v2752
    %2967 = vmatprep.subr.mxu0 0.0
    %2968 = vmatpush1.msra.mxu0 %v2751
    %2969 = vmatprep.subr.mxu0 0.0
    %2970 = vmatpush1.msra.mxu0 %v2750
    %2971 = vmatprep.subr.mxu0 0.0
    %2972 = vmatpush1.msra.mxu0 %v2749
    %2973 = vmatprep.subr.mxu0 0.0
    %2974 = vmatpush1.msra.mxu0 %v2748
    %2975 = vmatprep.subr.mxu0 0.0
    %2976 = vmatpush2.msra.mxu0 %v2779
    %2977 = vmatprep.subr.mxu0 0.0
    %2978 = vmatpush2.msra.mxu0 %v2778
    %2979 = vmatprep.subr.mxu0 0.0
    %2980 = vmatpush2.msra.mxu0 %v2777
    %2981 = vmatprep.subr.mxu0 0.0
    %2982 = vmatpush2.msra.mxu0 %v2776
    %2983 = vmatprep.subr.mxu0 0.0
    %2984 = vmatpush2.msra.mxu0 %v2775
    %2985 = vmatprep.subr.mxu0 0.0
    %2986 = vmatpush2.msra.mxu0 %v2774
    %2987 = vmatprep.subr.mxu0 0.0
    %2988 = vmatpush2.msra.mxu0 %v2773
    %2989 = vmatprep.subr.mxu0 0.0
    %2990 = vmatpush2.msra.mxu0 %v2772
    %2991 = vmatprep.subr.mxu0 0.0
    %2992 = vmatpush2.msra.mxu0 %v2771
    %2993 = vmatprep.subr.mxu0 0.0
    %2994 = vmatpush2.msra.mxu0 %v2770
    %2995 = vmatprep.subr.mxu0 0.0
    %2996 = vmatpush2.msra.mxu0 %v2769
    %2997 = vmatprep.subr.mxu0 0.0
    %2998 = vmatpush2.msra.mxu0 %v2768
    %2999 = vmatprep.subr.mxu0 0.0
    %3000 = vmatpush2.msra.mxu0 %v2767
    %3001 = vmatprep.subr.mxu0 0.0
    %3002 = vmatpush2.msra.mxu0 %v2766
    %3003 = vmatprep.subr.mxu0 0.0
    %3004 = vmatpush2.msra.mxu0 %v2765
    %3005 = vmatprep.subr.mxu0 0.0
    %3006 = vmatpush2.msra.mxu0 %v2764
    %3007 = vmatprep.mubr.f32.mxu0 %v2682
    %3008 = vmatmul.mubr.f32.gmra.mxu0 %v2681
    %v3009 = vpop.f32.mrf.mxu0
    %v3010 = vadd.f32 %v2940, %v3009
    %v3011 = vpop.f32.mrf.mxu0
    %3012 = vdwg.mxu0
    %3013 = vmatprep.subr.mxu0 0.0
    %3014 = vmatpush1.msra.mxu0 %v2795
    %3015 = vmatprep.subr.mxu0 0.0
    %3016 = vmatpush1.msra.mxu0 %v2794
    %3017 = vmatprep.subr.mxu0 0.0
    %3018 = vmatpush1.msra.mxu0 %v2793
    %3019 = vmatprep.subr.mxu0 0.0
    %3020 = vmatpush1.msra.mxu0 %v2792
    %3021 = vmatprep.subr.mxu0 0.0
    %3022 = vmatpush1.msra.mxu0 %v2791
    %3023 = vmatprep.subr.mxu0 0.0
    %3024 = vmatpush1.msra.mxu0 %v2790
    %3025 = vmatprep.subr.mxu0 0.0
    %3026 = vmatpush1.msra.mxu0 %v2789
    %3027 = vmatprep.subr.mxu0 0.0
    %3028 = vmatpush1.msra.mxu0 %v2788
    %3029 = vmatprep.subr.mxu0 0.0
    %3030 = vmatpush1.msra.mxu0 %v2787
    %3031 = vmatprep.subr.mxu0 0.0
    %3032 = vmatpush1.msra.mxu0 %v2786
    %3033 = vmatprep.subr.mxu0 0.0
    %3034 = vmatpush1.msra.mxu0 %v2785
    %3035 = vmatprep.subr.mxu0 0.0
    %3036 = vmatpush1.msra.mxu0 %v2784
    %3037 = vmatprep.subr.mxu0 0.0
    %3038 = vmatpush1.msra.mxu0 %v2783
    %3039 = vmatprep.subr.mxu0 0.0
    %3040 = vmatpush1.msra.mxu0 %v2782
    %3041 = vmatprep.subr.mxu0 0.0
    %3042 = vmatpush1.msra.mxu0 %v2781
    %3043 = vmatprep.subr.mxu0 0.0
    %3044 = vmatpush1.msra.mxu0 %v2780
    %3045 = vmatprep.subr.mxu0 0.0
    %3046 = vmatpush2.msra.mxu0 0.0
    %3047 = vmatprep.subr.mxu0 0.0
    %3048 = vmatpush2.msra.mxu0 0.0
    %3049 = vmatprep.subr.mxu0 0.0
    %3050 = vmatpush2.msra.mxu0 0.0
    %3051 = vmatprep.subr.mxu0 0.0
    %3052 = vmatpush2.msra.mxu0 0.0
    %3053 = vmatprep.subr.mxu0 0.0
    %3054 = vmatpush2.msra.mxu0 0.0
    %3055 = vmatprep.subr.mxu0 0.0
    %3056 = vmatpush2.msra.mxu0 0.0
    %3057 = vmatprep.subr.mxu0 0.0
    %3058 = vmatpush2.msra.mxu0 0.0
    %3059 = vmatprep.subr.mxu0 0.0
    %3060 = vmatpush2.msra.mxu0 0.0
    %3061 = vmatprep.subr.mxu0 0.0
    %3062 = vmatpush2.msra.mxu0 0.0
    %3063 = vmatprep.subr.mxu0 0.0
    %3064 = vmatpush2.msra.mxu0 0.0
    %3065 = vmatprep.subr.mxu0 0.0
    %3066 = vmatpush2.msra.mxu0 0.0
    %3067 = vmatprep.subr.mxu0 0.0
    %3068 = vmatpush2.msra.mxu0 0.0
    %3069 = vmatprep.subr.mxu0 0.0
    %3070 = vmatpush2.msra.mxu0 0.0
    %3071 = vmatprep.subr.mxu0 0.0
    %3072 = vmatpush2.msra.mxu0 0.0
    %3073 = vmatprep.subr.mxu0 0.0
    %3074 = vmatpush2.msra.mxu0 0.0
    %3075 = vmatprep.subr.mxu0 0.0
    %3076 = vmatpush2.msra.mxu0 0.0
    %3077 = vmatprep.mubr.f32.mxu0 0.0
    %3078 = vmatmul.mubr.f32.gmra.mxu0 %v2683
    %v3079 = vpop.f32.mrf.mxu0
    %v3080 = vadd.f32 %v3010, %v3079
    %v3081 = vpop.f32.mrf.mxu0
    %3082 = vdwg.mxu0
    %vm3083 = vcmask 80896
    %3084 = vst.msk [vmem:[#allocation4] sm:$0xff] %vm3083, %v3080
    // Predicated region
    $region22: #{tpu_custom_call.1} parent=1 // pred_check
      _
    $region23: #{tpu_custom_call.1} parent=1 // pred_check_branch
      %3086 = sbr.rel (0) target = $region25
    $region24: #{tpu_custom_call.1} parent=1 // pred_region
      %s3088 = ssub.s32 128, 128
      %3089 = vsyncadd [#allocation5], %s3088
      %s3091 = sshll.u32 [#allocation4], 4
      %s3092 = int_to_ptr.vmem [resolvable:$true] %s3091
      %3094 = dma.vmem_to_hbm [thread:$0]  %s3092, 128, %s5, [#allocation5]
    $region25: #{tpu_custom_call.1} parent=1 // pred_fallthru
      _
    // Predicated region
    $region26: #{tpu_custom_call.1} parent=1 // pred_check
      _
    $region27: #{tpu_custom_call.1} parent=1 // pred_check_branch
      %3096 = sbr.rel (0) target = $region29
    $region28: #{tpu_custom_call.1} parent=1 // pred_region
      %3097 = dma.done [#allocation5], 128
    $region29: #{tpu_custom_call.1} parent=1 // pred_fallthru
      _
    %3098 = vsyncpa [#allocation5], 1

</llo_original>
